<compile_context>
chip_gen: v5e
topology: v5e:2x2
jax: 0.10.0
libtpu: 0.0.40
codegen_flags: <defaults>
</compile_context>

<pallas_src>
import functools
import math

import jax
import jax.numpy as jnp
from jax.experimental import pallas as pl
from jax.experimental.pallas import tpu as pltpu


# ----------------------------------------------------------------------------
# Fused transformer forward kernel (one batch tile per grid step)
# ----------------------------------------------------------------------------
def _transformer_kernel(
    x_ref,                      # (Bt, T, F)   f32
    w_in_ref, b_in_ref,         # (F, D) bf16, (1, D) f32
    wq_ref, bq_ref,             # (L, D, D) bf16, (L, 1, D) f32   (in_proj q part, transposed)
    wkv_ref, bkv_ref,           # (L, D, 2D) bf16, (L, 1, 2D) f32 (in_proj k,v parts, transposed)
    wo_ref, bo_ref,             # (L, D, D) bf16, (L, 1, D) f32   (out_proj, transposed)
    g1_ref, be1_ref,            # (L, 1, D) f32  LayerNorm1 gamma / beta
    w1_ref, b1_ref,             # (L, D, DFF) bf16, (L, 1, DFF) f32
    w2_ref, b2_ref,             # (L, DFF, D) bf16, (L, 1, D) f32
    g2_ref, be2_ref,            # (L, 1, D) f32  LayerNorm2 gamma / beta
    w_out_ref, b_out_ref,       # (D, OW) bf16, (1, OW) f32
    o_ref,                      # (Bt, OW) f32
    attn_scr,                   # VMEM scratch (Bt*T, D) f32 — head-output concat buffer
    *, n_heads, eps=1e-5,
):
    f32 = jnp.float32
    bf16 = jnp.bfloat16

    Bt, T, F = x_ref.shape
    D = w_in_ref.shape[1]
    L = wq_ref.shape[0]
    H = n_heads
    dh = D // H
    scale = 1.0 / math.sqrt(dh)
    N = Bt * T

    def mm(a, b):
        # bf16 operands on the MXU, f32 accumulation.
        return jnp.dot(a.astype(bf16), b.astype(bf16), preferred_element_type=f32)

    def layer_norm(v, g, b):
        mu = jnp.mean(v, axis=-1, keepdims=True)
        d = v - mu
        var = jnp.mean(d * d, axis=-1, keepdims=True)
        return d * jax.lax.rsqrt(var + eps) * g + b

    def softmax(s):
        s = s - jnp.max(s, axis=-1, keepdims=True)
        p = jnp.exp(s)
        # Reciprocal on the EUP slot instead of a VPU divide sequence.
        return p * pl.reciprocal(jnp.sum(p, axis=-1, keepdims=True), approx=True)

    def encoder_layer(l, h_q, h_kv, nq):
        """One post-norm encoder layer.

        h_q : (nq, D) rows that produce queries / go through residual+FFN.
        h_kv: (N, D)  rows that produce keys/values (always the full sequence).
        For all but the last layer nq == N; for the last layer nq == Bt
        (only the final timestep is needed downstream).
        """
        Tq = nq // Bt
        q_all = mm(h_q, wq_ref[l]) + bq_ref[l]          # (nq, D)  f32
        kv = mm(h_kv, wkv_ref[l]) + bkv_ref[l]          # (N, 2D)  f32

        # Per-head attention; head outputs are stored into the scratch at their
        # lane offsets so the output projection is ONE D-wide GEMM.
        # (Head-batched 'bqhd,bkhd->bhqk' einsums would need a multi-batch-dim
        #  dot_general / mid-dim transpose that Mosaic does not lower reliably,
        #  so the dh-wide score contractions stay as single-batch-dim einsums.)
        for hd in range(H):
            c = hd * dh
            q = q_all[:, c:c + dh].reshape(Bt, Tq, dh)
            k = kv[:, c:c + dh].reshape(Bt, T, dh)
            v = kv[:, D + c:D + c + dh].reshape(Bt, T, dh)

            s = jnp.einsum('bqd,bkd->bqk', q.astype(bf16), k.astype(bf16),
                           preferred_element_type=f32) * scale       # (Bt, Tq, T)
            p = softmax(s)
            o_h = jnp.einsum('bqk,bkd->bqd', p.astype(bf16), v.astype(bf16),
                             preferred_element_type=f32)             # (Bt, Tq, dh)
            attn_scr[0:nq, c:c + dh] = o_h.reshape(nq, dh)

        attn = mm(attn_scr[0:nq, :], wo_ref[l]) + bo_ref[l]          # (nq, D)

        y = layer_norm(h_q + attn, g1_ref[l], be1_ref[l])
        ff = jnp.maximum(mm(y, w1_ref[l]) + b1_ref[l], 0.0)
        ff = mm(ff, w2_ref[l]) + b2_ref[l]
        return layer_norm(y + ff, g2_ref[l], be2_ref[l])

    # ---- input projection: (Bt*T, F) @ (F, D) ----
    x = x_ref[...].reshape(N, F)
    h = mm(x, w_in_ref[...]) + b_in_ref[...]                          # (N, D) f32

    # ---- all but the last encoder layer: full-sequence compute ----
    # (Static Python loop is fine for small L; switch to lax.fori_loop with
    #  dynamic wq_ref[l] indexing if num_layers grows beyond a few.)
    for l in range(L - 1):
        h = encoder_layer(l, h, h, N)

    # ---- last encoder layer: only the final timestep feeds output_proj ----
    h_last = h.reshape(Bt, T, D)[:, T - 1, :]                         # (Bt, D)
    y = encoder_layer(L - 1, h_last, h, Bt)                           # (Bt, D)

    # ---- output projection ----
    o_ref[...] = (mm(y, w_out_ref[...]) + b_out_ref[...]).astype(o_ref.dtype)


# ----------------------------------------------------------------------------
# Wrapper
# ----------------------------------------------------------------------------
_WEIGHT_ORDER = ("w_in", "b_in", "wq", "bq", "wkv", "bkv", "wo", "bo",
                 "g1", "be1", "w1", "b1", "w2", "b2", "g2", "be2",
                 "w_out", "b_out")


def _vmem_budget_bytes():
    """Per-core VMEM budget with headroom (v7x: 64 MiB; v5e/v6e: 128 MiB)."""
    try:
        cap = int(pltpu.get_tpu_info().vmem_capacity_bytes)
    except Exception:
        cap = 64 * 1024 * 1024          # conservative: smallest generation (v7x)
    return cap * 3 // 4


def _estimate_tile_vmem(bt, T, F, D, DFF, H, L, OW):
    """Rough per-grid-step VMEM footprint in bytes for a batch tile of bt."""
    n = bt * T
    # Weight matrices (bf16) + bias/LN vectors (f32); constant index_map, but
    # conservatively count the pipeline's default double buffering.
    wmat = F * D + L * (4 * D * D + 2 * D * DFF) + D * OW
    wvec = D + L * (9 * D + DFF) + OW
    weights = 2 * (2 * wmat + 4 * wvec)
    # Input / output tiles, double buffered.
    io = 2 * 4 * (n * F + bt * OW)
    # Live in-kernel activations (f32): h, q, kv, ffn hidden, attn scratch,
    # per-head scores; 2x slack for relayout temporaries / spills.
    act = 2 * 4 * (n * (D + D + 2 * D + DFF + D) + bt * T * T)
    return weights + io + act


def _choose_batch_tile(B, T, F, D, DFF, H, L, OW, budget):
    # Target >= 256 rows per GEMM so the MXU M dimension is well utilised
    # (>=128 already saturates v5e's 128-wide MXU), capped by B and by the
    # VMEM budget; the tile must divide B.
    bt = min(B, max(1, pl.cdiv(256, T)))
    while bt > 1 and (B % bt != 0
                      or _estimate_tile_vmem(bt, T, F, D, DFF, H, L, OW) > budget):
        bt -= 1
    return bt


def transformer_ts_forward(x, params, *, n_heads):
    """x: (B, T, num_features) batch-first, like the PyTorch module."""
    B, T, F = x.shape
    D = params["w_in"].shape[1]
    L = params["wq"].shape[0]
    DFF = params["w1"].shape[2]
    OW = params["w_out"].shape[1]

    budget = _vmem_budget_bytes()
    b_tile = _choose_batch_tile(B, T, F, D, DFF, n_heads, L, OW, budget)
    grid = (B // b_tile,)

    weights = [params[k] for k in _WEIGHT_ORDER]

    # Constant (whole-array) blocks for weights: same block every grid step.
    # TODO(synk): for large L on v7x (64 MiB VMEM), stream per-layer weights
    # (layer grid axis or manual DMA) and/or single-buffer these specs instead
    # of keeping every layer resident.
    def _const_spec(shape):
        nd = len(shape)
        return pl.BlockSpec(shape, lambda b, _nd=nd: (0,) * _nd)

    in_specs = [pl.BlockSpec((b_tile, T, F), lambda b: (b, 0, 0))]
    in_specs += [_const_spec(w.shape) for w in weights]

    kernel = functools.partial(_transformer_kernel, n_heads=n_heads)

    return pl.pallas_call(
        kernel,
        out_shape=jax.ShapeDtypeStruct((B, OW), jnp.float32),
        grid_spec=pltpu.PrefetchScalarGridSpec(
            num_scalar_prefetch=0,
            grid=grid,
            in_specs=in_specs,
            out_specs=pl.BlockSpec((b_tile, OW), lambda b: (b, 0)),
            scratch_shapes=[pltpu.VMEM((b_tile * T, D), jnp.float32)],
        ),
        compiler_params=pltpu.CompilerParams(
            dimension_semantics=("parallel",),
            vmem_limit_bytes=budget,
        ),
    )(x, *weights)


def init_params(key, num_features, d_model, num_layers, dim_feedforward,
                output_window):
    """Deterministic uniform init (PyTorch Linear-style bounds), pre-transposed
    so every in-kernel matmul is x @ W.  Mapping to nn.MultiheadAttention:
    wq = in_proj_weight[:D].T, wkv = in_proj_weight[D:].T, wo = out_proj.weight.T.
    Matmul weights are stored in bfloat16 (MXU-native); biases / LayerNorm
    parameters stay float32."""
    kin = 1.0 / math.sqrt(num_features)
    kd = 1.0 / math.sqrt(d_model)
    kff = 1.0 / math.sqrt(dim_feedforward)
    L, D, DFF = num_layers, d_model, dim_feedforward

    keys = iter(jax.random.split(key, 14))

    def unif(shape, bound, dtype=jnp.bfloat16):
        w = jax.random.uniform(next(keys), shape, jnp.float32, -bound, bound)
        return w.astype(dtype)

    return {
        "w_in":  unif((num_features, D), kin),
        "b_in":  unif((1, D), kin, jnp.float32),
        "wq":    unif((L, D, D), kd),
        "bq":    unif((L, 1, D), kd, jnp.float32),
        "wkv":   unif((L, D, 2 * D), kd),
        "bkv":   unif((L, 1, 2 * D), kd, jnp.float32),
        "wo":    unif((L, D, D), kd),
        "bo":    unif((L, 1, D), kd, jnp.float32),
        "g1":    jnp.ones((L, 1, D), jnp.float32),
        "be1":   jnp.zeros((L, 1, D), jnp.float32),
        "w1":    unif((L, D, DFF), kd),
        "b1":    unif((L, 1, DFF), kd, jnp.float32),
        "w2":    unif((L, DFF, D), kff),
        "b2":    unif((L, 1, D), kff, jnp.float32),
        "g2":    jnp.ones((L, 1, D), jnp.float32),
        "be2":   jnp.zeros((L, 1, D), jnp.float32),
        "w_out": unif((D, output_window), kd),
        "b_out": unif((1, output_window), kd, jnp.float32),
    }


if __name__ == "__main__":
    # Small, module-consistent shapes.
    B = 2                    # batch
    input_window = 8         # T (sequence length)
    num_features = 16        # input feature size
    d_model = 64
    n_heads = 4
    num_layers = 2
    dim_feedforward = 128
    dropout = 0.0            # eval-mode: dropout is identity anyway
    output_window = 4

    key = jax.random.PRNGKey(0)
    key, xk = jax.random.split(key)
    x = jax.random.normal(xk, (B, input_window, num_features), dtype=jnp.float32)
    params = init_params(key, num_features, d_model, num_layers,
                         dim_feedforward, output_window)

    fwd = jax.jit(functools.partial(transformer_ts_forward, n_heads=n_heads))
    y = fwd(x, params)
    jax.block_until_ready(y)
    assert y.shape == (B, output_window), y.shape
    print("KERNEL_OK")
</pallas_src>

<mosaic_0001>
module attributes {stable_mosaic.version = 11 : i64} {
  func.func @_transformer_kernel(%arg0: i32, %arg1: memref<2x8x16xf32, #tpu.memory_space<vmem>>, %arg2: memref<16x64xbf16, #tpu.memory_space<vmem>>, %arg3: memref<1x64xf32, #tpu.memory_space<vmem>>, %arg4: memref<2x64x64xbf16, #tpu.memory_space<vmem>>, %arg5: memref<2x1x64xf32, #tpu.memory_space<vmem>>, %arg6: memref<2x64x128xbf16, #tpu.memory_space<vmem>>, %arg7: memref<2x1x128xf32, #tpu.memory_space<vmem>>, %arg8: memref<2x64x64xbf16, #tpu.memory_space<vmem>>, %arg9: memref<2x1x64xf32, #tpu.memory_space<vmem>>, %arg10: memref<2x1x64xf32, #tpu.memory_space<vmem>>, %arg11: memref<2x1x64xf32, #tpu.memory_space<vmem>>, %arg12: memref<2x64x128xbf16, #tpu.memory_space<vmem>>, %arg13: memref<2x1x128xf32, #tpu.memory_space<vmem>>, %arg14: memref<2x128x64xbf16, #tpu.memory_space<vmem>>, %arg15: memref<2x1x64xf32, #tpu.memory_space<vmem>>, %arg16: memref<2x1x64xf32, #tpu.memory_space<vmem>>, %arg17: memref<2x1x64xf32, #tpu.memory_space<vmem>>, %arg18: memref<64x4xbf16, #tpu.memory_space<vmem>>, %arg19: memref<1x4xf32, #tpu.memory_space<vmem>>, %arg20: memref<2x4xf32, #tpu.memory_space<vmem>>, %arg21: memref<16x64xf32, #tpu.memory_space<vmem>>) attributes {dimension_semantics = [#tpu.dimension_semantics<parallel>], iteration_bounds = array<i64: 1>, scalar_prefetch = 0 : i64, scratch_operands = 1 : i64, tpu.core_type = #tpu.core_type<tc>, window_params = [{transform_indices = @transform_0, window_bounds = array<i64: 2, 8, 16>}, {pipeline_mode = #tpu.pipeline_mode<synchronous>, transform_indices = @transform_1, window_bounds = array<i64: 16, 64>}, {pipeline_mode = #tpu.pipeline_mode<synchronous>, transform_indices = @transform_2, window_bounds = array<i64: 1, 64>}, {pipeline_mode = #tpu.pipeline_mode<synchronous>, transform_indices = @transform_3, window_bounds = array<i64: 2, 64, 64>}, {pipeline_mode = #tpu.pipeline_mode<synchronous>, transform_indices = @transform_4, window_bounds = array<i64: 2, 1, 64>}, {pipeline_mode = #tpu.pipeline_mode<synchronous>, transform_indices = @transform_5, window_bounds = array<i64: 2, 64, 128>}, {pipeline_mode = #tpu.pipeline_mode<synchronous>, transform_indices = @transform_6, window_bounds = array<i64: 2, 1, 128>}, {pipeline_mode = #tpu.pipeline_mode<synchronous>, transform_indices = @transform_7, window_bounds = array<i64: 2, 64, 64>}, {pipeline_mode = #tpu.pipeline_mode<synchronous>, transform_indices = @transform_8, window_bounds = array<i64: 2, 1, 64>}, {pipeline_mode = #tpu.pipeline_mode<synchronous>, transform_indices = @transform_9, window_bounds = array<i64: 2, 1, 64>}, {pipeline_mode = #tpu.pipeline_mode<synchronous>, transform_indices = @transform_10, window_bounds = array<i64: 2, 1, 64>}, {pipeline_mode = #tpu.pipeline_mode<synchronous>, transform_indices = @transform_11, window_bounds = array<i64: 2, 64, 128>}, {pipeline_mode = #tpu.pipeline_mode<synchronous>, transform_indices = @transform_12, window_bounds = array<i64: 2, 1, 128>}, {pipeline_mode = #tpu.pipeline_mode<synchronous>, transform_indices = @transform_13, window_bounds = array<i64: 2, 128, 64>}, {pipeline_mode = #tpu.pipeline_mode<synchronous>, transform_indices = @transform_14, window_bounds = array<i64: 2, 1, 64>}, {pipeline_mode = #tpu.pipeline_mode<synchronous>, transform_indices = @transform_15, window_bounds = array<i64: 2, 1, 64>}, {pipeline_mode = #tpu.pipeline_mode<synchronous>, transform_indices = @transform_16, window_bounds = array<i64: 2, 1, 64>}, {pipeline_mode = #tpu.pipeline_mode<synchronous>, transform_indices = @transform_17, window_bounds = array<i64: 64, 4>}, {pipeline_mode = #tpu.pipeline_mode<synchronous>, transform_indices = @transform_18, window_bounds = array<i64: 1, 4>}, {transform_indices = @transform_19, window_bounds = array<i64: 2, 4>}]} {
    %c0 = arith.constant 0 : index
    %c0_0 = arith.constant 0 : index
    %c0_1 = arith.constant 0 : index
    %0 = vector.load %arg1[%c0, %c0_0, %c0_1] : memref<2x8x16xf32, #tpu.memory_space<vmem>>, vector<2x8x16xf32>
    %1 = vector.shape_cast %0 : vector<2x8x16xf32> to vector<16x16xf32>
    %c0_2 = arith.constant 0 : index
    %c0_3 = arith.constant 0 : index
    %2 = vector.load %arg2[%c0_2, %c0_3] : memref<16x64xbf16, #tpu.memory_space<vmem>>, vector<16x64xbf16>
    %3 = arith.truncf %1 : vector<16x16xf32> to vector<16x16xbf16>
    %cst = arith.constant dense<0.000000e+00> : vector<16x64xf32>
    %4 = tpu.matmul %3, %2, %cst {dimension_numbers = #tpu.dot_dimension_numbers<[1], [0], [0], [1], [0, 0, 1, 1], [], []>} : vector<16x16xbf16>, vector<16x64xbf16>, vector<16x64xf32> -> vector<16x64xf32>
    %c0_4 = arith.constant 0 : index
    %c0_5 = arith.constant 0 : index
    %5 = vector.load %arg3[%c0_4, %c0_5] : memref<1x64xf32, #tpu.memory_space<vmem>>, vector<1x64xf32>
    %6 = vector.broadcast %5 : vector<1x64xf32> to vector<16x64xf32>
    %7 = arith.addf %4, %6 : vector<16x64xf32>
    %c0_6 = arith.constant 0 : index
    %c0_7 = arith.constant 0 : index
    %c0_8 = arith.constant 0 : index
    %8 = vector.load %arg4[%c0_6, %c0_7, %c0_8] : memref<2x64x64xbf16, #tpu.memory_space<vmem>>, vector<1x64x64xbf16>
    %9 = vector.shape_cast %8 : vector<1x64x64xbf16> to vector<64x64xbf16>
    %10 = arith.truncf %7 : vector<16x64xf32> to vector<16x64xbf16>
    %cst_9 = arith.constant dense<0.000000e+00> : vector<16x64xf32>
    %11 = tpu.matmul %10, %9, %cst_9 {dimension_numbers = #tpu.dot_dimension_numbers<[1], [0], [0], [1], [0, 0, 1, 1], [], []>} : vector<16x64xbf16>, vector<64x64xbf16>, vector<16x64xf32> -> vector<16x64xf32>
    %c0_10 = arith.constant 0 : index
    %c0_11 = arith.constant 0 : index
    %c0_12 = arith.constant 0 : index
    %12 = vector.load %arg5[%c0_10, %c0_11, %c0_12] : memref<2x1x64xf32, #tpu.memory_space<vmem>>, vector<1x1x64xf32>
    %13 = vector.shape_cast %12 : vector<1x1x64xf32> to vector<1x64xf32>
    %14 = vector.broadcast %13 : vector<1x64xf32> to vector<16x64xf32>
    %15 = arith.addf %11, %14 : vector<16x64xf32>
    %c0_13 = arith.constant 0 : index
    %c0_14 = arith.constant 0 : index
    %c0_15 = arith.constant 0 : index
    %16 = vector.load %arg6[%c0_13, %c0_14, %c0_15] : memref<2x64x128xbf16, #tpu.memory_space<vmem>>, vector<1x64x128xbf16>
    %17 = vector.shape_cast %16 : vector<1x64x128xbf16> to vector<64x128xbf16>
    %18 = arith.truncf %7 : vector<16x64xf32> to vector<16x64xbf16>
    %cst_16 = arith.constant dense<0.000000e+00> : vector<16x128xf32>
    %19 = tpu.matmul %18, %17, %cst_16 {dimension_numbers = #tpu.dot_dimension_numbers<[1], [0], [0], [1], [0, 0, 1, 1], [], []>} : vector<16x64xbf16>, vector<64x128xbf16>, vector<16x128xf32> -> vector<16x128xf32>
    %c0_17 = arith.constant 0 : index
    %c0_18 = arith.constant 0 : index
    %c0_19 = arith.constant 0 : index
    %20 = vector.load %arg7[%c0_17, %c0_18, %c0_19] : memref<2x1x128xf32, #tpu.memory_space<vmem>>, vector<1x1x128xf32>
    %21 = vector.shape_cast %20 : vector<1x1x128xf32> to vector<1x128xf32>
    %22 = vector.broadcast %21 : vector<1x128xf32> to vector<16x128xf32>
    %23 = arith.addf %19, %22 : vector<16x128xf32>
    %24 = vector.extract_strided_slice %15 {offsets = [0, 0], sizes = [16, 16], strides = [1, 1]} : vector<16x64xf32> to vector<16x16xf32>
    %25 = vector.shape_cast %24 : vector<16x16xf32> to vector<2x8x16xf32>
    %26 = vector.extract_strided_slice %23 {offsets = [0, 0], sizes = [16, 16], strides = [1, 1]} : vector<16x128xf32> to vector<16x16xf32>
    %27 = vector.shape_cast %26 : vector<16x16xf32> to vector<2x8x16xf32>
    %28 = vector.extract_strided_slice %23 {offsets = [0, 64], sizes = [16, 16], strides = [1, 1]} : vector<16x128xf32> to vector<16x16xf32>
    %29 = vector.shape_cast %28 : vector<16x16xf32> to vector<2x8x16xf32>
    %30 = arith.truncf %25 : vector<2x8x16xf32> to vector<2x8x16xbf16>
    %31 = arith.truncf %27 : vector<2x8x16xf32> to vector<2x8x16xbf16>
    "tpu.trace_start"() <{level = 10 : i32, message = "bqd,bkd->bqk"}> : () -> ()
    %cst_20 = arith.constant dense<0.000000e+00> : vector<2x8x8xf32>
    %32 = tpu.matmul %30, %31, %cst_20 {dimension_numbers = #tpu.dot_dimension_numbers<[2], [2], [1], [1], [0, 0, 0, 1, 1, 1], [0], [0]>} : vector<2x8x16xbf16>, vector<2x8x16xbf16>, vector<2x8x8xf32> -> vector<2x8x8xf32>
    "tpu.trace_stop"() : () -> ()
    %cst_21 = arith.constant 2.500000e-01 : f32
    %33 = vector.broadcast %cst_21 : f32 to vector<2x8x8xf32>
    %34 = arith.mulf %32, %33 : vector<2x8x8xf32>
    %cst_22 = arith.constant dense<0xFF800000> : vector<2x8xf32>
    %35 = vector.multi_reduction <maximumf>, %34, %cst_22 [2] : vector<2x8x8xf32> to vector<2x8xf32>
    %36 = vector.shape_cast %35 : vector<2x8xf32> to vector<2x8x1xf32>
    %37 = vector.broadcast %36 : vector<2x8x1xf32> to vector<2x8x8xf32>
    %38 = arith.subf %34, %37 : vector<2x8x8xf32>
    %39 = math.exp %38 : vector<2x8x8xf32>
    %cst_23 = arith.constant dense<0.000000e+00> : vector<2x8xf32>
    %40 = vector.multi_reduction <add>, %39, %cst_23 [2] : vector<2x8x8xf32> to vector<2x8xf32>
    %41 = vector.shape_cast %40 : vector<2x8xf32> to vector<2x8x1xf32>
    %42 = tpu.reciprocal %41 {approx = true} : vector<2x8x1xf32> -> vector<2x8x1xf32>
    %43 = vector.broadcast %42 : vector<2x8x1xf32> to vector<2x8x8xf32>
    %44 = arith.mulf %39, %43 : vector<2x8x8xf32>
    %45 = arith.truncf %44 : vector<2x8x8xf32> to vector<2x8x8xbf16>
    %46 = arith.truncf %29 : vector<2x8x16xf32> to vector<2x8x16xbf16>
    "tpu.trace_start"() <{level = 10 : i32, message = "bqk,bkd->bqd"}> : () -> ()
    %cst_24 = arith.constant dense<0.000000e+00> : vector<2x8x16xf32>
    %47 = tpu.matmul %45, %46, %cst_24 {dimension_numbers = #tpu.dot_dimension_numbers<[2], [1], [1], [2], [0, 0, 0, 1, 1, 2], [0], [0]>} : vector<2x8x8xbf16>, vector<2x8x16xbf16>, vector<2x8x16xf32> -> vector<2x8x16xf32>
    "tpu.trace_stop"() : () -> ()
    %48 = vector.shape_cast %47 : vector<2x8x16xf32> to vector<16x16xf32>
    %c0_25 = arith.constant 0 : index
    %c0_26 = arith.constant 0 : index
    %49 = vector.load %arg21[%c0_25, %c0_26] : memref<16x64xf32, #tpu.memory_space<vmem>>, vector<16x16xf32>
    tpu.vector_store %arg21[%c0_25, %c0_26], %48 {strides = array<i32>} : memref<16x64xf32, #tpu.memory_space<vmem>>, vector<16x16xf32>,
    %50 = vector.extract_strided_slice %15 {offsets = [0, 16], sizes = [16, 16], strides = [1, 1]} : vector<16x64xf32> to vector<16x16xf32>
    %51 = vector.shape_cast %50 : vector<16x16xf32> to vector<2x8x16xf32>
    %52 = vector.extract_strided_slice %23 {offsets = [0, 16], sizes = [16, 16], strides = [1, 1]} : vector<16x128xf32> to vector<16x16xf32>
    %53 = vector.shape_cast %52 : vector<16x16xf32> to vector<2x8x16xf32>
    %54 = vector.extract_strided_slice %23 {offsets = [0, 80], sizes = [16, 16], strides = [1, 1]} : vector<16x128xf32> to vector<16x16xf32>
    %55 = vector.shape_cast %54 : vector<16x16xf32> to vector<2x8x16xf32>
    %56 = arith.truncf %51 : vector<2x8x16xf32> to vector<2x8x16xbf16>
    %57 = arith.truncf %53 : vector<2x8x16xf32> to vector<2x8x16xbf16>
    "tpu.trace_start"() <{level = 10 : i32, message = "bqd,bkd->bqk"}> : () -> ()
    %cst_27 = arith.constant dense<0.000000e+00> : vector<2x8x8xf32>
    %58 = tpu.matmul %56, %57, %cst_27 {dimension_numbers = #tpu.dot_dimension_numbers<[2], [2], [1], [1], [0, 0, 0, 1, 1, 1], [0], [0]>} : vector<2x8x16xbf16>, vector<2x8x16xbf16>, vector<2x8x8xf32> -> vector<2x8x8xf32>
    "tpu.trace_stop"() : () -> ()
    %cst_28 = arith.constant 2.500000e-01 : f32
    %59 = vector.broadcast %cst_28 : f32 to vector<2x8x8xf32>
    %60 = arith.mulf %58, %59 : vector<2x8x8xf32>
    %cst_29 = arith.constant dense<0xFF800000> : vector<2x8xf32>
    %61 = vector.multi_reduction <maximumf>, %60, %cst_29 [2] : vector<2x8x8xf32> to vector<2x8xf32>
    %62 = vector.shape_cast %61 : vector<2x8xf32> to vector<2x8x1xf32>
    %63 = vector.broadcast %62 : vector<2x8x1xf32> to vector<2x8x8xf32>
    %64 = arith.subf %60, %63 : vector<2x8x8xf32>
    %65 = math.exp %64 : vector<2x8x8xf32>
    %cst_30 = arith.constant dense<0.000000e+00> : vector<2x8xf32>
    %66 = vector.multi_reduction <add>, %65, %cst_30 [2] : vector<2x8x8xf32> to vector<2x8xf32>
    %67 = vector.shape_cast %66 : vector<2x8xf32> to vector<2x8x1xf32>
    %68 = tpu.reciprocal %67 {approx = true} : vector<2x8x1xf32> -> vector<2x8x1xf32>
    %69 = vector.broadcast %68 : vector<2x8x1xf32> to vector<2x8x8xf32>
    %70 = arith.mulf %65, %69 : vector<2x8x8xf32>
    %71 = arith.truncf %70 : vector<2x8x8xf32> to vector<2x8x8xbf16>
    %72 = arith.truncf %55 : vector<2x8x16xf32> to vector<2x8x16xbf16>
    "tpu.trace_start"() <{level = 10 : i32, message = "bqk,bkd->bqd"}> : () -> ()
    %cst_31 = arith.constant dense<0.000000e+00> : vector<2x8x16xf32>
    %73 = tpu.matmul %71, %72, %cst_31 {dimension_numbers = #tpu.dot_dimension_numbers<[2], [1], [1], [2], [0, 0, 0, 1, 1, 2], [0], [0]>} : vector<2x8x8xbf16>, vector<2x8x16xbf16>, vector<2x8x16xf32> -> vector<2x8x16xf32>
    "tpu.trace_stop"() : () -> ()
    %74 = vector.shape_cast %73 : vector<2x8x16xf32> to vector<16x16xf32>
    %c0_32 = arith.constant 0 : index
    %c16 = arith.constant 16 : index
    %75 = vector.load %arg21[%c0_32, %c16] : memref<16x64xf32, #tpu.memory_space<vmem>>, vector<16x16xf32>
    tpu.vector_store %arg21[%c0_32, %c16], %74 {strides = array<i32>} : memref<16x64xf32, #tpu.memory_space<vmem>>, vector<16x16xf32>,
    %76 = vector.extract_strided_slice %15 {offsets = [0, 32], sizes = [16, 16], strides = [1, 1]} : vector<16x64xf32> to vector<16x16xf32>
    %77 = vector.shape_cast %76 : vector<16x16xf32> to vector<2x8x16xf32>
    %78 = vector.extract_strided_slice %23 {offsets = [0, 32], sizes = [16, 16], strides = [1, 1]} : vector<16x128xf32> to vector<16x16xf32>
    %79 = vector.shape_cast %78 : vector<16x16xf32> to vector<2x8x16xf32>
    %80 = vector.extract_strided_slice %23 {offsets = [0, 96], sizes = [16, 16], strides = [1, 1]} : vector<16x128xf32> to vector<16x16xf32>
    %81 = vector.shape_cast %80 : vector<16x16xf32> to vector<2x8x16xf32>
    %82 = arith.truncf %77 : vector<2x8x16xf32> to vector<2x8x16xbf16>
    %83 = arith.truncf %79 : vector<2x8x16xf32> to vector<2x8x16xbf16>
    "tpu.trace_start"() <{level = 10 : i32, message = "bqd,bkd->bqk"}> : () -> ()
    %cst_33 = arith.constant dense<0.000000e+00> : vector<2x8x8xf32>
    %84 = tpu.matmul %82, %83, %cst_33 {dimension_numbers = #tpu.dot_dimension_numbers<[2], [2], [1], [1], [0, 0, 0, 1, 1, 1], [0], [0]>} : vector<2x8x16xbf16>, vector<2x8x16xbf16>, vector<2x8x8xf32> -> vector<2x8x8xf32>
    "tpu.trace_stop"() : () -> ()
    %cst_34 = arith.constant 2.500000e-01 : f32
    %85 = vector.broadcast %cst_34 : f32 to vector<2x8x8xf32>
    %86 = arith.mulf %84, %85 : vector<2x8x8xf32>
    %cst_35 = arith.constant dense<0xFF800000> : vector<2x8xf32>
    %87 = vector.multi_reduction <maximumf>, %86, %cst_35 [2] : vector<2x8x8xf32> to vector<2x8xf32>
    %88 = vector.shape_cast %87 : vector<2x8xf32> to vector<2x8x1xf32>
    %89 = vector.broadcast %88 : vector<2x8x1xf32> to vector<2x8x8xf32>
    %90 = arith.subf %86, %89 : vector<2x8x8xf32>
    %91 = math.exp %90 : vector<2x8x8xf32>
    %cst_36 = arith.constant dense<0.000000e+00> : vector<2x8xf32>
    %92 = vector.multi_reduction <add>, %91, %cst_36 [2] : vector<2x8x8xf32> to vector<2x8xf32>
    %93 = vector.shape_cast %92 : vector<2x8xf32> to vector<2x8x1xf32>
    %94 = tpu.reciprocal %93 {approx = true} : vector<2x8x1xf32> -> vector<2x8x1xf32>
    %95 = vector.broadcast %94 : vector<2x8x1xf32> to vector<2x8x8xf32>
    %96 = arith.mulf %91, %95 : vector<2x8x8xf32>
    %97 = arith.truncf %96 : vector<2x8x8xf32> to vector<2x8x8xbf16>
    %98 = arith.truncf %81 : vector<2x8x16xf32> to vector<2x8x16xbf16>
    "tpu.trace_start"() <{level = 10 : i32, message = "bqk,bkd->bqd"}> : () -> ()
    %cst_37 = arith.constant dense<0.000000e+00> : vector<2x8x16xf32>
    %99 = tpu.matmul %97, %98, %cst_37 {dimension_numbers = #tpu.dot_dimension_numbers<[2], [1], [1], [2], [0, 0, 0, 1, 1, 2], [0], [0]>} : vector<2x8x8xbf16>, vector<2x8x16xbf16>, vector<2x8x16xf32> -> vector<2x8x16xf32>
    "tpu.trace_stop"() : () -> ()
    %100 = vector.shape_cast %99 : vector<2x8x16xf32> to vector<16x16xf32>
    %c0_38 = arith.constant 0 : index
    %c32 = arith.constant 32 : index
    %101 = vector.load %arg21[%c0_38, %c32] : memref<16x64xf32, #tpu.memory_space<vmem>>, vector<16x16xf32>
    tpu.vector_store %arg21[%c0_38, %c32], %100 {strides = array<i32>} : memref<16x64xf32, #tpu.memory_space<vmem>>, vector<16x16xf32>,
    %102 = vector.extract_strided_slice %15 {offsets = [0, 48], sizes = [16, 16], strides = [1, 1]} : vector<16x64xf32> to vector<16x16xf32>
    %103 = vector.shape_cast %102 : vector<16x16xf32> to vector<2x8x16xf32>
    %104 = vector.extract_strided_slice %23 {offsets = [0, 48], sizes = [16, 16], strides = [1, 1]} : vector<16x128xf32> to vector<16x16xf32>
    %105 = vector.shape_cast %104 : vector<16x16xf32> to vector<2x8x16xf32>
    %106 = vector.extract_strided_slice %23 {offsets = [0, 112], sizes = [16, 16], strides = [1, 1]} : vector<16x128xf32> to vector<16x16xf32>
    %107 = vector.shape_cast %106 : vector<16x16xf32> to vector<2x8x16xf32>
    %108 = arith.truncf %103 : vector<2x8x16xf32> to vector<2x8x16xbf16>
    %109 = arith.truncf %105 : vector<2x8x16xf32> to vector<2x8x16xbf16>
    "tpu.trace_start"() <{level = 10 : i32, message = "bqd,bkd->bqk"}> : () -> ()
    %cst_39 = arith.constant dense<0.000000e+00> : vector<2x8x8xf32>
    %110 = tpu.matmul %108, %109, %cst_39 {dimension_numbers = #tpu.dot_dimension_numbers<[2], [2], [1], [1], [0, 0, 0, 1, 1, 1], [0], [0]>} : vector<2x8x16xbf16>, vector<2x8x16xbf16>, vector<2x8x8xf32> -> vector<2x8x8xf32>
    "tpu.trace_stop"() : () -> ()
    %cst_40 = arith.constant 2.500000e-01 : f32
    %111 = vector.broadcast %cst_40 : f32 to vector<2x8x8xf32>
    %112 = arith.mulf %110, %111 : vector<2x8x8xf32>
    %cst_41 = arith.constant dense<0xFF800000> : vector<2x8xf32>
    %113 = vector.multi_reduction <maximumf>, %112, %cst_41 [2] : vector<2x8x8xf32> to vector<2x8xf32>
    %114 = vector.shape_cast %113 : vector<2x8xf32> to vector<2x8x1xf32>
    %115 = vector.broadcast %114 : vector<2x8x1xf32> to vector<2x8x8xf32>
    %116 = arith.subf %112, %115 : vector<2x8x8xf32>
    %117 = math.exp %116 : vector<2x8x8xf32>
    %cst_42 = arith.constant dense<0.000000e+00> : vector<2x8xf32>
    %118 = vector.multi_reduction <add>, %117, %cst_42 [2] : vector<2x8x8xf32> to vector<2x8xf32>
    %119 = vector.shape_cast %118 : vector<2x8xf32> to vector<2x8x1xf32>
    %120 = tpu.reciprocal %119 {approx = true} : vector<2x8x1xf32> -> vector<2x8x1xf32>
    %121 = vector.broadcast %120 : vector<2x8x1xf32> to vector<2x8x8xf32>
    %122 = arith.mulf %117, %121 : vector<2x8x8xf32>
    %123 = arith.truncf %122 : vector<2x8x8xf32> to vector<2x8x8xbf16>
    %124 = arith.truncf %107 : vector<2x8x16xf32> to vector<2x8x16xbf16>
    "tpu.trace_start"() <{level = 10 : i32, message = "bqk,bkd->bqd"}> : () -> ()
    %cst_43 = arith.constant dense<0.000000e+00> : vector<2x8x16xf32>
    %125 = tpu.matmul %123, %124, %cst_43 {dimension_numbers = #tpu.dot_dimension_numbers<[2], [1], [1], [2], [0, 0, 0, 1, 1, 2], [0], [0]>} : vector<2x8x8xbf16>, vector<2x8x16xbf16>, vector<2x8x16xf32> -> vector<2x8x16xf32>
    "tpu.trace_stop"() : () -> ()
    %126 = vector.shape_cast %125 : vector<2x8x16xf32> to vector<16x16xf32>
    %c0_44 = arith.constant 0 : index
    %c48 = arith.constant 48 : index
    %127 = vector.load %arg21[%c0_44, %c48] : memref<16x64xf32, #tpu.memory_space<vmem>>, vector<16x16xf32>
    tpu.vector_store %arg21[%c0_44, %c48], %126 {strides = array<i32>} : memref<16x64xf32, #tpu.memory_space<vmem>>, vector<16x16xf32>,
    %c0_45 = arith.constant 0 : index
    %c0_46 = arith.constant 0 : index
    %128 = vector.load %arg21[%c0_45, %c0_46] : memref<16x64xf32, #tpu.memory_space<vmem>>, vector<16x64xf32>
    %c0_47 = arith.constant 0 : index
    %c0_48 = arith.constant 0 : index
    %c0_49 = arith.constant 0 : index
    %129 = vector.load %arg8[%c0_47, %c0_48, %c0_49] : memref<2x64x64xbf16, #tpu.memory_space<vmem>>, vector<1x64x64xbf16>
    %130 = vector.shape_cast %129 : vector<1x64x64xbf16> to vector<64x64xbf16>
    %131 = arith.truncf %128 : vector<16x64xf32> to vector<16x64xbf16>
    %cst_50 = arith.constant dense<0.000000e+00> : vector<16x64xf32>
    %132 = tpu.matmul %131, %130, %cst_50 {dimension_numbers = #tpu.dot_dimension_numbers<[1], [0], [0], [1], [0, 0, 1, 1], [], []>} : vector<16x64xbf16>, vector<64x64xbf16>, vector<16x64xf32> -> vector<16x64xf32>
    %c0_51 = arith.constant 0 : index
    %c0_52 = arith.constant 0 : index
    %c0_53 = arith.constant 0 : index
    %133 = vector.load %arg9[%c0_51, %c0_52, %c0_53] : memref<2x1x64xf32, #tpu.memory_space<vmem>>, vector<1x1x64xf32>
    %134 = vector.shape_cast %133 : vector<1x1x64xf32> to vector<1x64xf32>
    %135 = vector.broadcast %134 : vector<1x64xf32> to vector<16x64xf32>
    %136 = arith.addf %132, %135 : vector<16x64xf32>
    %137 = arith.addf %7, %136 : vector<16x64xf32>
    %c0_54 = arith.constant 0 : index
    %c0_55 = arith.constant 0 : index
    %c0_56 = arith.constant 0 : index
    %138 = vector.load %arg10[%c0_54, %c0_55, %c0_56] : memref<2x1x64xf32, #tpu.memory_space<vmem>>, vector<1x1x64xf32>
    %139 = vector.shape_cast %138 : vector<1x1x64xf32> to vector<1x64xf32>
    %c0_57 = arith.constant 0 : index
    %c0_58 = arith.constant 0 : index
    %c0_59 = arith.constant 0 : index
    %140 = vector.load %arg11[%c0_57, %c0_58, %c0_59] : memref<2x1x64xf32, #tpu.memory_space<vmem>>, vector<1x1x64xf32>
    %141 = vector.shape_cast %140 : vector<1x1x64xf32> to vector<1x64xf32>
    %cst_60 = arith.constant dense<0.000000e+00> : vector<16xf32>
    %142 = vector.multi_reduction <add>, %137, %cst_60 [1] : vector<16x64xf32> to vector<16xf32>
    %143 = vector.shape_cast %142 : vector<16xf32> to vector<16x1xf32>
    %cst_61 = arith.constant 6.400000e+01 : f32
    %144 = vector.broadcast %cst_61 : f32 to vector<16x1xf32>
    %145 = arith.divf %143, %144 : vector<16x1xf32>
    %146 = vector.broadcast %145 : vector<16x1xf32> to vector<16x64xf32>
    %147 = arith.subf %137, %146 : vector<16x64xf32>
    %148 = arith.mulf %147, %147 : vector<16x64xf32>
    %cst_62 = arith.constant dense<0.000000e+00> : vector<16xf32>
    %149 = vector.multi_reduction <add>, %148, %cst_62 [1] : vector<16x64xf32> to vector<16xf32>
    %150 = vector.shape_cast %149 : vector<16xf32> to vector<16x1xf32>
    %cst_63 = arith.constant 6.400000e+01 : f32
    %151 = vector.broadcast %cst_63 : f32 to vector<16x1xf32>
    %152 = arith.divf %150, %151 : vector<16x1xf32>
    %cst_64 = arith.constant 9.99999974E-6 : f32
    %153 = vector.broadcast %cst_64 : f32 to vector<16x1xf32>
    %154 = arith.addf %152, %153 : vector<16x1xf32>
    %155 = math.rsqrt %154 : vector<16x1xf32>
    %156 = vector.broadcast %155 : vector<16x1xf32> to vector<16x64xf32>
    %157 = arith.mulf %147, %156 : vector<16x64xf32>
    %158 = vector.broadcast %139 : vector<1x64xf32> to vector<16x64xf32>
    %159 = arith.mulf %157, %158 : vector<16x64xf32>
    %160 = vector.broadcast %141 : vector<1x64xf32> to vector<16x64xf32>
    %161 = arith.addf %159, %160 : vector<16x64xf32>
    %c0_65 = arith.constant 0 : index
    %c0_66 = arith.constant 0 : index
    %c0_67 = arith.constant 0 : index
    %162 = vector.load %arg12[%c0_65, %c0_66, %c0_67] : memref<2x64x128xbf16, #tpu.memory_space<vmem>>, vector<1x64x128xbf16>
    %163 = vector.shape_cast %162 : vector<1x64x128xbf16> to vector<64x128xbf16>
    %164 = arith.truncf %161 : vector<16x64xf32> to vector<16x64xbf16>
    %cst_68 = arith.constant dense<0.000000e+00> : vector<16x128xf32>
    %165 = tpu.matmul %164, %163, %cst_68 {dimension_numbers = #tpu.dot_dimension_numbers<[1], [0], [0], [1], [0, 0, 1, 1], [], []>} : vector<16x64xbf16>, vector<64x128xbf16>, vector<16x128xf32> -> vector<16x128xf32>
    %c0_69 = arith.constant 0 : index
    %c0_70 = arith.constant 0 : index
    %c0_71 = arith.constant 0 : index
    %166 = vector.load %arg13[%c0_69, %c0_70, %c0_71] : memref<2x1x128xf32, #tpu.memory_space<vmem>>, vector<1x1x128xf32>
    %167 = vector.shape_cast %166 : vector<1x1x128xf32> to vector<1x128xf32>
    %168 = vector.broadcast %167 : vector<1x128xf32> to vector<16x128xf32>
    %169 = arith.addf %165, %168 : vector<16x128xf32>
    %cst_72 = arith.constant 0.000000e+00 : f32
    %170 = vector.broadcast %cst_72 : f32 to vector<16x128xf32>
    %171 = arith.maximumf %169, %170 : vector<16x128xf32>
    %c0_73 = arith.constant 0 : index
    %c0_74 = arith.constant 0 : index
    %c0_75 = arith.constant 0 : index
    %172 = vector.load %arg14[%c0_73, %c0_74, %c0_75] : memref<2x128x64xbf16, #tpu.memory_space<vmem>>, vector<1x128x64xbf16>
    %173 = vector.shape_cast %172 : vector<1x128x64xbf16> to vector<128x64xbf16>
    %174 = arith.truncf %171 : vector<16x128xf32> to vector<16x128xbf16>
    %cst_76 = arith.constant dense<0.000000e+00> : vector<16x64xf32>
    %175 = tpu.matmul %174, %173, %cst_76 {dimension_numbers = #tpu.dot_dimension_numbers<[1], [0], [0], [1], [0, 0, 1, 1], [], []>} : vector<16x128xbf16>, vector<128x64xbf16>, vector<16x64xf32> -> vector<16x64xf32>
    %c0_77 = arith.constant 0 : index
    %c0_78 = arith.constant 0 : index
    %c0_79 = arith.constant 0 : index
    %176 = vector.load %arg15[%c0_77, %c0_78, %c0_79] : memref<2x1x64xf32, #tpu.memory_space<vmem>>, vector<1x1x64xf32>
    %177 = vector.shape_cast %176 : vector<1x1x64xf32> to vector<1x64xf32>
    %178 = vector.broadcast %177 : vector<1x64xf32> to vector<16x64xf32>
    %179 = arith.addf %175, %178 : vector<16x64xf32>
    %180 = arith.addf %161, %179 : vector<16x64xf32>
    %c0_80 = arith.constant 0 : index
    %c0_81 = arith.constant 0 : index
    %c0_82 = arith.constant 0 : index
    %181 = vector.load %arg16[%c0_80, %c0_81, %c0_82] : memref<2x1x64xf32, #tpu.memory_space<vmem>>, vector<1x1x64xf32>
    %182 = vector.shape_cast %181 : vector<1x1x64xf32> to vector<1x64xf32>
    %c0_83 = arith.constant 0 : index
    %c0_84 = arith.constant 0 : index
    %c0_85 = arith.constant 0 : index
    %183 = vector.load %arg17[%c0_83, %c0_84, %c0_85] : memref<2x1x64xf32, #tpu.memory_space<vmem>>, vector<1x1x64xf32>
    %184 = vector.shape_cast %183 : vector<1x1x64xf32> to vector<1x64xf32>
    %cst_86 = arith.constant dense<0.000000e+00> : vector<16xf32>
    %185 = vector.multi_reduction <add>, %180, %cst_86 [1] : vector<16x64xf32> to vector<16xf32>
    %186 = vector.shape_cast %185 : vector<16xf32> to vector<16x1xf32>
    %cst_87 = arith.constant 6.400000e+01 : f32
    %187 = vector.broadcast %cst_87 : f32 to vector<16x1xf32>
    %188 = arith.divf %186, %187 : vector<16x1xf32>
    %189 = vector.broadcast %188 : vector<16x1xf32> to vector<16x64xf32>
    %190 = arith.subf %180, %189 : vector<16x64xf32>
    %191 = arith.mulf %190, %190 : vector<16x64xf32>
    %cst_88 = arith.constant dense<0.000000e+00> : vector<16xf32>
    %192 = vector.multi_reduction <add>, %191, %cst_88 [1] : vector<16x64xf32> to vector<16xf32>
    %193 = vector.shape_cast %192 : vector<16xf32> to vector<16x1xf32>
    %cst_89 = arith.constant 6.400000e+01 : f32
    %194 = vector.broadcast %cst_89 : f32 to vector<16x1xf32>
    %195 = arith.divf %193, %194 : vector<16x1xf32>
    %cst_90 = arith.constant 9.99999974E-6 : f32
    %196 = vector.broadcast %cst_90 : f32 to vector<16x1xf32>
    %197 = arith.addf %195, %196 : vector<16x1xf32>
    %198 = math.rsqrt %197 : vector<16x1xf32>
    %199 = vector.broadcast %198 : vector<16x1xf32> to vector<16x64xf32>
    %200 = arith.mulf %190, %199 : vector<16x64xf32>
    %201 = vector.broadcast %182 : vector<1x64xf32> to vector<16x64xf32>
    %202 = arith.mulf %200, %201 : vector<16x64xf32>
    %203 = vector.broadcast %184 : vector<1x64xf32> to vector<16x64xf32>
    %204 = arith.addf %202, %203 : vector<16x64xf32>
    %205 = vector.shape_cast %204 : vector<16x64xf32> to vector<2x8x64xf32>
    %206 = vector.extract_strided_slice %205 {offsets = [0, 7, 0], sizes = [2, 1, 64], strides = [1, 1, 1]} : vector<2x8x64xf32> to vector<2x1x64xf32>
    %207 = vector.shape_cast %206 : vector<2x1x64xf32> to vector<2x64xf32>
    %c1 = arith.constant 1 : index
    %c0_91 = arith.constant 0 : index
    %c0_92 = arith.constant 0 : index
    %208 = vector.load %arg4[%c1, %c0_91, %c0_92] : memref<2x64x64xbf16, #tpu.memory_space<vmem>>, vector<1x64x64xbf16>
    %209 = vector.shape_cast %208 : vector<1x64x64xbf16> to vector<64x64xbf16>
    %210 = arith.truncf %207 : vector<2x64xf32> to vector<2x64xbf16>
    %cst_93 = arith.constant dense<0.000000e+00> : vector<2x64xf32>
    %211 = tpu.matmul %210, %209, %cst_93 {dimension_numbers = #tpu.dot_dimension_numbers<[1], [0], [0], [1], [0, 0, 1, 1], [], []>} : vector<2x64xbf16>, vector<64x64xbf16>, vector<2x64xf32> -> vector<2x64xf32>
    %c1_94 = arith.constant 1 : index
    %c0_95 = arith.constant 0 : index
    %c0_96 = arith.constant 0 : index
    %212 = vector.load %arg5[%c1_94, %c0_95, %c0_96] : memref<2x1x64xf32, #tpu.memory_space<vmem>>, vector<1x1x64xf32>
    %213 = vector.shape_cast %212 : vector<1x1x64xf32> to vector<1x64xf32>
    %214 = vector.broadcast %213 : vector<1x64xf32> to vector<2x64xf32>
    %215 = arith.addf %211, %214 : vector<2x64xf32>
    %c1_97 = arith.constant 1 : index
    %c0_98 = arith.constant 0 : index
    %c0_99 = arith.constant 0 : index
    %216 = vector.load %arg6[%c1_97, %c0_98, %c0_99] : memref<2x64x128xbf16, #tpu.memory_space<vmem>>, vector<1x64x128xbf16>
    %217 = vector.shape_cast %216 : vector<1x64x128xbf16> to vector<64x128xbf16>
    %218 = arith.truncf %204 : vector<16x64xf32> to vector<16x64xbf16>
    %cst_100 = arith.constant dense<0.000000e+00> : vector<16x128xf32>
    %219 = tpu.matmul %218, %217, %cst_100 {dimension_numbers = #tpu.dot_dimension_numbers<[1], [0], [0], [1], [0, 0, 1, 1], [], []>} : vector<16x64xbf16>, vector<64x128xbf16>, vector<16x128xf32> -> vector<16x128xf32>
    %c1_101 = arith.constant 1 : index
    %c0_102 = arith.constant 0 : index
    %c0_103 = arith.constant 0 : index
    %220 = vector.load %arg7[%c1_101, %c0_102, %c0_103] : memref<2x1x128xf32, #tpu.memory_space<vmem>>, vector<1x1x128xf32>
    %221 = vector.shape_cast %220 : vector<1x1x128xf32> to vector<1x128xf32>
    %222 = vector.broadcast %221 : vector<1x128xf32> to vector<16x128xf32>
    %223 = arith.addf %219, %222 : vector<16x128xf32>
    %224 = vector.extract_strided_slice %215 {offsets = [0, 0], sizes = [2, 16], strides = [1, 1]} : vector<2x64xf32> to vector<2x16xf32>
    %225 = vector.shape_cast %224 : vector<2x16xf32> to vector<2x1x16xf32>
    %226 = vector.extract_strided_slice %223 {offsets = [0, 0], sizes = [16, 16], strides = [1, 1]} : vector<16x128xf32> to vector<16x16xf32>
    %227 = vector.shape_cast %226 : vector<16x16xf32> to vector<2x8x16xf32>
    %228 = vector.extract_strided_slice %223 {offsets = [0, 64], sizes = [16, 16], strides = [1, 1]} : vector<16x128xf32> to vector<16x16xf32>
    %229 = vector.shape_cast %228 : vector<16x16xf32> to vector<2x8x16xf32>
    %230 = arith.truncf %225 : vector<2x1x16xf32> to vector<2x1x16xbf16>
    %231 = arith.truncf %227 : vector<2x8x16xf32> to vector<2x8x16xbf16>
    "tpu.trace_start"() <{level = 10 : i32, message = "bqd,bkd->bqk"}> : () -> ()
    %cst_104 = arith.constant dense<0.000000e+00> : vector<2x1x8xf32>
    %232 = tpu.matmul %230, %231, %cst_104 {dimension_numbers = #tpu.dot_dimension_numbers<[2], [2], [1], [1], [0, 0, 0, 1, 1, 1], [0], [0]>} : vector<2x1x16xbf16>, vector<2x8x16xbf16>, vector<2x1x8xf32> -> vector<2x1x8xf32>
    "tpu.trace_stop"() : () -> ()
    %cst_105 = arith.constant 2.500000e-01 : f32
    %233 = vector.broadcast %cst_105 : f32 to vector<2x1x8xf32>
    %234 = arith.mulf %232, %233 : vector<2x1x8xf32>
    %cst_106 = arith.constant dense<0xFF800000> : vector<2x1xf32>
    %235 = vector.multi_reduction <maximumf>, %234, %cst_106 [2] : vector<2x1x8xf32> to vector<2x1xf32>
    %236 = vector.shape_cast %235 : vector<2x1xf32> to vector<2x1x1xf32>
    %237 = vector.broadcast %236 : vector<2x1x1xf32> to vector<2x1x8xf32>
    %238 = arith.subf %234, %237 : vector<2x1x8xf32>
    %239 = math.exp %238 : vector<2x1x8xf32>
    %cst_107 = arith.constant dense<0.000000e+00> : vector<2x1xf32>
    %240 = vector.multi_reduction <add>, %239, %cst_107 [2] : vector<2x1x8xf32> to vector<2x1xf32>
    %241 = vector.shape_cast %240 : vector<2x1xf32> to vector<2x1x1xf32>
    %242 = tpu.reciprocal %241 {approx = true} : vector<2x1x1xf32> -> vector<2x1x1xf32>
    %243 = vector.broadcast %242 : vector<2x1x1xf32> to vector<2x1x8xf32>
    %244 = arith.mulf %239, %243 : vector<2x1x8xf32>
    %245 = arith.truncf %244 : vector<2x1x8xf32> to vector<2x1x8xbf16>
    %246 = arith.truncf %229 : vector<2x8x16xf32> to vector<2x8x16xbf16>
    "tpu.trace_start"() <{level = 10 : i32, message = "bqk,bkd->bqd"}> : () -> ()
    %cst_108 = arith.constant dense<0.000000e+00> : vector<2x1x16xf32>
    %247 = tpu.matmul %245, %246, %cst_108 {dimension_numbers = #tpu.dot_dimension_numbers<[2], [1], [1], [2], [0, 0, 0, 1, 1, 2], [0], [0]>} : vector<2x1x8xbf16>, vector<2x8x16xbf16>, vector<2x1x16xf32> -> vector<2x1x16xf32>
    "tpu.trace_stop"() : () -> ()
    %248 = vector.shape_cast %247 : vector<2x1x16xf32> to vector<2x16xf32>
    %c0_109 = arith.constant 0 : index
    %c0_110 = arith.constant 0 : index
    %249 = vector.load %arg21[%c0_109, %c0_110] : memref<16x64xf32, #tpu.memory_space<vmem>>, vector<2x16xf32>
    tpu.vector_store %arg21[%c0_109, %c0_110], %248 {strides = array<i32>} : memref<16x64xf32, #tpu.memory_space<vmem>>, vector<2x16xf32>,
    %250 = vector.extract_strided_slice %215 {offsets = [0, 16], sizes = [2, 16], strides = [1, 1]} : vector<2x64xf32> to vector<2x16xf32>
    %251 = vector.shape_cast %250 : vector<2x16xf32> to vector<2x1x16xf32>
    %252 = vector.extract_strided_slice %223 {offsets = [0, 16], sizes = [16, 16], strides = [1, 1]} : vector<16x128xf32> to vector<16x16xf32>
    %253 = vector.shape_cast %252 : vector<16x16xf32> to vector<2x8x16xf32>
    %254 = vector.extract_strided_slice %223 {offsets = [0, 80], sizes = [16, 16], strides = [1, 1]} : vector<16x128xf32> to vector<16x16xf32>
    %255 = vector.shape_cast %254 : vector<16x16xf32> to vector<2x8x16xf32>
    %256 = arith.truncf %251 : vector<2x1x16xf32> to vector<2x1x16xbf16>
    %257 = arith.truncf %253 : vector<2x8x16xf32> to vector<2x8x16xbf16>
    "tpu.trace_start"() <{level = 10 : i32, message = "bqd,bkd->bqk"}> : () -> ()
    %cst_111 = arith.constant dense<0.000000e+00> : vector<2x1x8xf32>
    %258 = tpu.matmul %256, %257, %cst_111 {dimension_numbers = #tpu.dot_dimension_numbers<[2], [2], [1], [1], [0, 0, 0, 1, 1, 1], [0], [0]>} : vector<2x1x16xbf16>, vector<2x8x16xbf16>, vector<2x1x8xf32> -> vector<2x1x8xf32>
    "tpu.trace_stop"() : () -> ()
    %cst_112 = arith.constant 2.500000e-01 : f32
    %259 = vector.broadcast %cst_112 : f32 to vector<2x1x8xf32>
    %260 = arith.mulf %258, %259 : vector<2x1x8xf32>
    %cst_113 = arith.constant dense<0xFF800000> : vector<2x1xf32>
    %261 = vector.multi_reduction <maximumf>, %260, %cst_113 [2] : vector<2x1x8xf32> to vector<2x1xf32>
    %262 = vector.shape_cast %261 : vector<2x1xf32> to vector<2x1x1xf32>
    %263 = vector.broadcast %262 : vector<2x1x1xf32> to vector<2x1x8xf32>
    %264 = arith.subf %260, %263 : vector<2x1x8xf32>
    %265 = math.exp %264 : vector<2x1x8xf32>
    %cst_114 = arith.constant dense<0.000000e+00> : vector<2x1xf32>
    %266 = vector.multi_reduction <add>, %265, %cst_114 [2] : vector<2x1x8xf32> to vector<2x1xf32>
    %267 = vector.shape_cast %266 : vector<2x1xf32> to vector<2x1x1xf32>
    %268 = tpu.reciprocal %267 {approx = true} : vector<2x1x1xf32> -> vector<2x1x1xf32>
    %269 = vector.broadcast %268 : vector<2x1x1xf32> to vector<2x1x8xf32>
    %270 = arith.mulf %265, %269 : vector<2x1x8xf32>
    %271 = arith.truncf %270 : vector<2x1x8xf32> to vector<2x1x8xbf16>
    %272 = arith.truncf %255 : vector<2x8x16xf32> to vector<2x8x16xbf16>
    "tpu.trace_start"() <{level = 10 : i32, message = "bqk,bkd->bqd"}> : () -> ()
    %cst_115 = arith.constant dense<0.000000e+00> : vector<2x1x16xf32>
    %273 = tpu.matmul %271, %272, %cst_115 {dimension_numbers = #tpu.dot_dimension_numbers<[2], [1], [1], [2], [0, 0, 0, 1, 1, 2], [0], [0]>} : vector<2x1x8xbf16>, vector<2x8x16xbf16>, vector<2x1x16xf32> -> vector<2x1x16xf32>
    "tpu.trace_stop"() : () -> ()
    %274 = vector.shape_cast %273 : vector<2x1x16xf32> to vector<2x16xf32>
    %c0_116 = arith.constant 0 : index
    %c16_117 = arith.constant 16 : index
    %275 = vector.load %arg21[%c0_116, %c16_117] : memref<16x64xf32, #tpu.memory_space<vmem>>, vector<2x16xf32>
    tpu.vector_store %arg21[%c0_116, %c16_117], %274 {strides = array<i32>} : memref<16x64xf32, #tpu.memory_space<vmem>>, vector<2x16xf32>,
    %276 = vector.extract_strided_slice %215 {offsets = [0, 32], sizes = [2, 16], strides = [1, 1]} : vector<2x64xf32> to vector<2x16xf32>
    %277 = vector.shape_cast %276 : vector<2x16xf32> to vector<2x1x16xf32>
    %278 = vector.extract_strided_slice %223 {offsets = [0, 32], sizes = [16, 16], strides = [1, 1]} : vector<16x128xf32> to vector<16x16xf32>
    %279 = vector.shape_cast %278 : vector<16x16xf32> to vector<2x8x16xf32>
    %280 = vector.extract_strided_slice %223 {offsets = [0, 96], sizes = [16, 16], strides = [1, 1]} : vector<16x128xf32> to vector<16x16xf32>
    %281 = vector.shape_cast %280 : vector<16x16xf32> to vector<2x8x16xf32>
    %282 = arith.truncf %277 : vector<2x1x16xf32> to vector<2x1x16xbf16>
    %283 = arith.truncf %279 : vector<2x8x16xf32> to vector<2x8x16xbf16>
    "tpu.trace_start"() <{level = 10 : i32, message = "bqd,bkd->bqk"}> : () -> ()
    %cst_118 = arith.constant dense<0.000000e+00> : vector<2x1x8xf32>
    %284 = tpu.matmul %282, %283, %cst_118 {dimension_numbers = #tpu.dot_dimension_numbers<[2], [2], [1], [1], [0, 0, 0, 1, 1, 1], [0], [0]>} : vector<2x1x16xbf16>, vector<2x8x16xbf16>, vector<2x1x8xf32> -> vector<2x1x8xf32>
    "tpu.trace_stop"() : () -> ()
    %cst_119 = arith.constant 2.500000e-01 : f32
    %285 = vector.broadcast %cst_119 : f32 to vector<2x1x8xf32>
    %286 = arith.mulf %284, %285 : vector<2x1x8xf32>
    %cst_120 = arith.constant dense<0xFF800000> : vector<2x1xf32>
    %287 = vector.multi_reduction <maximumf>, %286, %cst_120 [2] : vector<2x1x8xf32> to vector<2x1xf32>
    %288 = vector.shape_cast %287 : vector<2x1xf32> to vector<2x1x1xf32>
    %289 = vector.broadcast %288 : vector<2x1x1xf32> to vector<2x1x8xf32>
    %290 = arith.subf %286, %289 : vector<2x1x8xf32>
    %291 = math.exp %290 : vector<2x1x8xf32>
    %cst_121 = arith.constant dense<0.000000e+00> : vector<2x1xf32>
    %292 = vector.multi_reduction <add>, %291, %cst_121 [2] : vector<2x1x8xf32> to vector<2x1xf32>
    %293 = vector.shape_cast %292 : vector<2x1xf32> to vector<2x1x1xf32>
    %294 = tpu.reciprocal %293 {approx = true} : vector<2x1x1xf32> -> vector<2x1x1xf32>
    %295 = vector.broadcast %294 : vector<2x1x1xf32> to vector<2x1x8xf32>
    %296 = arith.mulf %291, %295 : vector<2x1x8xf32>
    %297 = arith.truncf %296 : vector<2x1x8xf32> to vector<2x1x8xbf16>
    %298 = arith.truncf %281 : vector<2x8x16xf32> to vector<2x8x16xbf16>
    "tpu.trace_start"() <{level = 10 : i32, message = "bqk,bkd->bqd"}> : () -> ()
    %cst_122 = arith.constant dense<0.000000e+00> : vector<2x1x16xf32>
    %299 = tpu.matmul %297, %298, %cst_122 {dimension_numbers = #tpu.dot_dimension_numbers<[2], [1], [1], [2], [0, 0, 0, 1, 1, 2], [0], [0]>} : vector<2x1x8xbf16>, vector<2x8x16xbf16>, vector<2x1x16xf32> -> vector<2x1x16xf32>
    "tpu.trace_stop"() : () -> ()
    %300 = vector.shape_cast %299 : vector<2x1x16xf32> to vector<2x16xf32>
    %c0_123 = arith.constant 0 : index
    %c32_124 = arith.constant 32 : index
    %301 = vector.load %arg21[%c0_123, %c32_124] : memref<16x64xf32, #tpu.memory_space<vmem>>, vector<2x16xf32>
    tpu.vector_store %arg21[%c0_123, %c32_124], %300 {strides = array<i32>} : memref<16x64xf32, #tpu.memory_space<vmem>>, vector<2x16xf32>,
    %302 = vector.extract_strided_slice %215 {offsets = [0, 48], sizes = [2, 16], strides = [1, 1]} : vector<2x64xf32> to vector<2x16xf32>
    %303 = vector.shape_cast %302 : vector<2x16xf32> to vector<2x1x16xf32>
    %304 = vector.extract_strided_slice %223 {offsets = [0, 48], sizes = [16, 16], strides = [1, 1]} : vector<16x128xf32> to vector<16x16xf32>
    %305 = vector.shape_cast %304 : vector<16x16xf32> to vector<2x8x16xf32>
    %306 = vector.extract_strided_slice %223 {offsets = [0, 112], sizes = [16, 16], strides = [1, 1]} : vector<16x128xf32> to vector<16x16xf32>
    %307 = vector.shape_cast %306 : vector<16x16xf32> to vector<2x8x16xf32>
    %308 = arith.truncf %303 : vector<2x1x16xf32> to vector<2x1x16xbf16>
    %309 = arith.truncf %305 : vector<2x8x16xf32> to vector<2x8x16xbf16>
    "tpu.trace_start"() <{level = 10 : i32, message = "bqd,bkd->bqk"}> : () -> ()
    %cst_125 = arith.constant dense<0.000000e+00> : vector<2x1x8xf32>
    %310 = tpu.matmul %308, %309, %cst_125 {dimension_numbers = #tpu.dot_dimension_numbers<[2], [2], [1], [1], [0, 0, 0, 1, 1, 1], [0], [0]>} : vector<2x1x16xbf16>, vector<2x8x16xbf16>, vector<2x1x8xf32> -> vector<2x1x8xf32>
    "tpu.trace_stop"() : () -> ()
    %cst_126 = arith.constant 2.500000e-01 : f32
    %311 = vector.broadcast %cst_126 : f32 to vector<2x1x8xf32>
    %312 = arith.mulf %310, %311 : vector<2x1x8xf32>
    %cst_127 = arith.constant dense<0xFF800000> : vector<2x1xf32>
    %313 = vector.multi_reduction <maximumf>, %312, %cst_127 [2] : vector<2x1x8xf32> to vector<2x1xf32>
    %314 = vector.shape_cast %313 : vector<2x1xf32> to vector<2x1x1xf32>
    %315 = vector.broadcast %314 : vector<2x1x1xf32> to vector<2x1x8xf32>
    %316 = arith.subf %312, %315 : vector<2x1x8xf32>
    %317 = math.exp %316 : vector<2x1x8xf32>
    %cst_128 = arith.constant dense<0.000000e+00> : vector<2x1xf32>
    %318 = vector.multi_reduction <add>, %317, %cst_128 [2] : vector<2x1x8xf32> to vector<2x1xf32>
    %319 = vector.shape_cast %318 : vector<2x1xf32> to vector<2x1x1xf32>
    %320 = tpu.reciprocal %319 {approx = true} : vector<2x1x1xf32> -> vector<2x1x1xf32>
    %321 = vector.broadcast %320 : vector<2x1x1xf32> to vector<2x1x8xf32>
    %322 = arith.mulf %317, %321 : vector<2x1x8xf32>
    %323 = arith.truncf %322 : vector<2x1x8xf32> to vector<2x1x8xbf16>
    %324 = arith.truncf %307 : vector<2x8x16xf32> to vector<2x8x16xbf16>
    "tpu.trace_start"() <{level = 10 : i32, message = "bqk,bkd->bqd"}> : () -> ()
    %cst_129 = arith.constant dense<0.000000e+00> : vector<2x1x16xf32>
    %325 = tpu.matmul %323, %324, %cst_129 {dimension_numbers = #tpu.dot_dimension_numbers<[2], [1], [1], [2], [0, 0, 0, 1, 1, 2], [0], [0]>} : vector<2x1x8xbf16>, vector<2x8x16xbf16>, vector<2x1x16xf32> -> vector<2x1x16xf32>
    "tpu.trace_stop"() : () -> ()
    %326 = vector.shape_cast %325 : vector<2x1x16xf32> to vector<2x16xf32>
    %c0_130 = arith.constant 0 : index
    %c48_131 = arith.constant 48 : index
    %327 = vector.load %arg21[%c0_130, %c48_131] : memref<16x64xf32, #tpu.memory_space<vmem>>, vector<2x16xf32>
    tpu.vector_store %arg21[%c0_130, %c48_131], %326 {strides = array<i32>} : memref<16x64xf32, #tpu.memory_space<vmem>>, vector<2x16xf32>,
    %c0_132 = arith.constant 0 : index
    %c0_133 = arith.constant 0 : index
    %328 = vector.load %arg21[%c0_132, %c0_133] : memref<16x64xf32, #tpu.memory_space<vmem>>, vector<2x64xf32>
    %c1_134 = arith.constant 1 : index
    %c0_135 = arith.constant 0 : index
    %c0_136 = arith.constant 0 : index
    %329 = vector.load %arg8[%c1_134, %c0_135, %c0_136] : memref<2x64x64xbf16, #tpu.memory_space<vmem>>, vector<1x64x64xbf16>
    %330 = vector.shape_cast %329 : vector<1x64x64xbf16> to vector<64x64xbf16>
    %331 = arith.truncf %328 : vector<2x64xf32> to vector<2x64xbf16>
    %cst_137 = arith.constant dense<0.000000e+00> : vector<2x64xf32>
    %332 = tpu.matmul %331, %330, %cst_137 {dimension_numbers = #tpu.dot_dimension_numbers<[1], [0], [0], [1], [0, 0, 1, 1], [], []>} : vector<2x64xbf16>, vector<64x64xbf16>, vector<2x64xf32> -> vector<2x64xf32>
    %c1_138 = arith.constant 1 : index
    %c0_139 = arith.constant 0 : index
    %c0_140 = arith.constant 0 : index
    %333 = vector.load %arg9[%c1_138, %c0_139, %c0_140] : memref<2x1x64xf32, #tpu.memory_space<vmem>>, vector<1x1x64xf32>
    %334 = vector.shape_cast %333 : vector<1x1x64xf32> to vector<1x64xf32>
    %335 = vector.broadcast %334 : vector<1x64xf32> to vector<2x64xf32>
    %336 = arith.addf %332, %335 : vector<2x64xf32>
    %337 = arith.addf %207, %336 : vector<2x64xf32>
    %c1_141 = arith.constant 1 : index
    %c0_142 = arith.constant 0 : index
    %c0_143 = arith.constant 0 : index
    %338 = vector.load %arg10[%c1_141, %c0_142, %c0_143] : memref<2x1x64xf32, #tpu.memory_space<vmem>>, vector<1x1x64xf32>
    %339 = vector.shape_cast %338 : vector<1x1x64xf32> to vector<1x64xf32>
    %c1_144 = arith.constant 1 : index
    %c0_145 = arith.constant 0 : index
    %c0_146 = arith.constant 0 : index
    %340 = vector.load %arg11[%c1_144, %c0_145, %c0_146] : memref<2x1x64xf32, #tpu.memory_space<vmem>>, vector<1x1x64xf32>
    %341 = vector.shape_cast %340 : vector<1x1x64xf32> to vector<1x64xf32>
    %cst_147 = arith.constant dense<0.000000e+00> : vector<2xf32>
    %342 = vector.multi_reduction <add>, %337, %cst_147 [1] : vector<2x64xf32> to vector<2xf32>
    %343 = vector.shape_cast %342 : vector<2xf32> to vector<2x1xf32>
    %cst_148 = arith.constant 6.400000e+01 : f32
    %344 = vector.broadcast %cst_148 : f32 to vector<2x1xf32>
    %345 = arith.divf %343, %344 : vector<2x1xf32>
    %346 = vector.broadcast %345 : vector<2x1xf32> to vector<2x64xf32>
    %347 = arith.subf %337, %346 : vector<2x64xf32>
    %348 = arith.mulf %347, %347 : vector<2x64xf32>
    %cst_149 = arith.constant dense<0.000000e+00> : vector<2xf32>
    %349 = vector.multi_reduction <add>, %348, %cst_149 [1] : vector<2x64xf32> to vector<2xf32>
    %350 = vector.shape_cast %349 : vector<2xf32> to vector<2x1xf32>
    %cst_150 = arith.constant 6.400000e+01 : f32
    %351 = vector.broadcast %cst_150 : f32 to vector<2x1xf32>
    %352 = arith.divf %350, %351 : vector<2x1xf32>
    %cst_151 = arith.constant 9.99999974E-6 : f32
    %353 = vector.broadcast %cst_151 : f32 to vector<2x1xf32>
    %354 = arith.addf %352, %353 : vector<2x1xf32>
    %355 = math.rsqrt %354 : vector<2x1xf32>
    %356 = vector.broadcast %355 : vector<2x1xf32> to vector<2x64xf32>
    %357 = arith.mulf %347, %356 : vector<2x64xf32>
    %358 = vector.broadcast %339 : vector<1x64xf32> to vector<2x64xf32>
    %359 = arith.mulf %357, %358 : vector<2x64xf32>
    %360 = vector.broadcast %341 : vector<1x64xf32> to vector<2x64xf32>
    %361 = arith.addf %359, %360 : vector<2x64xf32>
    %c1_152 = arith.constant 1 : index
    %c0_153 = arith.constant 0 : index
    %c0_154 = arith.constant 0 : index
    %362 = vector.load %arg12[%c1_152, %c0_153, %c0_154] : memref<2x64x128xbf16, #tpu.memory_space<vmem>>, vector<1x64x128xbf16>
    %363 = vector.shape_cast %362 : vector<1x64x128xbf16> to vector<64x128xbf16>
    %364 = arith.truncf %361 : vector<2x64xf32> to vector<2x64xbf16>
    %cst_155 = arith.constant dense<0.000000e+00> : vector<2x128xf32>
    %365 = tpu.matmul %364, %363, %cst_155 {dimension_numbers = #tpu.dot_dimension_numbers<[1], [0], [0], [1], [0, 0, 1, 1], [], []>} : vector<2x64xbf16>, vector<64x128xbf16>, vector<2x128xf32> -> vector<2x128xf32>
    %c1_156 = arith.constant 1 : index
    %c0_157 = arith.constant 0 : index
    %c0_158 = arith.constant 0 : index
    %366 = vector.load %arg13[%c1_156, %c0_157, %c0_158] : memref<2x1x128xf32, #tpu.memory_space<vmem>>, vector<1x1x128xf32>
    %367 = vector.shape_cast %366 : vector<1x1x128xf32> to vector<1x128xf32>
    %368 = vector.broadcast %367 : vector<1x128xf32> to vector<2x128xf32>
    %369 = arith.addf %365, %368 : vector<2x128xf32>
    %cst_159 = arith.constant 0.000000e+00 : f32
    %370 = vector.broadcast %cst_159 : f32 to vector<2x128xf32>
    %371 = arith.maximumf %369, %370 : vector<2x128xf32>
    %c1_160 = arith.constant 1 : index
    %c0_161 = arith.constant 0 : index
    %c0_162 = arith.constant 0 : index
    %372 = vector.load %arg14[%c1_160, %c0_161, %c0_162] : memref<2x128x64xbf16, #tpu.memory_space<vmem>>, vector<1x128x64xbf16>
    %373 = vector.shape_cast %372 : vector<1x128x64xbf16> to vector<128x64xbf16>
    %374 = arith.truncf %371 : vector<2x128xf32> to vector<2x128xbf16>
    %cst_163 = arith.constant dense<0.000000e+00> : vector<2x64xf32>
    %375 = tpu.matmul %374, %373, %cst_163 {dimension_numbers = #tpu.dot_dimension_numbers<[1], [0], [0], [1], [0, 0, 1, 1], [], []>} : vector<2x128xbf16>, vector<128x64xbf16>, vector<2x64xf32> -> vector<2x64xf32>
    %c1_164 = arith.constant 1 : index
    %c0_165 = arith.constant 0 : index
    %c0_166 = arith.constant 0 : index
    %376 = vector.load %arg15[%c1_164, %c0_165, %c0_166] : memref<2x1x64xf32, #tpu.memory_space<vmem>>, vector<1x1x64xf32>
    %377 = vector.shape_cast %376 : vector<1x1x64xf32> to vector<1x64xf32>
    %378 = vector.broadcast %377 : vector<1x64xf32> to vector<2x64xf32>
    %379 = arith.addf %375, %378 : vector<2x64xf32>
    %380 = arith.addf %361, %379 : vector<2x64xf32>
    %c1_167 = arith.constant 1 : index
    %c0_168 = arith.constant 0 : index
    %c0_169 = arith.constant 0 : index
    %381 = vector.load %arg16[%c1_167, %c0_168, %c0_169] : memref<2x1x64xf32, #tpu.memory_space<vmem>>, vector<1x1x64xf32>
    %382 = vector.shape_cast %381 : vector<1x1x64xf32> to vector<1x64xf32>
    %c1_170 = arith.constant 1 : index
    %c0_171 = arith.constant 0 : index
    %c0_172 = arith.constant 0 : index
    %383 = vector.load %arg17[%c1_170, %c0_171, %c0_172] : memref<2x1x64xf32, #tpu.memory_space<vmem>>, vector<1x1x64xf32>
    %384 = vector.shape_cast %383 : vector<1x1x64xf32> to vector<1x64xf32>
    %cst_173 = arith.constant dense<0.000000e+00> : vector<2xf32>
    %385 = vector.multi_reduction <add>, %380, %cst_173 [1] : vector<2x64xf32> to vector<2xf32>
    %386 = vector.shape_cast %385 : vector<2xf32> to vector<2x1xf32>
    %cst_174 = arith.constant 6.400000e+01 : f32
    %387 = vector.broadcast %cst_174 : f32 to vector<2x1xf32>
    %388 = arith.divf %386, %387 : vector<2x1xf32>
    %389 = vector.broadcast %388 : vector<2x1xf32> to vector<2x64xf32>
    %390 = arith.subf %380, %389 : vector<2x64xf32>
    %391 = arith.mulf %390, %390 : vector<2x64xf32>
    %cst_175 = arith.constant dense<0.000000e+00> : vector<2xf32>
    %392 = vector.multi_reduction <add>, %391, %cst_175 [1] : vector<2x64xf32> to vector<2xf32>
    %393 = vector.shape_cast %392 : vector<2xf32> to vector<2x1xf32>
    %cst_176 = arith.constant 6.400000e+01 : f32
    %394 = vector.broadcast %cst_176 : f32 to vector<2x1xf32>
    %395 = arith.divf %393, %394 : vector<2x1xf32>
    %cst_177 = arith.constant 9.99999974E-6 : f32
    %396 = vector.broadcast %cst_177 : f32 to vector<2x1xf32>
    %397 = arith.addf %395, %396 : vector<2x1xf32>
    %398 = math.rsqrt %397 : vector<2x1xf32>
    %399 = vector.broadcast %398 : vector<2x1xf32> to vector<2x64xf32>
    %400 = arith.mulf %390, %399 : vector<2x64xf32>
    %401 = vector.broadcast %382 : vector<1x64xf32> to vector<2x64xf32>
    %402 = arith.mulf %400, %401 : vector<2x64xf32>
    %403 = vector.broadcast %384 : vector<1x64xf32> to vector<2x64xf32>
    %404 = arith.addf %402, %403 : vector<2x64xf32>
    %c0_178 = arith.constant 0 : index
    %c0_179 = arith.constant 0 : index
    %405 = vector.load %arg18[%c0_178, %c0_179] : memref<64x4xbf16, #tpu.memory_space<vmem>>, vector<64x4xbf16>
    %406 = arith.truncf %404 : vector<2x64xf32> to vector<2x64xbf16>
    %cst_180 = arith.constant dense<0.000000e+00> : vector<2x4xf32>
    %407 = tpu.matmul %406, %405, %cst_180 {dimension_numbers = #tpu.dot_dimension_numbers<[1], [0], [0], [1], [0, 0, 1, 1], [], []>} : vector<2x64xbf16>, vector<64x4xbf16>, vector<2x4xf32> -> vector<2x4xf32>
    %c0_181 = arith.constant 0 : index
    %c0_182 = arith.constant 0 : index
    %408 = vector.load %arg19[%c0_181, %c0_182] : memref<1x4xf32, #tpu.memory_space<vmem>>, vector<1x4xf32>
    %409 = vector.broadcast %408 : vector<1x4xf32> to vector<2x4xf32>
    %410 = arith.addf %407, %409 : vector<2x4xf32>
    %c0_183 = arith.constant 0 : index
    %c0_184 = arith.constant 0 : index
    %411 = vector.load %arg20[%c0_183, %c0_184] : memref<2x4xf32, #tpu.memory_space<vmem>>, vector<2x4xf32>
    tpu.vector_store %arg20[%c0_183, %c0_184], %410 {strides = array<i32>} : memref<2x4xf32, #tpu.memory_space<vmem>>, vector<2x4xf32>,
    return
  }
  func.func @transform_0(%arg0: i32) -> (i32, i32, i32) {
    %c0_i32 = arith.constant 0 : i32
    %c0_i32_0 = arith.constant 0 : i32
    %c0_i32_1 = arith.constant 0 : i32
    return %arg0, %c0_i32, %c0_i32_0 : i32, i32, i32
  }
  func.func @transform_1(%arg0: i32) -> (i32, i32) {
    %c0_i32 = arith.constant 0 : i32
    %c0_i32_0 = arith.constant 0 : i32
    %c0_i32_1 = arith.constant 0 : i32
    return %c0_i32, %c0_i32_0 : i32, i32
  }
  func.func @transform_2(%arg0: i32) -> (i32, i32) {
    %c0_i32 = arith.constant 0 : i32
    %c0_i32_0 = arith.constant 0 : i32
    %c0_i32_1 = arith.constant 0 : i32
    return %c0_i32, %c0_i32_0 : i32, i32
  }
  func.func @transform_3(%arg0: i32) -> (i32, i32, i32) {
    %c0_i32 = arith.constant 0 : i32
    %c0_i32_0 = arith.constant 0 : i32
    %c0_i32_1 = arith.constant 0 : i32
    %c0_i32_2 = arith.constant 0 : i32
    return %c0_i32, %c0_i32_0, %c0_i32_1 : i32, i32, i32
  }
  func.func @transform_4(%arg0: i32) -> (i32, i32, i32) {
    %c0_i32 = arith.constant 0 : i32
    %c0_i32_0 = arith.constant 0 : i32
    %c0_i32_1 = arith.constant 0 : i32
    %c0_i32_2 = arith.constant 0 : i32
    return %c0_i32, %c0_i32_0, %c0_i32_1 : i32, i32, i32
  }
  func.func @transform_5(%arg0: i32) -> (i32, i32, i32) {
    %c0_i32 = arith.constant 0 : i32
    %c0_i32_0 = arith.constant 0 : i32
    %c0_i32_1 = arith.constant 0 : i32
    %c0_i32_2 = arith.constant 0 : i32
    return %c0_i32, %c0_i32_0, %c0_i32_1 : i32, i32, i32
  }
  func.func @transform_6(%arg0: i32) -> (i32, i32, i32) {
    %c0_i32 = arith.constant 0 : i32
    %c0_i32_0 = arith.constant 0 : i32
    %c0_i32_1 = arith.constant 0 : i32
    %c0_i32_2 = arith.constant 0 : i32
    return %c0_i32, %c0_i32_0, %c0_i32_1 : i32, i32, i32
  }
  func.func @transform_7(%arg0: i32) -> (i32, i32, i32) {
    %c0_i32 = arith.constant 0 : i32
    %c0_i32_0 = arith.constant 0 : i32
    %c0_i32_1 = arith.constant 0 : i32
    %c0_i32_2 = arith.constant 0 : i32
    return %c0_i32, %c0_i32_0, %c0_i32_1 : i32, i32, i32
  }
  func.func @transform_8(%arg0: i32) -> (i32, i32, i32) {
    %c0_i32 = arith.constant 0 : i32
    %c0_i32_0 = arith.constant 0 : i32
    %c0_i32_1 = arith.constant 0 : i32
    %c0_i32_2 = arith.constant 0 : i32
    return %c0_i32, %c0_i32_0, %c0_i32_1 : i32, i32, i32
  }
  func.func @transform_9(%arg0: i32) -> (i32, i32, i32) {
    %c0_i32 = arith.constant 0 : i32
    %c0_i32_0 = arith.constant 0 : i32
    %c0_i32_1 = arith.constant 0 : i32
    %c0_i32_2 = arith.constant 0 : i32
    return %c0_i32, %c0_i32_0, %c0_i32_1 : i32, i32, i32
  }
  func.func @transform_10(%arg0: i32) -> (i32, i32, i32) {
    %c0_i32 = arith.constant 0 : i32
    %c0_i32_0 = arith.constant 0 : i32
    %c0_i32_1 = arith.constant 0 : i32
    %c0_i32_2 = arith.constant 0 : i32
    return %c0_i32, %c0_i32_0, %c0_i32_1 : i32, i32, i32
  }
  func.func @transform_11(%arg0: i32) -> (i32, i32, i32) {
    %c0_i32 = arith.constant 0 : i32
    %c0_i32_0 = arith.constant 0 : i32
    %c0_i32_1 = arith.constant 0 : i32
    %c0_i32_2 = arith.constant 0 : i32
    return %c0_i32, %c0_i32_0, %c0_i32_1 : i32, i32, i32
  }
  func.func @transform_12(%arg0: i32) -> (i32, i32, i32) {
    %c0_i32 = arith.constant 0 : i32
    %c0_i32_0 = arith.constant 0 : i32
    %c0_i32_1 = arith.constant 0 : i32
    %c0_i32_2 = arith.constant 0 : i32
    return %c0_i32, %c0_i32_0, %c0_i32_1 : i32, i32, i32
  }
  func.func @transform_13(%arg0: i32) -> (i32, i32, i32) {
    %c0_i32 = arith.constant 0 : i32
    %c0_i32_0 = arith.constant 0 : i32
    %c0_i32_1 = arith.constant 0 : i32
    %c0_i32_2 = arith.constant 0 : i32
    return %c0_i32, %c0_i32_0, %c0_i32_1 : i32, i32, i32
  }
  func.func @transform_14(%arg0: i32) -> (i32, i32, i32) {
    %c0_i32 = arith.constant 0 : i32
    %c0_i32_0 = arith.constant 0 : i32
    %c0_i32_1 = arith.constant 0 : i32
    %c0_i32_2 = arith.constant 0 : i32
    return %c0_i32, %c0_i32_0, %c0_i32_1 : i32, i32, i32
  }
  func.func @transform_15(%arg0: i32) -> (i32, i32, i32) {
    %c0_i32 = arith.constant 0 : i32
    %c0_i32_0 = arith.constant 0 : i32
    %c0_i32_1 = arith.constant 0 : i32
    %c0_i32_2 = arith.constant 0 : i32
    return %c0_i32, %c0_i32_0, %c0_i32_1 : i32, i32, i32
  }
  func.func @transform_16(%arg0: i32) -> (i32, i32, i32) {
    %c0_i32 = arith.constant 0 : i32
    %c0_i32_0 = arith.constant 0 : i32
    %c0_i32_1 = arith.constant 0 : i32
    %c0_i32_2 = arith.constant 0 : i32
    return %c0_i32, %c0_i32_0, %c0_i32_1 : i32, i32, i32
  }
  func.func @transform_17(%arg0: i32) -> (i32, i32) {
    %c0_i32 = arith.constant 0 : i32
    %c0_i32_0 = arith.constant 0 : i32
    %c0_i32_1 = arith.constant 0 : i32
    return %c0_i32, %c0_i32_0 : i32, i32
  }
  func.func @transform_18(%arg0: i32) -> (i32, i32) {
    %c0_i32 = arith.constant 0 : i32
    %c0_i32_0 = arith.constant 0 : i32
    %c0_i32_1 = arith.constant 0 : i32
    return %c0_i32, %c0_i32_0 : i32, i32
  }
  func.func @transform_19(%arg0: i32) -> (i32, i32) {
    %c0_i32 = arith.constant 0 : i32
    %c0_i32_0 = arith.constant 0 : i32
    return %arg0, %c0_i32 : i32, i32
  }
}

</mosaic_0001>

<llo_original>
// kernel: transformer_ts_forward.1
$region0: #{transformer_ts_forward.1}
  #allocation0 [shape = 'u32[]', space=smem, size = 0x4, offset = 0x4, fixed_abs, tag = 'smem constant byte address 0x4 - core index']
  #allocation1 [shape = 'u32[72,128]{1,0:T(1,128)}', space=vmem, size = 0x9000, scoped, tag = 'internal scratch']
  #allocation2 [shape = 'f32[16,64]{1,0:T(8,128)}', space=vmem, size = 0x2000, scoped, tag = 'scratch operand']
  %s0 = inlined_call_operand.vmem [shape: f32[2,8,16], index: 0, kind: input, shape index: {}]
  %s1 = inlined_call_operand.vmem [shape: bf16[16,64], index: 1, kind: input, shape index: {}]
  %s2 = inlined_call_operand.vmem [shape: f32[1,64], index: 2, kind: input, shape index: {}]
  %s3 = inlined_call_operand.vmem [shape: bf16[2,64,64], index: 3, kind: input, shape index: {}]
  %s4 = inlined_call_operand.vmem [shape: f32[2,1,64], index: 4, kind: input, shape index: {}]
  %s5 = inlined_call_operand.vmem [shape: bf16[2,64,128], index: 5, kind: input, shape index: {}]
  %s6 = inlined_call_operand.vmem [shape: f32[2,1,128], index: 6, kind: input, shape index: {}]
  %s7 = inlined_call_operand.vmem [shape: bf16[2,64,64], index: 7, kind: input, shape index: {}]
  %s8 = inlined_call_operand.vmem [shape: f32[2,1,64], index: 8, kind: input, shape index: {}]
  %s9 = inlined_call_operand.vmem [shape: f32[2,1,64], index: 9, kind: input, shape index: {}]
  %s10 = inlined_call_operand.vmem [shape: f32[2,1,64], index: 10, kind: input, shape index: {}]
  %s11 = inlined_call_operand.hbm [shape: bf16[2,64,128], index: 11, kind: input, shape index: {}]
  %s12 = inlined_call_operand.hbm [shape: f32[2,1,128], index: 12, kind: input, shape index: {}]
  %s13 = inlined_call_operand.vmem [shape: bf16[2,128,64], index: 13, kind: input, shape index: {}]
  %s14 = inlined_call_operand.hbm [shape: f32[2,1,64], index: 14, kind: input, shape index: {}]
  %s15 = inlined_call_operand.vmem [shape: f32[2,1,64], index: 15, kind: input, shape index: {}]
  %s16 = inlined_call_operand.hbm [shape: f32[2,1,64], index: 16, kind: input, shape index: {}]
  %s17 = inlined_call_operand.vmem [shape: bf16[64,4], index: 17, kind: input, shape index: {}]
  %s18 = inlined_call_operand.hbm [shape: f32[1,4], index: 18, kind: input, shape index: {}]
  %s19 = inlined_call_operand.hbm [shape: f32[2,4], index: 19, kind: output, shape index: {}]
  %s20 = sld [smem:[#allocation0]]
  $region106: #{transformer_ts_forward.1} parent=0
    _
  %s22 = ssub.s32 1, %s20
  %s23 = scalar_select 0, %s22, %s20
  $region1: #{transformer_ts_forward.1} parent=0
    #allocation3 [shape = 'u8[32768]{0}', space=vmem, size = 0x8000, scoped, tag = 'input window, operand 11, single buffered']
    #allocation4 [shape = 's32[1]{0}', space=sflag, size = 0x4, scoped, tag = 'scoped memory for transformer_ts_forward.1']
    #allocation5 [shape = 's32[1]{0}', space=sflag, size = 0x4, scoped, tag = 'scoped memory for transformer_ts_forward.1']
    #allocation6 [shape = 'u8[1024]{0}', space=vmem, size = 0x400, scoped, tag = 'input window, operand 12, single buffered']
    #allocation7 [shape = 's32[1]{0}', space=sflag, size = 0x4, scoped, tag = 'scoped memory for transformer_ts_forward.1']
    #allocation8 [shape = 'u8[1024]{0}', space=vmem, size = 0x400, scoped, tag = 'input window, operand 14, single buffered']
    #allocation9 [shape = 'u8[1024]{0}', space=vmem, size = 0x400, scoped, tag = 'input window, operand 16, single buffered']
    #allocation10 [shape = 's32[1]{0}', space=sflag, size = 0x4, scoped, tag = 'scoped memory for transformer_ts_forward.1']
    #allocation11 [shape = 'u8[512]{0}', space=vmem, size = 0x400, scoped, tag = 'input window, operand 18, single buffered']
    #allocation12 [shape = 'u8[1024]{0}', space=vmem, size = 0x400, scoped, tag = 'output window, operand 0, single buffered']
    %24 = vsyncpa [#allocation4], 0
    %25 = vsyncpa [#allocation7], 0
    %26 = vsyncpa [#allocation10], 0
    %27 = vsyncpa [#allocation5], 0
    // Predicated region
    $region2: #{transformer_ts_forward.1} parent=1 // pred_check
      _
    $region3: #{transformer_ts_forward.1} parent=1 // pred_check_branch
      %29 = sbr.rel (0) target = $region5
    $region4: #{transformer_ts_forward.1} parent=1 // pred_region
      _
    $region5: #{transformer_ts_forward.1} parent=1 // pred_fallthru
      _
    // Predicated region
    $region6: #{transformer_ts_forward.1} parent=1 // pred_check
      _
    $region7: #{transformer_ts_forward.1} parent=1 // pred_check_branch
      %31 = sbr.rel (0) target = $region9
    $region8: #{transformer_ts_forward.1} parent=1 // pred_region
      _
    $region9: #{transformer_ts_forward.1} parent=1 // pred_fallthru
      _
    // Predicated region
    $region10: #{transformer_ts_forward.1} parent=1 // pred_check
      _
    $region11: #{transformer_ts_forward.1} parent=1 // pred_check_branch
      %33 = sbr.rel (0) target = $region13
    $region12: #{transformer_ts_forward.1} parent=1 // pred_region
      _
    $region13: #{transformer_ts_forward.1} parent=1 // pred_fallthru
      _
    // Predicated region
    $region14: #{transformer_ts_forward.1} parent=1 // pred_check
      _
    $region15: #{transformer_ts_forward.1} parent=1 // pred_check_branch
      %35 = sbr.rel (0) target = $region17
    $region16: #{transformer_ts_forward.1} parent=1 // pred_region
      _
    $region17: #{transformer_ts_forward.1} parent=1 // pred_fallthru
      _
    // Predicated region
    $region18: #{transformer_ts_forward.1} parent=1 // pred_check
      _
    $region19: #{transformer_ts_forward.1} parent=1 // pred_check_branch
      %37 = sbr.rel (0) target = $region21
    $region20: #{transformer_ts_forward.1} parent=1 // pred_region
      _
    $region21: #{transformer_ts_forward.1} parent=1 // pred_fallthru
      _
    // Predicated region
    $region22: #{transformer_ts_forward.1} parent=1 // pred_check
      _
    $region23: #{transformer_ts_forward.1} parent=1 // pred_check_branch
      %39 = sbr.rel (0) target = $region25
    $region24: #{transformer_ts_forward.1} parent=1 // pred_region
      _
    $region25: #{transformer_ts_forward.1} parent=1 // pred_fallthru
      _
    // Predicated region
    $region26: #{transformer_ts_forward.1} parent=1 // pred_check
      _
    $region27: #{transformer_ts_forward.1} parent=1 // pred_check_branch
      %41 = sbr.rel (0) target = $region29
    $region28: #{transformer_ts_forward.1} parent=1 // pred_region
      _
    $region29: #{transformer_ts_forward.1} parent=1 // pred_fallthru
      _
    // Predicated region
    $region30: #{transformer_ts_forward.1} parent=1 // pred_check
      _
    $region31: #{transformer_ts_forward.1} parent=1 // pred_check_branch
      %43 = sbr.rel (0) target = $region33
    $region32: #{transformer_ts_forward.1} parent=1 // pred_region
      _
    $region33: #{transformer_ts_forward.1} parent=1 // pred_fallthru
      _
    // Predicated region
    $region34: #{transformer_ts_forward.1} parent=1 // pred_check
      _
    $region35: #{transformer_ts_forward.1} parent=1 // pred_check_branch
      %45 = sbr.rel (0) target = $region37
    $region36: #{transformer_ts_forward.1} parent=1 // pred_region
      _
    $region37: #{transformer_ts_forward.1} parent=1 // pred_fallthru
      _
    // Predicated region
    $region38: #{transformer_ts_forward.1} parent=1 // pred_check
      _
    $region39: #{transformer_ts_forward.1} parent=1 // pred_check_branch
      %47 = sbr.rel (0) target = $region41
    $region40: #{transformer_ts_forward.1} parent=1 // pred_region
      _
    $region41: #{transformer_ts_forward.1} parent=1 // pred_fallthru
      _
    // Predicated region
    $region42: #{transformer_ts_forward.1} parent=1 // pred_check
      _
    $region43: #{transformer_ts_forward.1} parent=1 // pred_check_branch
      %49 = sbr.rel (0) target = $region45
    $region44: #{transformer_ts_forward.1} parent=1 // pred_region
      _
    $region45: #{transformer_ts_forward.1} parent=1 // pred_fallthru
      _
    // Predicated region
    $region46: #{transformer_ts_forward.1} parent=1 // pred_check
      _
    $region47: #{transformer_ts_forward.1} parent=1 // pred_check_branch
      %51 = sbr.rel (0) target = $region49
    $region48: #{transformer_ts_forward.1} parent=1 // pred_region
      %53 = vsyncadd [#allocation4], 0
      %s54 = sshll.u32 %s11, 4
      %s55 = int_to_ptr.hbm [resolvable:$true] %s54
      %s56 = sshll.u32 [#allocation3], 4
      %s57 = int_to_ptr.vmem [resolvable:$true] %s56
      %62 = dma.hbm_to_vmem [thread:$0]  %s55, 1024, %s57, [#allocation4], 64, 64, 4
    $region49: #{transformer_ts_forward.1} parent=1 // pred_fallthru
      _
    // Predicated region
    $region50: #{transformer_ts_forward.1} parent=1 // pred_check
      _
    $region51: #{transformer_ts_forward.1} parent=1 // pred_check_branch
      %64 = sbr.rel (0) target = $region53
    $region52: #{transformer_ts_forward.1} parent=1 // pred_region
      %66 = vsyncadd [#allocation7], 0
      %s67 = sshll.u32 %s12, 4
      %s68 = int_to_ptr.hbm [resolvable:$true] %s67
      %s69 = sshll.u32 [#allocation6], 4
      %s70 = int_to_ptr.vmem [resolvable:$true] %s69
      %75 = dma.hbm_to_vmem [thread:$0]  %s68, 32, %s70, [#allocation7], 16, 16, 1
    $region53: #{transformer_ts_forward.1} parent=1 // pred_fallthru
      _
    // Predicated region
    $region54: #{transformer_ts_forward.1} parent=1 // pred_check
      _
    $region55: #{transformer_ts_forward.1} parent=1 // pred_check_branch
      %77 = sbr.rel (0) target = $region57
    $region56: #{transformer_ts_forward.1} parent=1 // pred_region
      _
    $region57: #{transformer_ts_forward.1} parent=1 // pred_fallthru
      _
    // Predicated region
    $region58: #{transformer_ts_forward.1} parent=1 // pred_check
      _
    $region59: #{transformer_ts_forward.1} parent=1 // pred_check_branch
      %79 = sbr.rel (0) target = $region61
    $region60: #{transformer_ts_forward.1} parent=1 // pred_region
      %81 = vsyncadd [#allocation7], 0
      %s82 = sshll.u32 %s14, 4
      %s83 = int_to_ptr.hbm [resolvable:$true] %s82
      %s84 = sshll.u32 [#allocation8], 4
      %s85 = int_to_ptr.vmem [resolvable:$true] %s84
      %90 = dma.hbm_to_vmem [thread:$0]  %s83, 32, %s85, [#allocation7], 16, 16, 1
    $region61: #{transformer_ts_forward.1} parent=1 // pred_fallthru
      _
    // Predicated region
    $region62: #{transformer_ts_forward.1} parent=1 // pred_check
      _
    $region63: #{transformer_ts_forward.1} parent=1 // pred_check_branch
      %92 = sbr.rel (0) target = $region65
    $region64: #{transformer_ts_forward.1} parent=1 // pred_region
      _
    $region65: #{transformer_ts_forward.1} parent=1 // pred_fallthru
      _
    // Predicated region
    $region66: #{transformer_ts_forward.1} parent=1 // pred_check
      _
    $region67: #{transformer_ts_forward.1} parent=1 // pred_check_branch
      %94 = sbr.rel (0) target = $region69
    $region68: #{transformer_ts_forward.1} parent=1 // pred_region
      %96 = vsyncadd [#allocation10], 0
      %s97 = sshll.u32 %s16, 4
      %s98 = int_to_ptr.hbm [resolvable:$true] %s97
      %s99 = sshll.u32 [#allocation9], 4
      %s100 = int_to_ptr.vmem [resolvable:$true] %s99
      %105 = dma.hbm_to_vmem [thread:$0]  %s98, 32, %s100, [#allocation10], 16, 16, 1
    $region69: #{transformer_ts_forward.1} parent=1 // pred_fallthru
      _
    // Predicated region
    $region70: #{transformer_ts_forward.1} parent=1 // pred_check
      _
    $region71: #{transformer_ts_forward.1} parent=1 // pred_check_branch
      %107 = sbr.rel (0) target = $region73
    $region72: #{transformer_ts_forward.1} parent=1 // pred_region
      _
    $region73: #{transformer_ts_forward.1} parent=1 // pred_fallthru
      _
    // Predicated region
    $region74: #{transformer_ts_forward.1} parent=1 // pred_check
      _
    $region75: #{transformer_ts_forward.1} parent=1 // pred_check_branch
      %109 = sbr.rel (0) target = $region77
    $region76: #{transformer_ts_forward.1} parent=1 // pred_region
      %111 = vsyncadd [#allocation10], 0
      %s113 = sshll.u32 %s18, 4
      %s114 = int_to_ptr.hbm [resolvable:$true] %s113
      %s115 = sshll.u32 [#allocation11], 4
      %s116 = int_to_ptr.vmem [resolvable:$true] %s115
      %118 = dma.hbm_to_vmem [thread:$0]  %s114, 16, %s116, [#allocation10]
    $region77: #{transformer_ts_forward.1} parent=1 // pred_fallthru
      _
    // Predicated region
    $region78: #{transformer_ts_forward.1} parent=1 // pred_check
      _
    $region79: #{transformer_ts_forward.1} parent=1 // pred_check_branch
      %120 = sbr.rel (0) target = $region81
    $region80: #{transformer_ts_forward.1} parent=1 // pred_region
      %122 = dma.done [#allocation4], 1024
    $region81: #{transformer_ts_forward.1} parent=1 // pred_fallthru
      _
    // Predicated region
    $region82: #{transformer_ts_forward.1} parent=1 // pred_check
      _
    $region83: #{transformer_ts_forward.1} parent=1 // pred_check_branch
      %124 = sbr.rel (0) target = $region85
    $region84: #{transformer_ts_forward.1} parent=1 // pred_region
      %126 = dma.done [#allocation7], 32
    $region85: #{transformer_ts_forward.1} parent=1 // pred_fallthru
      _
    // Predicated region
    $region86: #{transformer_ts_forward.1} parent=1 // pred_check
      _
    $region87: #{transformer_ts_forward.1} parent=1 // pred_check_branch
      %128 = sbr.rel (0) target = $region89
    $region88: #{transformer_ts_forward.1} parent=1 // pred_region
      %130 = dma.done [#allocation7], 32
    $region89: #{transformer_ts_forward.1} parent=1 // pred_fallthru
      _
    // Predicated region
    $region90: #{transformer_ts_forward.1} parent=1 // pred_check
      _
    $region91: #{transformer_ts_forward.1} parent=1 // pred_check_branch
      %132 = sbr.rel (0) target = $region93
    $region92: #{transformer_ts_forward.1} parent=1 // pred_region
      %134 = dma.done [#allocation10], 32
    $region93: #{transformer_ts_forward.1} parent=1 // pred_fallthru
      _
    // Predicated region
    $region94: #{transformer_ts_forward.1} parent=1 // pred_check
      _
    $region95: #{transformer_ts_forward.1} parent=1 // pred_check_branch
      %136 = sbr.rel (0) target = $region97
    $region96: #{transformer_ts_forward.1} parent=1 // pred_region
      %138 = dma.done [#allocation10], 16
    $region97: #{transformer_ts_forward.1} parent=1 // pred_fallthru
      _
    %v140 = vld [vmem:[%s0] sm:$0xff]
    %v141 = vld [vmem:[%s0 + $0x8] sm:$0xff]
    %v142 = vld [vmem:[%s1] sm:$0xf]
    %v143 = vld [vmem:[%s1 + $0x4] sm:$0xf]
    %v144 = vpack.c.bf16 %v141, %v140
    %v145 = vld [vmem:[%s2] sm:$0x1]
    %v147 = vperm.slane %v145, 0
    %v151 = vunpack.c.l.b16 %v142
    %v152 = vunpack.c.l.b16 %v143
    %v153 = vpack.c.b16 %v152, %v151
    %vm155 = vcmask 130048
    %v157 = vsel %vm155, %v144, 0
    %159 = vmatpush.bf16.msra.mxu0 0
    %160 = vmatpush.bf16.msra.mxu0 0
    %161 = vmatpush.bf16.msra.mxu0 0
    %162 = vmatpush.bf16.msra.mxu0 0
    %163 = vmatpush.bf16.msra.mxu0 0
    %164 = vmatpush.bf16.msra.mxu0 0
    %165 = vmatpush.bf16.msra.mxu0 0
    %166 = vmatpush.bf16.msra.mxu0 %v153
    %167 = vmatmul.bf16.gmra.mxu0 %v157
    %v168 = vpop.f32.mrf.mxu0
    %v169 = vadd.f32 %v147, %v168
    %v170 = vpop.f32.mrf.mxu0
    %v171 = vadd.f32 %v147, %v170
    %172 = vdwg.mxu0
    %v173 = vld [vmem:[%s3] sm:$0xf]
    %v174 = vld [vmem:[%s3 + $0x4] sm:$0xf]
    %v175 = vld [vmem:[%s3 + $0x8] sm:$0xf]
    %v176 = vld [vmem:[%s3 + $0xc] sm:$0xf]
    %v177 = vld [vmem:[%s3 + $0x10] sm:$0xf]
    %v178 = vld [vmem:[%s3 + $0x14] sm:$0xf]
    %v179 = vld [vmem:[%s3 + $0x18] sm:$0xf]
    %v180 = vld [vmem:[%s3 + $0x1c] sm:$0xf]
    %v181 = vpack.c.bf16 %v171, %v169
    %v182 = vld [vmem:[%s4] sm:$0x1]
    %v184 = vperm.slane %v182, 0
    %v194 = vunpack.c.l.b16 %v173
    %v195 = vunpack.c.l.b16 %v174
    %v196 = vunpack.c.l.b16 %v175
    %v197 = vunpack.c.l.b16 %v176
    %v198 = vunpack.c.l.b16 %v177
    %v199 = vunpack.c.l.b16 %v178
    %v200 = vunpack.c.l.b16 %v179
    %v201 = vunpack.c.l.b16 %v180
    %v202 = vpack.c.b16 %v195, %v194
    %v203 = vpack.c.b16 %v197, %v196
    %v204 = vpack.c.b16 %v199, %v198
    %v205 = vpack.c.b16 %v201, %v200
    %vm210 = vcmask 523264
    %v212 = vsel %vm210, %v181, 0
    %214 = vmatpush.bf16.msra.mxu0 0
    %215 = vmatpush.bf16.msra.mxu0 0
    %216 = vmatpush.bf16.msra.mxu0 0
    %217 = vmatpush.bf16.msra.mxu0 0
    %218 = vmatpush.bf16.msra.mxu0 %v205
    %219 = vmatpush.bf16.msra.mxu0 %v204
    %220 = vmatpush.bf16.msra.mxu0 %v203
    %221 = vmatpush.bf16.msra.mxu0 %v202
    %222 = vmatmul.bf16.gmra.mxu0 %v212
    %v223 = vpop.f32.mrf.mxu0
    %v224 = vadd.f32 %v184, %v223
    %v225 = vpop.f32.mrf.mxu0
    %v226 = vadd.f32 %v184, %v225
    %227 = vdwg.mxu0
    %v228 = vld [vmem:[%s5] sm:$0xf]
    %v229 = vld [vmem:[%s5 + $0x4] sm:$0xf]
    %v230 = vld [vmem:[%s5 + $0x8] sm:$0xf]
    %v231 = vld [vmem:[%s5 + $0xc] sm:$0xf]
    %v232 = vld [vmem:[%s5 + $0x10] sm:$0xf]
    %v233 = vld [vmem:[%s5 + $0x14] sm:$0xf]
    %v234 = vld [vmem:[%s5 + $0x18] sm:$0xf]
    %v235 = vld [vmem:[%s5 + $0x1c] sm:$0xf]
    %v236 = vld [vmem:[%s6] sm:$0x1]
    %v238 = vperm.slane %v236, 0
    %v248 = vunpack.c.l.b16 %v228
    %v249 = vunpack.c.l.b16 %v229
    %v250 = vunpack.c.l.b16 %v230
    %v251 = vunpack.c.l.b16 %v231
    %v252 = vunpack.c.l.b16 %v232
    %v253 = vunpack.c.l.b16 %v233
    %v254 = vunpack.c.l.b16 %v234
    %v255 = vunpack.c.l.b16 %v235
    %v256 = vpack.c.b16 %v249, %v248
    %v257 = vpack.c.b16 %v251, %v250
    %v258 = vpack.c.b16 %v253, %v252
    %v259 = vpack.c.b16 %v255, %v254
    %264 = vmatpush.bf16.msra.mxu0 0
    %265 = vmatpush.bf16.msra.mxu0 0
    %266 = vmatpush.bf16.msra.mxu0 0
    %267 = vmatpush.bf16.msra.mxu0 0
    %268 = vmatpush.bf16.msra.mxu0 %v259
    %269 = vmatpush.bf16.msra.mxu0 %v258
    %270 = vmatpush.bf16.msra.mxu0 %v257
    %271 = vmatpush.bf16.msra.mxu0 %v256
    %272 = vmatmul.bf16.gmra.mxu0 %v212
    %v273 = vpop.f32.mrf.mxu0
    %v274 = vadd.f32 %v238, %v273
    %v275 = vpop.f32.mrf.mxu0
    %v276 = vadd.f32 %v238, %v275
    %277 = vdwg.mxu0
    %v278 = vpack.c.bf16 %v224, %v224
    %v279 = vpack.c.bf16 %v226, %v226
    %v280 = vpack.c.bf16 %v274, %v274
    %v281 = vpack.c.bf16 %v276, %v276
    %v283 = vsel %vm155, %v278, 0
    %v286 = vsel %vm155, %v280, 0
    %288 = vmatpush.bf16.xpose.msra.mxu0 0
    %289 = vmatpush.bf16.xpose.msra.mxu0 0
    %290 = vmatpush.bf16.xpose.msra.mxu0 0
    %291 = vmatpush.bf16.xpose.msra.mxu0 0
    %292 = vmatpush.bf16.xpose.msra.mxu0 0
    %293 = vmatpush.bf16.xpose.msra.mxu0 0
    %294 = vmatpush.bf16.xpose.msra.mxu0 0
    %295 = vmatpush.bf16.xpose.msra.mxu0 %v286
    %296 = vmatmul.bf16.gmra.mxu0 %v283
    %v297 = vpop.f32.mrf.mxu0
    %v298 = vadd.f32 0.0, %v297
    %v299 = vpop.f32.mrf.mxu0
    %300 = vdwg.mxu0
    %v302 = vsel %vm155, %v279, 0
    %v305 = vsel %vm155, %v281, 0
    %307 = vmatpush.bf16.xpose.msra.mxu0 0
    %308 = vmatpush.bf16.xpose.msra.mxu0 0
    %309 = vmatpush.bf16.xpose.msra.mxu0 0
    %310 = vmatpush.bf16.xpose.msra.mxu0 0
    %311 = vmatpush.bf16.xpose.msra.mxu0 0
    %312 = vmatpush.bf16.xpose.msra.mxu0 0
    %313 = vmatpush.bf16.xpose.msra.mxu0 0
    %314 = vmatpush.bf16.xpose.msra.mxu0 %v305
    %315 = vmatmul.bf16.gmra.mxu0 %v302
    %v316 = vpop.f32.mrf.mxu0
    %v317 = vadd.f32 0.0, %v316
    %v318 = vpop.f32.mrf.mxu0
    %319 = vdwg.mxu0
    %v320 = vmul.f32 %v298, 0.25
    %v321 = vmul.f32 %v317, 0.25
    %vm322 = vcmask 64512
    %v323 = vsel %vm322, %v320, -inf
    %324 = vmax.xlane.f32.xlu0 %v323
    %v325 = vpop.xlane.xlu0 %324
    %v326 = vsel %vm322, %v321, -inf
    %327 = vmax.xlane.f32.xlu0 %v326
    %v328 = vpop.xlane.xlu0 %327
    %v329 = vsub.f32 %v320, %v325
    %v330 = vsub.f32 %v321, %v328
    %v331 = vmul.f32 %v329, 1.442695
    %v332 = vpow.pop %v331
    %v333 = vmul.f32 %v330, 1.442695
    %v334 = vpow.pop %v333
    %v335 = vsel %vm322, %v332, 0.0
    %336 = vadd.xlane.f32.xlu0 %v335
    %v337 = vpop.xlane.xlu0 %336
    %v338 = vsel %vm322, %v334, 0.0
    %339 = vadd.xlane.f32.xlu0 %v338
    %v340 = vpop.xlane.xlu0 %339
    %v341 = vrcp.pop %v337
    %v342 = vrcp.pop %v340
    %v343 = vmul.f32 %v332, %v341
    %v344 = vmul.f32 %v334, %v342
    %v345 = vpack.c.bf16 %v343, %v343
    %v346 = vpack.c.bf16 %v344, %v344
    %v348 = vunpack.c.l.b16 %v280
    %v349 = vpack.c.b16 %v348, %v348
    %350 = vrot.lane.b32.xlu0 %v349, 64
    %v351 = vpop.permute.xlu0 %350
    %v353 = vsel %vm322, %v345, 0
    %vm355 = vcmask 1043456
    %v357 = vsel %vm355, %v351, 0
    %359 = vmatpush.bf16.msra.mxu0 0
    %360 = vmatpush.bf16.msra.mxu0 0
    %361 = vmatpush.bf16.msra.mxu0 0
    %362 = vmatpush.bf16.msra.mxu0 0
    %363 = vmatpush.bf16.msra.mxu0 0
    %364 = vmatpush.bf16.msra.mxu0 0
    %365 = vmatpush.bf16.msra.mxu0 0
    %366 = vmatpush.bf16.msra.mxu0 %v357
    %367 = vmatmul.bf16.gmra.mxu0 %v353
    %v368 = vpop.f32.mrf.mxu0
    %v369 = vadd.f32 0.0, %v368
    %v370 = vpop.f32.mrf.mxu0
    %371 = vdwg.mxu0
    %v373 = vunpack.c.l.b16 %v281
    %v374 = vpack.c.b16 %v373, %v373
    %375 = vrot.lane.b32.xlu0 %v374, 64
    %v376 = vpop.permute.xlu0 %375
    %v378 = vsel %vm322, %v346, 0
    %v381 = vsel %vm355, %v376, 0
    %383 = vmatpush.bf16.msra.mxu0 0
    %384 = vmatpush.bf16.msra.mxu0 0
    %385 = vmatpush.bf16.msra.mxu0 0
    %386 = vmatpush.bf16.msra.mxu0 0
    %387 = vmatpush.bf16.msra.mxu0 0
    %388 = vmatpush.bf16.msra.mxu0 0
    %389 = vmatpush.bf16.msra.mxu0 0
    %390 = vmatpush.bf16.msra.mxu0 %v381
    %391 = vmatmul.bf16.gmra.mxu0 %v378
    %v392 = vpop.f32.mrf.mxu0
    %v393 = vadd.f32 0.0, %v392
    %v394 = vpop.f32.mrf.mxu0
    %395 = vdwg.mxu0
    %396 = vst.msk [vmem:[#allocation2] sm:$0xff] %vm155, %v369
    %397 = vst.msk [vmem:[#allocation2 + $0x8] sm:$0xff] %vm155, %v393
    %v399 = vunpack.c.l.b16 %v278
    %v400 = vpack.c.b16 %v399, %v399
    %401 = vrot.lane.b32.xlu0 %v400, 112
    %v402 = vpop.permute.xlu0 %401
    %403 = vrot.lane.b32.xlu0 %v349, 112
    %v404 = vpop.permute.xlu0 %403
    %v406 = vsel %vm155, %v402, 0
    %v409 = vsel %vm155, %v404, 0
    %411 = vmatpush.bf16.xpose.msra.mxu0 0
    %412 = vmatpush.bf16.xpose.msra.mxu0 0
    %413 = vmatpush.bf16.xpose.msra.mxu0 0
    %414 = vmatpush.bf16.xpose.msra.mxu0 0
    %415 = vmatpush.bf16.xpose.msra.mxu0 0
    %416 = vmatpush.bf16.xpose.msra.mxu0 0
    %417 = vmatpush.bf16.xpose.msra.mxu0 0
    %418 = vmatpush.bf16.xpose.msra.mxu0 %v409
    %419 = vmatmul.bf16.gmra.mxu0 %v406
    %v420 = vpop.f32.mrf.mxu0
    %v421 = vadd.f32 0.0, %v420
    %v422 = vpop.f32.mrf.mxu0
    %423 = vdwg.mxu0
    %v425 = vunpack.c.l.b16 %v279
    %v426 = vpack.c.b16 %v425, %v425
    %427 = vrot.lane.b32.xlu0 %v426, 112
    %v428 = vpop.permute.xlu0 %427
    %429 = vrot.lane.b32.xlu0 %v374, 112
    %v430 = vpop.permute.xlu0 %429
    %v432 = vsel %vm155, %v428, 0
    %v435 = vsel %vm155, %v430, 0
    %437 = vmatpush.bf16.xpose.msra.mxu0 0
    %438 = vmatpush.bf16.xpose.msra.mxu0 0
    %439 = vmatpush.bf16.xpose.msra.mxu0 0
    %440 = vmatpush.bf16.xpose.msra.mxu0 0
    %441 = vmatpush.bf16.xpose.msra.mxu0 0
    %442 = vmatpush.bf16.xpose.msra.mxu0 0
    %443 = vmatpush.bf16.xpose.msra.mxu0 0
    %444 = vmatpush.bf16.xpose.msra.mxu0 %v435
    %445 = vmatmul.bf16.gmra.mxu0 %v432
    %v446 = vpop.f32.mrf.mxu0
    %v447 = vadd.f32 0.0, %v446
    %v448 = vpop.f32.mrf.mxu0
    %449 = vdwg.mxu0
    %v450 = vmul.f32 %v421, 0.25
    %v451 = vmul.f32 %v447, 0.25
    %v452 = vsel %vm322, %v450, -inf
    %453 = vmax.xlane.f32.xlu0 %v452
    %v454 = vpop.xlane.xlu0 %453
    %v455 = vsel %vm322, %v451, -inf
    %456 = vmax.xlane.f32.xlu0 %v455
    %v457 = vpop.xlane.xlu0 %456
    %v458 = vsub.f32 %v450, %v454
    %v459 = vsub.f32 %v451, %v457
    %v460 = vmul.f32 %v458, 1.442695
    %v461 = vpow.pop %v460
    %v462 = vmul.f32 %v459, 1.442695
    %v463 = vpow.pop %v462
    %v464 = vsel %vm322, %v461, 0.0
    %465 = vadd.xlane.f32.xlu0 %v464
    %v466 = vpop.xlane.xlu0 %465
    %v467 = vsel %vm322, %v463, 0.0
    %468 = vadd.xlane.f32.xlu0 %v467
    %v469 = vpop.xlane.xlu0 %468
    %v470 = vrcp.pop %v466
    %v471 = vrcp.pop %v469
    %v472 = vmul.f32 %v461, %v470
    %v473 = vmul.f32 %v463, %v471
    %v474 = vpack.c.bf16 %v472, %v472
    %v475 = vpack.c.bf16 %v473, %v473
    %476 = vrot.lane.b32.xlu0 %v349, 48
    %v477 = vpop.permute.xlu0 %476
    %v479 = vsel %vm322, %v474, 0
    %v482 = vsel %vm355, %v477, 0
    %484 = vmatpush.bf16.msra.mxu0 0
    %485 = vmatpush.bf16.msra.mxu0 0
    %486 = vmatpush.bf16.msra.mxu0 0
    %487 = vmatpush.bf16.msra.mxu0 0
    %488 = vmatpush.bf16.msra.mxu0 0
    %489 = vmatpush.bf16.msra.mxu0 0
    %490 = vmatpush.bf16.msra.mxu0 0
    %491 = vmatpush.bf16.msra.mxu0 %v482
    %492 = vmatmul.bf16.gmra.mxu0 %v479
    %v493 = vpop.f32.mrf.mxu0
    %v494 = vadd.f32 0.0, %v493
    %v495 = vpop.f32.mrf.mxu0
    %496 = vdwg.mxu0
    %497 = vrot.lane.b32.xlu0 %v374, 48
    %v498 = vpop.permute.xlu0 %497
    %v500 = vsel %vm322, %v475, 0
    %v503 = vsel %vm355, %v498, 0
    %505 = vmatpush.bf16.msra.mxu0 0
    %506 = vmatpush.bf16.msra.mxu0 0
    %507 = vmatpush.bf16.msra.mxu0 0
    %508 = vmatpush.bf16.msra.mxu0 0
    %509 = vmatpush.bf16.msra.mxu0 0
    %510 = vmatpush.bf16.msra.mxu0 0
    %511 = vmatpush.bf16.msra.mxu0 0
    %512 = vmatpush.bf16.msra.mxu0 %v503
    %513 = vmatmul.bf16.gmra.mxu0 %v500
    %v514 = vpop.f32.mrf.mxu0
    %v515 = vadd.f32 0.0, %v514
    %v516 = vpop.f32.mrf.mxu0
    %517 = vdwg.mxu0
    %520 = vrot.lane.b32.xlu0 %v494, 16
    %v521 = vpop.permute.xlu0 %520
    %522 = vrot.lane.b32.xlu0 %v515, 16
    %v523 = vpop.permute.xlu0 %522
    %vm526 = vcmask 261248
    %527 = vst.msk [vmem:[#allocation2] sm:$0xff] %vm526, %v521
    %528 = vst.msk [vmem:[#allocation2 + $0x8] sm:$0xff] %vm526, %v523
    %529 = vrot.lane.b32.xlu0 %v400, 96
    %v530 = vpop.permute.xlu0 %529
    %531 = vrot.lane.b32.xlu0 %v349, 96
    %v532 = vpop.permute.xlu0 %531
    %v534 = vsel %vm155, %v530, 0
    %v537 = vsel %vm155, %v532, 0
    %539 = vmatpush.bf16.xpose.msra.mxu0 0
    %540 = vmatpush.bf16.xpose.msra.mxu0 0
    %541 = vmatpush.bf16.xpose.msra.mxu0 0
    %542 = vmatpush.bf16.xpose.msra.mxu0 0
    %543 = vmatpush.bf16.xpose.msra.mxu0 0
    %544 = vmatpush.bf16.xpose.msra.mxu0 0
    %545 = vmatpush.bf16.xpose.msra.mxu0 0
    %546 = vmatpush.bf16.xpose.msra.mxu0 %v537
    %547 = vmatmul.bf16.gmra.mxu0 %v534
    %v548 = vpop.f32.mrf.mxu0
    %v549 = vadd.f32 0.0, %v548
    %v550 = vpop.f32.mrf.mxu0
    %551 = vdwg.mxu0
    %552 = vrot.lane.b32.xlu0 %v426, 96
    %v553 = vpop.permute.xlu0 %552
    %554 = vrot.lane.b32.xlu0 %v374, 96
    %v555 = vpop.permute.xlu0 %554
    %v557 = vsel %vm155, %v553, 0
    %v560 = vsel %vm155, %v555, 0
    %562 = vmatpush.bf16.xpose.msra.mxu0 0
    %563 = vmatpush.bf16.xpose.msra.mxu0 0
    %564 = vmatpush.bf16.xpose.msra.mxu0 0
    %565 = vmatpush.bf16.xpose.msra.mxu0 0
    %566 = vmatpush.bf16.xpose.msra.mxu0 0
    %567 = vmatpush.bf16.xpose.msra.mxu0 0
    %568 = vmatpush.bf16.xpose.msra.mxu0 0
    %569 = vmatpush.bf16.xpose.msra.mxu0 %v560
    %570 = vmatmul.bf16.gmra.mxu0 %v557
    %v571 = vpop.f32.mrf.mxu0
    %v572 = vadd.f32 0.0, %v571
    %v573 = vpop.f32.mrf.mxu0
    %574 = vdwg.mxu0
    %v575 = vmul.f32 %v549, 0.25
    %v576 = vmul.f32 %v572, 0.25
    %v577 = vsel %vm322, %v575, -inf
    %578 = vmax.xlane.f32.xlu0 %v577
    %v579 = vpop.xlane.xlu0 %578
    %v580 = vsel %vm322, %v576, -inf
    %581 = vmax.xlane.f32.xlu0 %v580
    %v582 = vpop.xlane.xlu0 %581
    %v583 = vsub.f32 %v575, %v579
    %v584 = vsub.f32 %v576, %v582
    %v585 = vmul.f32 %v583, 1.442695
    %v586 = vpow.pop %v585
    %v587 = vmul.f32 %v584, 1.442695
    %v588 = vpow.pop %v587
    %v589 = vsel %vm322, %v586, 0.0
    %590 = vadd.xlane.f32.xlu0 %v589
    %v591 = vpop.xlane.xlu0 %590
    %v592 = vsel %vm322, %v588, 0.0
    %593 = vadd.xlane.f32.xlu0 %v592
    %v594 = vpop.xlane.xlu0 %593
    %v595 = vrcp.pop %v591
    %v596 = vrcp.pop %v594
    %v597 = vmul.f32 %v586, %v595
    %v598 = vmul.f32 %v588, %v596
    %v599 = vpack.c.bf16 %v597, %v597
    %v600 = vpack.c.bf16 %v598, %v598
    %601 = vrot.lane.b32.xlu0 %v349, 32
    %v602 = vpop.permute.xlu0 %601
    %v604 = vsel %vm322, %v599, 0
    %v607 = vsel %vm355, %v602, 0
    %609 = vmatpush.bf16.msra.mxu0 0
    %610 = vmatpush.bf16.msra.mxu0 0
    %611 = vmatpush.bf16.msra.mxu0 0
    %612 = vmatpush.bf16.msra.mxu0 0
    %613 = vmatpush.bf16.msra.mxu0 0
    %614 = vmatpush.bf16.msra.mxu0 0
    %615 = vmatpush.bf16.msra.mxu0 0
    %616 = vmatpush.bf16.msra.mxu0 %v607
    %617 = vmatmul.bf16.gmra.mxu0 %v604
    %v618 = vpop.f32.mrf.mxu0
    %v619 = vadd.f32 0.0, %v618
    %v620 = vpop.f32.mrf.mxu0
    %621 = vdwg.mxu0
    %622 = vrot.lane.b32.xlu0 %v374, 32
    %v623 = vpop.permute.xlu0 %622
    %v625 = vsel %vm322, %v600, 0
    %v628 = vsel %vm355, %v623, 0
    %630 = vmatpush.bf16.msra.mxu0 0
    %631 = vmatpush.bf16.msra.mxu0 0
    %632 = vmatpush.bf16.msra.mxu0 0
    %633 = vmatpush.bf16.msra.mxu0 0
    %634 = vmatpush.bf16.msra.mxu0 0
    %635 = vmatpush.bf16.msra.mxu0 0
    %636 = vmatpush.bf16.msra.mxu0 0
    %637 = vmatpush.bf16.msra.mxu0 %v628
    %638 = vmatmul.bf16.gmra.mxu0 %v625
    %v639 = vpop.f32.mrf.mxu0
    %v640 = vadd.f32 0.0, %v639
    %v641 = vpop.f32.mrf.mxu0
    %642 = vdwg.mxu0
    %645 = vrot.lane.b32.xlu0 %v619, 32
    %v646 = vpop.permute.xlu0 %645
    %647 = vrot.lane.b32.xlu0 %v640, 32
    %v648 = vpop.permute.xlu0 %647
    %vm651 = vcmask 392448
    %652 = vst.msk [vmem:[#allocation2] sm:$0xff] %vm651, %v646
    %653 = vst.msk [vmem:[#allocation2 + $0x8] sm:$0xff] %vm651, %v648
    %654 = vrot.lane.b32.xlu0 %v400, 80
    %v655 = vpop.permute.xlu0 %654
    %656 = vrot.lane.b32.xlu0 %v349, 80
    %v657 = vpop.permute.xlu0 %656
    %v659 = vsel %vm155, %v655, 0
    %v662 = vsel %vm155, %v657, 0
    %664 = vmatpush.bf16.xpose.msra.mxu0 0
    %665 = vmatpush.bf16.xpose.msra.mxu0 0
    %666 = vmatpush.bf16.xpose.msra.mxu0 0
    %667 = vmatpush.bf16.xpose.msra.mxu0 0
    %668 = vmatpush.bf16.xpose.msra.mxu0 0
    %669 = vmatpush.bf16.xpose.msra.mxu0 0
    %670 = vmatpush.bf16.xpose.msra.mxu0 0
    %671 = vmatpush.bf16.xpose.msra.mxu0 %v662
    %672 = vmatmul.bf16.gmra.mxu0 %v659
    %v673 = vpop.f32.mrf.mxu0
    %v674 = vadd.f32 0.0, %v673
    %v675 = vpop.f32.mrf.mxu0
    %676 = vdwg.mxu0
    %677 = vrot.lane.b32.xlu0 %v426, 80
    %v678 = vpop.permute.xlu0 %677
    %679 = vrot.lane.b32.xlu0 %v374, 80
    %v680 = vpop.permute.xlu0 %679
    %v682 = vsel %vm155, %v678, 0
    %v685 = vsel %vm155, %v680, 0
    %687 = vmatpush.bf16.xpose.msra.mxu0 0
    %688 = vmatpush.bf16.xpose.msra.mxu0 0
    %689 = vmatpush.bf16.xpose.msra.mxu0 0
    %690 = vmatpush.bf16.xpose.msra.mxu0 0
    %691 = vmatpush.bf16.xpose.msra.mxu0 0
    %692 = vmatpush.bf16.xpose.msra.mxu0 0
    %693 = vmatpush.bf16.xpose.msra.mxu0 0
    %694 = vmatpush.bf16.xpose.msra.mxu0 %v685
    %695 = vmatmul.bf16.gmra.mxu0 %v682
    %v696 = vpop.f32.mrf.mxu0
    %v697 = vadd.f32 0.0, %v696
    %v698 = vpop.f32.mrf.mxu0
    %699 = vdwg.mxu0
    %v700 = vmul.f32 %v674, 0.25
    %v701 = vmul.f32 %v697, 0.25
    %v702 = vsel %vm322, %v700, -inf
    %703 = vmax.xlane.f32.xlu0 %v702
    %v704 = vpop.xlane.xlu0 %703
    %v705 = vsel %vm322, %v701, -inf
    %706 = vmax.xlane.f32.xlu0 %v705
    %v707 = vpop.xlane.xlu0 %706
    %v708 = vsub.f32 %v700, %v704
    %v709 = vsub.f32 %v701, %v707
    %v710 = vmul.f32 %v708, 1.442695
    %v711 = vpow.pop %v710
    %v712 = vmul.f32 %v709, 1.442695
    %v713 = vpow.pop %v712
    %v714 = vsel %vm322, %v711, 0.0
    %715 = vadd.xlane.f32.xlu0 %v714
    %v716 = vpop.xlane.xlu0 %715
    %v717 = vsel %vm322, %v713, 0.0
    %718 = vadd.xlane.f32.xlu0 %v717
    %v719 = vpop.xlane.xlu0 %718
    %v720 = vrcp.pop %v716
    %v721 = vrcp.pop %v719
    %v722 = vmul.f32 %v711, %v720
    %v723 = vmul.f32 %v713, %v721
    %v724 = vpack.c.bf16 %v722, %v722
    %v725 = vpack.c.bf16 %v723, %v723
    %726 = vrot.lane.b32.xlu0 %v349, 16
    %v727 = vpop.permute.xlu0 %726
    %v729 = vsel %vm322, %v724, 0
    %v732 = vsel %vm355, %v727, 0
    %734 = vmatpush.bf16.msra.mxu0 0
    %735 = vmatpush.bf16.msra.mxu0 0
    %736 = vmatpush.bf16.msra.mxu0 0
    %737 = vmatpush.bf16.msra.mxu0 0
    %738 = vmatpush.bf16.msra.mxu0 0
    %739 = vmatpush.bf16.msra.mxu0 0
    %740 = vmatpush.bf16.msra.mxu0 0
    %741 = vmatpush.bf16.msra.mxu0 %v732
    %742 = vmatmul.bf16.gmra.mxu0 %v729
    %v743 = vpop.f32.mrf.mxu0
    %v744 = vadd.f32 0.0, %v743
    %v745 = vpop.f32.mrf.mxu0
    %746 = vdwg.mxu0
    %747 = vrot.lane.b32.xlu0 %v374, 16
    %v748 = vpop.permute.xlu0 %747
    %v750 = vsel %vm322, %v725, 0
    %v753 = vsel %vm355, %v748, 0
    %755 = vmatpush.bf16.msra.mxu0 0
    %756 = vmatpush.bf16.msra.mxu0 0
    %757 = vmatpush.bf16.msra.mxu0 0
    %758 = vmatpush.bf16.msra.mxu0 0
    %759 = vmatpush.bf16.msra.mxu0 0
    %760 = vmatpush.bf16.msra.mxu0 0
    %761 = vmatpush.bf16.msra.mxu0 0
    %762 = vmatpush.bf16.msra.mxu0 %v753
    %763 = vmatmul.bf16.gmra.mxu0 %v750
    %v764 = vpop.f32.mrf.mxu0
    %v765 = vadd.f32 0.0, %v764
    %v766 = vpop.f32.mrf.mxu0
    %767 = vdwg.mxu0
    %770 = vrot.lane.b32.xlu0 %v744, 48
    %v771 = vpop.permute.xlu0 %770
    %772 = vrot.lane.b32.xlu0 %v765, 48
    %v773 = vpop.permute.xlu0 %772
    %vm776 = vcmask 523648
    %777 = vst.msk [vmem:[#allocation2] sm:$0xff] %vm776, %v771
    %778 = vst.msk [vmem:[#allocation2 + $0x8] sm:$0xff] %vm776, %v773
    %v779 = vld [vmem:[#allocation2] sm:$0xff]
    %v780 = vld [vmem:[#allocation2 + $0x8] sm:$0xff]
    %v781 = vld [vmem:[%s7] sm:$0xf]
    %v782 = vld [vmem:[%s7 + $0x4] sm:$0xf]
    %v783 = vld [vmem:[%s7 + $0x8] sm:$0xf]
    %v784 = vld [vmem:[%s7 + $0xc] sm:$0xf]
    %v785 = vld [vmem:[%s7 + $0x10] sm:$0xf]
    %v786 = vld [vmem:[%s7 + $0x14] sm:$0xf]
    %v787 = vld [vmem:[%s7 + $0x18] sm:$0xf]
    %v788 = vld [vmem:[%s7 + $0x1c] sm:$0xf]
    %v789 = vpack.c.bf16 %v780, %v779
    %v790 = vld [vmem:[%s8] sm:$0x1]
    %v792 = vperm.slane %v790, 0
    %v802 = vunpack.c.l.b16 %v781
    %v803 = vunpack.c.l.b16 %v782
    %v804 = vunpack.c.l.b16 %v783
    %v805 = vunpack.c.l.b16 %v784
    %v806 = vunpack.c.l.b16 %v785
    %v807 = vunpack.c.l.b16 %v786
    %v808 = vunpack.c.l.b16 %v787
    %v809 = vunpack.c.l.b16 %v788
    %v810 = vpack.c.b16 %v803, %v802
    %v811 = vpack.c.b16 %v805, %v804
    %v812 = vpack.c.b16 %v807, %v806
    %v813 = vpack.c.b16 %v809, %v808
    %v819 = vsel %vm210, %v789, 0
    %821 = vmatpush.bf16.msra.mxu0 0
    %822 = vmatpush.bf16.msra.mxu0 0
    %823 = vmatpush.bf16.msra.mxu0 0
    %824 = vmatpush.bf16.msra.mxu0 0
    %825 = vmatpush.bf16.msra.mxu0 %v813
    %826 = vmatpush.bf16.msra.mxu0 %v812
    %827 = vmatpush.bf16.msra.mxu0 %v811
    %828 = vmatpush.bf16.msra.mxu0 %v810
    %829 = vmatmul.bf16.gmra.mxu0 %v819
    %v830 = vpop.f32.mrf.mxu0
    %v831 = vadd.f32 %v792, %v830
    %v832 = vpop.f32.mrf.mxu0
    %v833 = vadd.f32 %v792, %v832
    %834 = vdwg.mxu0
    %v835 = vadd.f32 %v169, %v831
    %v836 = vadd.f32 %v171, %v833
    %v837 = vld [vmem:[%s9] sm:$0x1]
    %v838 = vld [vmem:[%s10] sm:$0x1]
    %v839 = vsel %vm210, %v835, 0.0
    %840 = vadd.xlane.f32.xlu0 %v839
    %v841 = vpop.xlane.xlu0 %840
    %v842 = vsel %vm210, %v836, 0.0
    %843 = vadd.xlane.f32.xlu0 %v842
    %v844 = vpop.xlane.xlu0 %843
    %v845 = vrcp.pop 64.0
    %v846 = vmul.f32 64.0, %v845
    %v847 = vsub.f32 1.0, %v846
    %v848 = vmul.f32 %v845, %v847
    %v849 = vadd.f32 %v845, %v848
    %vm850 = vweird.f32 %v845
    %v851 = vsel %vm850, %v845, %v849
    %v852 = vmul.f32 %v841, %v851
    %v853 = vmul.f32 %v844, %v851
    %v854 = vsub.f32 %v835, %v852
    %v855 = vsub.f32 %v836, %v853
    %v856 = vmul.f32 %v854, %v854
    %v857 = vmul.f32 %v855, %v855
    %v858 = vsel %vm210, %v856, 0.0
    %859 = vadd.xlane.f32.xlu0 %v858
    %v860 = vpop.xlane.xlu0 %859
    %v861 = vsel %vm210, %v857, 0.0
    %862 = vadd.xlane.f32.xlu0 %v861
    %v863 = vpop.xlane.xlu0 %862
    %v864 = vmul.f32 %v860, %v851
    %v865 = vmul.f32 %v863, %v851
    %v866 = vadd.f32 %v864, 1e-05
    %v867 = vadd.f32 %v865, 1e-05
    %v868 = vrsqrt.pop %v866
    %v869 = vmul.f32 %v868, %v866
    %v870 = vmul.f32 %v869, %v868
    %v871 = vmul.f32 0.5, %v870
    %v872 = vsub.f32 1.5, %v871
    %v873 = vmul.f32 %v868, %v872
    %vm874 = vweird.f32 %v866
    %vm875 = vweird.f32 %v868
    %vm876 = vmor %vm874, %vm875
    %v877 = vsel %vm876, %v868, %v873
    %v878 = vrsqrt.pop %v867
    %v879 = vmul.f32 %v878, %v867
    %v880 = vmul.f32 %v879, %v878
    %v881 = vmul.f32 0.5, %v880
    %v882 = vsub.f32 1.5, %v881
    %v883 = vmul.f32 %v878, %v882
    %vm884 = vweird.f32 %v867
    %vm885 = vweird.f32 %v878
    %vm886 = vmor %vm884, %vm885
    %v887 = vsel %vm886, %v878, %v883
    %v888 = vmul.f32 %v854, %v877
    %v889 = vmul.f32 %v855, %v887
    %v891 = vperm.slane %v837, 0
    %v893 = vmul.f32 %v888, %v891
    %v894 = vmul.f32 %v889, %v891
    %v896 = vperm.slane %v838, 0
    %v898 = vadd.f32 %v893, %v896
    %v899 = vadd.f32 %v894, %v896
    %v900 = vld [vmem:[#allocation3] sm:$0xf]
    %v901 = vld [vmem:[#allocation3 + $0x4] sm:$0xf]
    %v902 = vld [vmem:[#allocation3 + $0x8] sm:$0xf]
    %v903 = vld [vmem:[#allocation3 + $0xc] sm:$0xf]
    %v904 = vld [vmem:[#allocation3 + $0x10] sm:$0xf]
    %v905 = vld [vmem:[#allocation3 + $0x14] sm:$0xf]
    %v906 = vld [vmem:[#allocation3 + $0x18] sm:$0xf]
    %v907 = vld [vmem:[#allocation3 + $0x1c] sm:$0xf]
    %v908 = vpack.c.bf16 %v899, %v898
    %v909 = vld [vmem:[#allocation6] sm:$0x1]
    %v911 = vperm.slane %v909, 0
    %v921 = vunpack.c.l.b16 %v900
    %v922 = vunpack.c.l.b16 %v901
    %v923 = vunpack.c.l.b16 %v902
    %v924 = vunpack.c.l.b16 %v903
    %v925 = vunpack.c.l.b16 %v904
    %v926 = vunpack.c.l.b16 %v905
    %v927 = vunpack.c.l.b16 %v906
    %v928 = vunpack.c.l.b16 %v907
    %v929 = vpack.c.b16 %v922, %v921
    %v930 = vpack.c.b16 %v924, %v923
    %v931 = vpack.c.b16 %v926, %v925
    %v932 = vpack.c.b16 %v928, %v927
    %v938 = vsel %vm210, %v908, 0
    %940 = vmatpush.bf16.msra.mxu0 0
    %941 = vmatpush.bf16.msra.mxu0 0
    %942 = vmatpush.bf16.msra.mxu0 0
    %943 = vmatpush.bf16.msra.mxu0 0
    %944 = vmatpush.bf16.msra.mxu0 %v932
    %945 = vmatpush.bf16.msra.mxu0 %v931
    %946 = vmatpush.bf16.msra.mxu0 %v930
    %947 = vmatpush.bf16.msra.mxu0 %v929
    %948 = vmatmul.bf16.gmra.mxu0 %v938
    %v949 = vpop.f32.mrf.mxu0
    %v950 = vadd.f32 %v911, %v949
    %v951 = vpop.f32.mrf.mxu0
    %v952 = vadd.f32 %v911, %v951
    %953 = vdwg.mxu0
    %v954 = vmax.f32 %v950, 0.0
    %v955 = vmax.f32 %v952, 0.0
    %v956 = vld [vmem:[%s13] sm:$0xf]
    %v957 = vld [vmem:[%s13 + $0x4] sm:$0xf]
    %v958 = vld [vmem:[%s13 + $0x8] sm:$0xf]
    %v959 = vld [vmem:[%s13 + $0xc] sm:$0xf]
    %v960 = vld [vmem:[%s13 + $0x10] sm:$0xf]
    %v961 = vld [vmem:[%s13 + $0x14] sm:$0xf]
    %v962 = vld [vmem:[%s13 + $0x18] sm:$0xf]
    %v963 = vld [vmem:[%s13 + $0x1c] sm:$0xf]
    %v964 = vld [vmem:[%s13 + $0x20] sm:$0xf]
    %v965 = vld [vmem:[%s13 + $0x24] sm:$0xf]
    %v966 = vld [vmem:[%s13 + $0x28] sm:$0xf]
    %v967 = vld [vmem:[%s13 + $0x2c] sm:$0xf]
    %v968 = vld [vmem:[%s13 + $0x30] sm:$0xf]
    %v969 = vld [vmem:[%s13 + $0x34] sm:$0xf]
    %v970 = vld [vmem:[%s13 + $0x38] sm:$0xf]
    %v971 = vld [vmem:[%s13 + $0x3c] sm:$0xf]
    %v972 = vpack.c.bf16 %v955, %v954
    %v973 = vld [vmem:[#allocation8] sm:$0x1]
    %v975 = vperm.slane %v973, 0
    %v993 = vunpack.c.l.b16 %v956
    %v994 = vunpack.c.l.b16 %v957
    %v995 = vunpack.c.l.b16 %v958
    %v996 = vunpack.c.l.b16 %v959
    %v997 = vunpack.c.l.b16 %v960
    %v998 = vunpack.c.l.b16 %v961
    %v999 = vunpack.c.l.b16 %v962
    %v1000 = vunpack.c.l.b16 %v963
    %v1001 = vunpack.c.l.b16 %v964
    %v1002 = vunpack.c.l.b16 %v965
    %v1003 = vunpack.c.l.b16 %v966
    %v1004 = vunpack.c.l.b16 %v967
    %v1005 = vunpack.c.l.b16 %v968
    %v1006 = vunpack.c.l.b16 %v969
    %v1007 = vunpack.c.l.b16 %v970
    %v1008 = vunpack.c.l.b16 %v971
    %v1009 = vpack.c.b16 %v994, %v993
    %v1010 = vpack.c.b16 %v996, %v995
    %v1011 = vpack.c.b16 %v998, %v997
    %v1012 = vpack.c.b16 %v1000, %v999
    %v1013 = vpack.c.b16 %v1002, %v1001
    %v1014 = vpack.c.b16 %v1004, %v1003
    %v1015 = vpack.c.b16 %v1006, %v1005
    %v1016 = vpack.c.b16 %v1008, %v1007
    %1025 = vmatpush.bf16.msra.mxu0 %v1016
    %1026 = vmatpush.bf16.msra.mxu0 %v1015
    %1027 = vmatpush.bf16.msra.mxu0 %v1014
    %1028 = vmatpush.bf16.msra.mxu0 %v1013
    %1029 = vmatpush.bf16.msra.mxu0 %v1012
    %1030 = vmatpush.bf16.msra.mxu0 %v1011
    %1031 = vmatpush.bf16.msra.mxu0 %v1010
    %1032 = vmatpush.bf16.msra.mxu0 %v1009
    %1033 = vmatmul.bf16.gmra.mxu0 %v972
    %v1034 = vpop.f32.mrf.mxu0
    %v1035 = vadd.f32 %v975, %v1034
    %v1036 = vpop.f32.mrf.mxu0
    %v1037 = vadd.f32 %v975, %v1036
    %1038 = vdwg.mxu0
    %v1039 = vadd.f32 %v898, %v1035
    %v1040 = vadd.f32 %v899, %v1037
    %v1041 = vld [vmem:[%s15] sm:$0x1]
    %v1042 = vld [vmem:[#allocation9] sm:$0x1]
    %v1043 = vsel %vm210, %v1039, 0.0
    %1044 = vadd.xlane.f32.xlu0 %v1043
    %v1045 = vpop.xlane.xlu0 %1044
    %v1046 = vsel %vm210, %v1040, 0.0
    %1047 = vadd.xlane.f32.xlu0 %v1046
    %v1048 = vpop.xlane.xlu0 %1047
    %v1049 = vmul.f32 %v1045, %v851
    %v1050 = vmul.f32 %v1048, %v851
    %v1051 = vsub.f32 %v1039, %v1049
    %v1052 = vsub.f32 %v1040, %v1050
    %v1053 = vmul.f32 %v1051, %v1051
    %v1054 = vmul.f32 %v1052, %v1052
    %v1055 = vsel %vm210, %v1053, 0.0
    %1056 = vadd.xlane.f32.xlu0 %v1055
    %v1057 = vpop.xlane.xlu0 %1056
    %v1058 = vsel %vm210, %v1054, 0.0
    %1059 = vadd.xlane.f32.xlu0 %v1058
    %v1060 = vpop.xlane.xlu0 %1059
    %v1061 = vmul.f32 %v1057, %v851
    %v1062 = vmul.f32 %v1060, %v851
    %v1063 = vadd.f32 %v1061, 1e-05
    %v1064 = vadd.f32 %v1062, 1e-05
    %v1065 = vrsqrt.pop %v1063
    %v1066 = vmul.f32 %v1065, %v1063
    %v1067 = vmul.f32 %v1066, %v1065
    %v1068 = vmul.f32 0.5, %v1067
    %v1069 = vsub.f32 1.5, %v1068
    %v1070 = vmul.f32 %v1065, %v1069
    %vm1071 = vweird.f32 %v1063
    %vm1072 = vweird.f32 %v1065
    %vm1073 = vmor %vm1071, %vm1072
    %v1074 = vsel %vm1073, %v1065, %v1070
    %v1075 = vrsqrt.pop %v1064
    %v1076 = vmul.f32 %v1075, %v1064
    %v1077 = vmul.f32 %v1076, %v1075
    %v1078 = vmul.f32 0.5, %v1077
    %v1079 = vsub.f32 1.5, %v1078
    %v1080 = vmul.f32 %v1075, %v1079
    %vm1081 = vweird.f32 %v1064
    %vm1082 = vweird.f32 %v1075
    %vm1083 = vmor %vm1081, %vm1082
    %v1084 = vsel %vm1083, %v1075, %v1080
    %v1085 = vmul.f32 %v1051, %v1074
    %v1086 = vmul.f32 %v1052, %v1084
    %v1088 = vperm.slane %v1041, 0
    %v1090 = vmul.f32 %v1085, %v1088
    %v1091 = vmul.f32 %v1086, %v1088
    %v1093 = vperm.slane %v1042, 0
    %v1095 = vadd.f32 %v1090, %v1093
    %v1096 = vadd.f32 %v1091, %v1093
    %s1097 = scalar_lea.vmem %s3, 32
    %v1098 = vld [vmem:[%s1097] sm:$0xf]
    %v1099 = vld [vmem:[%s1097 + $0x4] sm:$0xf]
    %v1100 = vld [vmem:[%s1097 + $0x8] sm:$0xf]
    %v1101 = vld [vmem:[%s1097 + $0xc] sm:$0xf]
    %v1102 = vld [vmem:[%s1097 + $0x10] sm:$0xf]
    %v1103 = vld [vmem:[%s1097 + $0x14] sm:$0xf]
    %v1104 = vld [vmem:[%s1097 + $0x18] sm:$0xf]
    %v1105 = vld [vmem:[%s1097 + $0x1c] sm:$0xf]
    %v1106 = vpack.c.bf16 %v1095, %v1095
    %v1107 = vpack.c.bf16 %v1096, %v1096
    %s1108 = scalar_lea.vmem %s4, 1
    %v1109 = vld [vmem:[%s1108] sm:$0x1]
    %v1111 = vperm.slane %v1109, 0
    %v1115 = vunpack.c.l.b16 %v1106
    %v1116 = vunpack.c.l.b16 %v1107
    %v1117 = vrot.slane %v1115, 7
    %v1118 = vrot.slane %v1116, 6
    %vm1119 = vcmask 1041409
    %v1120 = vsel %vm1119, %v1118, %v1117
    %v1121 = vpack.c.b16 %v1120, %v1120
    %v1130 = vunpack.c.l.b16 %v1098
    %v1131 = vunpack.c.l.b16 %v1099
    %v1132 = vunpack.c.l.b16 %v1100
    %v1133 = vunpack.c.l.b16 %v1101
    %v1134 = vunpack.c.l.b16 %v1102
    %v1135 = vunpack.c.l.b16 %v1103
    %v1136 = vunpack.c.l.b16 %v1104
    %v1137 = vunpack.c.l.b16 %v1105
    %v1138 = vpack.c.b16 %v1131, %v1130
    %v1139 = vpack.c.b16 %v1133, %v1132
    %v1140 = vpack.c.b16 %v1135, %v1134
    %v1141 = vpack.c.b16 %v1137, %v1136
    %v1147 = vsel %vm210, %v1121, 0
    %1149 = vmatpush.bf16.msra.mxu0 0
    %1150 = vmatpush.bf16.msra.mxu0 0
    %1151 = vmatpush.bf16.msra.mxu0 0
    %1152 = vmatpush.bf16.msra.mxu0 0
    %1153 = vmatpush.bf16.msra.mxu0 %v1141
    %1154 = vmatpush.bf16.msra.mxu0 %v1140
    %1155 = vmatpush.bf16.msra.mxu0 %v1139
    %1156 = vmatpush.bf16.msra.mxu0 %v1138
    %1157 = vmatmul.bf16.gmra.mxu0 %v1147
    %v1158 = vpop.f32.mrf.mxu0
    %v1159 = vadd.f32 %v1111, %v1158
    %v1160 = vpop.f32.mrf.mxu0
    %1161 = vdwg.mxu0
    %s1162 = scalar_lea.vmem %s5, 32
    %v1163 = vld [vmem:[%s1162] sm:$0xf]
    %v1164 = vld [vmem:[%s1162 + $0x4] sm:$0xf]
    %v1165 = vld [vmem:[%s1162 + $0x8] sm:$0xf]
    %v1166 = vld [vmem:[%s1162 + $0xc] sm:$0xf]
    %v1167 = vld [vmem:[%s1162 + $0x10] sm:$0xf]
    %v1168 = vld [vmem:[%s1162 + $0x14] sm:$0xf]
    %v1169 = vld [vmem:[%s1162 + $0x18] sm:$0xf]
    %v1170 = vld [vmem:[%s1162 + $0x1c] sm:$0xf]
    %v1171 = vpack.c.bf16 %v1096, %v1095
    %s1172 = scalar_lea.vmem %s6, 1
    %v1173 = vld [vmem:[%s1172] sm:$0x1]
    %v1175 = vperm.slane %v1173, 0
    %v1185 = vunpack.c.l.b16 %v1163
    %v1186 = vunpack.c.l.b16 %v1164
    %v1187 = vunpack.c.l.b16 %v1165
    %v1188 = vunpack.c.l.b16 %v1166
    %v1189 = vunpack.c.l.b16 %v1167
    %v1190 = vunpack.c.l.b16 %v1168
    %v1191 = vunpack.c.l.b16 %v1169
    %v1192 = vunpack.c.l.b16 %v1170
    %v1193 = vpack.c.b16 %v1186, %v1185
    %v1194 = vpack.c.b16 %v1188, %v1187
    %v1195 = vpack.c.b16 %v1190, %v1189
    %v1196 = vpack.c.b16 %v1192, %v1191
    %v1202 = vsel %vm210, %v1171, 0
    %1204 = vmatpush.bf16.msra.mxu0 0
    %1205 = vmatpush.bf16.msra.mxu0 0
    %1206 = vmatpush.bf16.msra.mxu0 0
    %1207 = vmatpush.bf16.msra.mxu0 0
    %1208 = vmatpush.bf16.msra.mxu0 %v1196
    %1209 = vmatpush.bf16.msra.mxu0 %v1195
    %1210 = vmatpush.bf16.msra.mxu0 %v1194
    %1211 = vmatpush.bf16.msra.mxu0 %v1193
    %1212 = vmatmul.bf16.gmra.mxu0 %v1202
    %v1213 = vpop.f32.mrf.mxu0
    %v1214 = vadd.f32 %v1175, %v1213
    %v1215 = vpop.f32.mrf.mxu0
    %v1216 = vadd.f32 %v1175, %v1215
    %1217 = vdwg.mxu0
    %v1219 = vrot.slane %v1159, 1
    %v1221 = vpack.c.bf16 %v1159, %v1159
    %v1222 = vpack.c.bf16 %v1219, %v1219
    %v1223 = vpack.c.bf16 %v1214, %v1214
    %v1224 = vpack.c.bf16 %v1216, %v1216
    %v1226 = vsel %vm155, %v1221, 0
    %v1229 = vsel %vm155, %v1223, 0
    %1231 = vmatpush.bf16.xpose.msra.mxu0 0
    %1232 = vmatpush.bf16.xpose.msra.mxu0 0
    %1233 = vmatpush.bf16.xpose.msra.mxu0 0
    %1234 = vmatpush.bf16.xpose.msra.mxu0 0
    %1235 = vmatpush.bf16.xpose.msra.mxu0 0
    %1236 = vmatpush.bf16.xpose.msra.mxu0 0
    %1237 = vmatpush.bf16.xpose.msra.mxu0 0
    %1238 = vmatpush.bf16.xpose.msra.mxu0 %v1229
    %1239 = vmatmul.bf16.gmra.mxu0 %v1226
    %v1240 = vpop.f32.mrf.mxu0
    %v1241 = vadd.f32 0.0, %v1240
    %v1242 = vpop.f32.mrf.mxu0
    %1243 = vdwg.mxu0
    %v1245 = vsel %vm155, %v1222, 0
    %v1248 = vsel %vm155, %v1224, 0
    %1250 = vmatpush.bf16.xpose.msra.mxu0 0
    %1251 = vmatpush.bf16.xpose.msra.mxu0 0
    %1252 = vmatpush.bf16.xpose.msra.mxu0 0
    %1253 = vmatpush.bf16.xpose.msra.mxu0 0
    %1254 = vmatpush.bf16.xpose.msra.mxu0 0
    %1255 = vmatpush.bf16.xpose.msra.mxu0 0
    %1256 = vmatpush.bf16.xpose.msra.mxu0 0
    %1257 = vmatpush.bf16.xpose.msra.mxu0 %v1248
    %1258 = vmatmul.bf16.gmra.mxu0 %v1245
    %v1259 = vpop.f32.mrf.mxu0
    %v1260 = vadd.f32 0.0, %v1259
    %v1261 = vpop.f32.mrf.mxu0
    %1262 = vdwg.mxu0
    %v1263 = vmul.f32 %v1241, 0.25
    %v1264 = vmul.f32 %v1260, 0.25
    %vm1265 = vcmask 57344
    %v1266 = vsel %vm1265, %v1263, -inf
    %1267 = vmax.xlane.f32.xlu0 %v1266
    %v1268 = vpop.xlane.xlu0 %1267
    %v1269 = vsel %vm1265, %v1264, -inf
    %1270 = vmax.xlane.f32.xlu0 %v1269
    %v1271 = vpop.xlane.xlu0 %1270
    %v1272 = vsub.f32 %v1263, %v1268
    %v1273 = vsub.f32 %v1264, %v1271
    %v1274 = vmul.f32 %v1272, 1.442695
    %v1275 = vpow.pop %v1274
    %v1276 = vmul.f32 %v1273, 1.442695
    %v1277 = vpow.pop %v1276
    %v1278 = vsel %vm1265, %v1275, 0.0
    %1279 = vadd.xlane.f32.xlu0 %v1278
    %v1280 = vpop.xlane.xlu0 %1279
    %v1281 = vsel %vm1265, %v1277, 0.0
    %1282 = vadd.xlane.f32.xlu0 %v1281
    %v1283 = vpop.xlane.xlu0 %1282
    %v1284 = vrcp.pop %v1280
    %v1285 = vrcp.pop %v1283
    %v1286 = vmul.f32 %v1275, %v1284
    %v1287 = vmul.f32 %v1277, %v1285
    %v1288 = vpack.c.bf16 %v1286, %v1286
    %v1289 = vpack.c.bf16 %v1287, %v1287
    %v1291 = vunpack.c.l.b16 %v1223
    %v1292 = vpack.c.b16 %v1291, %v1291
    %1293 = vrot.lane.b32.xlu0 %v1292, 64
    %v1294 = vpop.permute.xlu0 %1293
    %v1296 = vsel %vm322, %v1288, 0
    %v1299 = vsel %vm355, %v1294, 0
    %1301 = vmatpush.bf16.msra.mxu0 0
    %1302 = vmatpush.bf16.msra.mxu0 0
    %1303 = vmatpush.bf16.msra.mxu0 0
    %1304 = vmatpush.bf16.msra.mxu0 0
    %1305 = vmatpush.bf16.msra.mxu0 0
    %1306 = vmatpush.bf16.msra.mxu0 0
    %1307 = vmatpush.bf16.msra.mxu0 0
    %1308 = vmatpush.bf16.msra.mxu0 %v1299
    %1309 = vmatmul.bf16.gmra.mxu0 %v1296
    %v1310 = vpop.f32.mrf.mxu0
    %v1311 = vadd.f32 0.0, %v1310
    %v1312 = vpop.f32.mrf.mxu0
    %1313 = vdwg.mxu0
    %v1315 = vunpack.c.l.b16 %v1224
    %v1316 = vpack.c.b16 %v1315, %v1315
    %1317 = vrot.lane.b32.xlu0 %v1316, 64
    %v1318 = vpop.permute.xlu0 %1317
    %v1320 = vsel %vm322, %v1289, 0
    %v1323 = vsel %vm355, %v1318, 0
    %1325 = vmatpush.bf16.msra.mxu0 0
    %1326 = vmatpush.bf16.msra.mxu0 0
    %1327 = vmatpush.bf16.msra.mxu0 0
    %1328 = vmatpush.bf16.msra.mxu0 0
    %1329 = vmatpush.bf16.msra.mxu0 0
    %1330 = vmatpush.bf16.msra.mxu0 0
    %1331 = vmatpush.bf16.msra.mxu0 0
    %1332 = vmatpush.bf16.msra.mxu0 %v1323
    %1333 = vmatmul.bf16.gmra.mxu0 %v1320
    %v1334 = vpop.f32.mrf.mxu0
    %v1335 = vadd.f32 0.0, %v1334
    %v1336 = vpop.f32.mrf.mxu0
    %1337 = vdwg.mxu0
    %v1340 = vrot.slane %v1335, 7
    %v1341 = vsel %vm1119, %v1340, %v1311
    %vm1343 = vcmask 123904
    %1344 = vst.msk [vmem:[#allocation2] sm:$0x3] %vm1343, %v1341
    %v1346 = vunpack.c.l.b16 %v1221
    %v1347 = vpack.c.b16 %v1346, %v1346
    %1348 = vrot.lane.b32.xlu0 %v1347, 112
    %v1349 = vpop.permute.xlu0 %1348
    %1350 = vrot.lane.b32.xlu0 %v1292, 112
    %v1351 = vpop.permute.xlu0 %1350
    %v1353 = vsel %vm155, %v1349, 0
    %v1356 = vsel %vm155, %v1351, 0
    %1358 = vmatpush.bf16.xpose.msra.mxu0 0
    %1359 = vmatpush.bf16.xpose.msra.mxu0 0
    %1360 = vmatpush.bf16.xpose.msra.mxu0 0
    %1361 = vmatpush.bf16.xpose.msra.mxu0 0
    %1362 = vmatpush.bf16.xpose.msra.mxu0 0
    %1363 = vmatpush.bf16.xpose.msra.mxu0 0
    %1364 = vmatpush.bf16.xpose.msra.mxu0 0
    %1365 = vmatpush.bf16.xpose.msra.mxu0 %v1356
    %1366 = vmatmul.bf16.gmra.mxu0 %v1353
    %v1367 = vpop.f32.mrf.mxu0
    %v1368 = vadd.f32 0.0, %v1367
    %v1369 = vpop.f32.mrf.mxu0
    %1370 = vdwg.mxu0
    %v1372 = vunpack.c.l.b16 %v1222
    %v1373 = vpack.c.b16 %v1372, %v1372
    %1374 = vrot.lane.b32.xlu0 %v1373, 112
    %v1375 = vpop.permute.xlu0 %1374
    %1376 = vrot.lane.b32.xlu0 %v1316, 112
    %v1377 = vpop.permute.xlu0 %1376
    %v1379 = vsel %vm155, %v1375, 0
    %v1382 = vsel %vm155, %v1377, 0
    %1384 = vmatpush.bf16.xpose.msra.mxu0 0
    %1385 = vmatpush.bf16.xpose.msra.mxu0 0
    %1386 = vmatpush.bf16.xpose.msra.mxu0 0
    %1387 = vmatpush.bf16.xpose.msra.mxu0 0
    %1388 = vmatpush.bf16.xpose.msra.mxu0 0
    %1389 = vmatpush.bf16.xpose.msra.mxu0 0
    %1390 = vmatpush.bf16.xpose.msra.mxu0 0
    %1391 = vmatpush.bf16.xpose.msra.mxu0 %v1382
    %1392 = vmatmul.bf16.gmra.mxu0 %v1379
    %v1393 = vpop.f32.mrf.mxu0
    %v1394 = vadd.f32 0.0, %v1393
    %v1395 = vpop.f32.mrf.mxu0
    %1396 = vdwg.mxu0
    %v1397 = vmul.f32 %v1368, 0.25
    %v1398 = vmul.f32 %v1394, 0.25
    %v1399 = vsel %vm1265, %v1397, -inf
    %1400 = vmax.xlane.f32.xlu0 %v1399
    %v1401 = vpop.xlane.xlu0 %1400
    %v1402 = vsel %vm1265, %v1398, -inf
    %1403 = vmax.xlane.f32.xlu0 %v1402
    %v1404 = vpop.xlane.xlu0 %1403
    %v1405 = vsub.f32 %v1397, %v1401
    %v1406 = vsub.f32 %v1398, %v1404
    %v1407 = vmul.f32 %v1405, 1.442695
    %v1408 = vpow.pop %v1407
    %v1409 = vmul.f32 %v1406, 1.442695
    %v1410 = vpow.pop %v1409
    %v1411 = vsel %vm1265, %v1408, 0.0
    %1412 = vadd.xlane.f32.xlu0 %v1411
    %v1413 = vpop.xlane.xlu0 %1412
    %v1414 = vsel %vm1265, %v1410, 0.0
    %1415 = vadd.xlane.f32.xlu0 %v1414
    %v1416 = vpop.xlane.xlu0 %1415
    %v1417 = vrcp.pop %v1413
    %v1418 = vrcp.pop %v1416
    %v1419 = vmul.f32 %v1408, %v1417
    %v1420 = vmul.f32 %v1410, %v1418
    %v1421 = vpack.c.bf16 %v1419, %v1419
    %v1422 = vpack.c.bf16 %v1420, %v1420
    %1423 = vrot.lane.b32.xlu0 %v1292, 48
    %v1424 = vpop.permute.xlu0 %1423
    %v1426 = vsel %vm322, %v1421, 0
    %v1429 = vsel %vm355, %v1424, 0
    %1431 = vmatpush.bf16.msra.mxu0 0
    %1432 = vmatpush.bf16.msra.mxu0 0
    %1433 = vmatpush.bf16.msra.mxu0 0
    %1434 = vmatpush.bf16.msra.mxu0 0
    %1435 = vmatpush.bf16.msra.mxu0 0
    %1436 = vmatpush.bf16.msra.mxu0 0
    %1437 = vmatpush.bf16.msra.mxu0 0
    %1438 = vmatpush.bf16.msra.mxu0 %v1429
    %1439 = vmatmul.bf16.gmra.mxu0 %v1426
    %v1440 = vpop.f32.mrf.mxu0
    %v1441 = vadd.f32 0.0, %v1440
    %v1442 = vpop.f32.mrf.mxu0
    %1443 = vdwg.mxu0
    %1444 = vrot.lane.b32.xlu0 %v1316, 48
    %v1445 = vpop.permute.xlu0 %1444
    %v1447 = vsel %vm322, %v1422, 0
    %v1450 = vsel %vm355, %v1445, 0
    %1452 = vmatpush.bf16.msra.mxu0 0
    %1453 = vmatpush.bf16.msra.mxu0 0
    %1454 = vmatpush.bf16.msra.mxu0 0
    %1455 = vmatpush.bf16.msra.mxu0 0
    %1456 = vmatpush.bf16.msra.mxu0 0
    %1457 = vmatpush.bf16.msra.mxu0 0
    %1458 = vmatpush.bf16.msra.mxu0 0
    %1459 = vmatpush.bf16.msra.mxu0 %v1450
    %1460 = vmatmul.bf16.gmra.mxu0 %v1447
    %v1461 = vpop.f32.mrf.mxu0
    %v1462 = vadd.f32 0.0, %v1461
    %v1463 = vpop.f32.mrf.mxu0
    %1464 = vdwg.mxu0
    %v1467 = vrot.slane %v1462, 7
    %v1468 = vsel %vm1119, %v1467, %v1441
    %1469 = vrot.lane.b32.xlu0 %v1468, 16
    %v1470 = vpop.permute.xlu0 %1469
    %vm1472 = vcmask 255104
    %1473 = vst.msk [vmem:[#allocation2] sm:$0x3] %vm1472, %v1470
    %1474 = vrot.lane.b32.xlu0 %v1347, 96
    %v1475 = vpop.permute.xlu0 %1474
    %1476 = vrot.lane.b32.xlu0 %v1292, 96
    %v1477 = vpop.permute.xlu0 %1476
    %v1479 = vsel %vm155, %v1475, 0
    %v1482 = vsel %vm155, %v1477, 0
    %1484 = vmatpush.bf16.xpose.msra.mxu0 0
    %1485 = vmatpush.bf16.xpose.msra.mxu0 0
    %1486 = vmatpush.bf16.xpose.msra.mxu0 0
    %1487 = vmatpush.bf16.xpose.msra.mxu0 0
    %1488 = vmatpush.bf16.xpose.msra.mxu0 0
    %1489 = vmatpush.bf16.xpose.msra.mxu0 0
    %1490 = vmatpush.bf16.xpose.msra.mxu0 0
    %1491 = vmatpush.bf16.xpose.msra.mxu0 %v1482
    %1492 = vmatmul.bf16.gmra.mxu0 %v1479
    %v1493 = vpop.f32.mrf.mxu0
    %v1494 = vadd.f32 0.0, %v1493
    %v1495 = vpop.f32.mrf.mxu0
    %1496 = vdwg.mxu0
    %1497 = vrot.lane.b32.xlu0 %v1373, 96
    %v1498 = vpop.permute.xlu0 %1497
    %1499 = vrot.lane.b32.xlu0 %v1316, 96
    %v1500 = vpop.permute.xlu0 %1499
    %v1502 = vsel %vm155, %v1498, 0
    %v1505 = vsel %vm155, %v1500, 0
    %1507 = vmatpush.bf16.xpose.msra.mxu0 0
    %1508 = vmatpush.bf16.xpose.msra.mxu0 0
    %1509 = vmatpush.bf16.xpose.msra.mxu0 0
    %1510 = vmatpush.bf16.xpose.msra.mxu0 0
    %1511 = vmatpush.bf16.xpose.msra.mxu0 0
    %1512 = vmatpush.bf16.xpose.msra.mxu0 0
    %1513 = vmatpush.bf16.xpose.msra.mxu0 0
    %1514 = vmatpush.bf16.xpose.msra.mxu0 %v1505
    %1515 = vmatmul.bf16.gmra.mxu0 %v1502
    %v1516 = vpop.f32.mrf.mxu0
    %v1517 = vadd.f32 0.0, %v1516
    %v1518 = vpop.f32.mrf.mxu0
    %1519 = vdwg.mxu0
    %v1520 = vmul.f32 %v1494, 0.25
    %v1521 = vmul.f32 %v1517, 0.25
    %v1522 = vsel %vm1265, %v1520, -inf
    %1523 = vmax.xlane.f32.xlu0 %v1522
    %v1524 = vpop.xlane.xlu0 %1523
    %v1525 = vsel %vm1265, %v1521, -inf
    %1526 = vmax.xlane.f32.xlu0 %v1525
    %v1527 = vpop.xlane.xlu0 %1526
    %v1528 = vsub.f32 %v1520, %v1524
    %v1529 = vsub.f32 %v1521, %v1527
    %v1530 = vmul.f32 %v1528, 1.442695
    %v1531 = vpow.pop %v1530
    %v1532 = vmul.f32 %v1529, 1.442695
    %v1533 = vpow.pop %v1532
    %v1534 = vsel %vm1265, %v1531, 0.0
    %1535 = vadd.xlane.f32.xlu0 %v1534
    %v1536 = vpop.xlane.xlu0 %1535
    %v1537 = vsel %vm1265, %v1533, 0.0
    %1538 = vadd.xlane.f32.xlu0 %v1537
    %v1539 = vpop.xlane.xlu0 %1538
    %v1540 = vrcp.pop %v1536
    %v1541 = vrcp.pop %v1539
    %v1542 = vmul.f32 %v1531, %v1540
    %v1543 = vmul.f32 %v1533, %v1541
    %v1544 = vpack.c.bf16 %v1542, %v1542
    %v1545 = vpack.c.bf16 %v1543, %v1543
    %1546 = vrot.lane.b32.xlu0 %v1292, 32
    %v1547 = vpop.permute.xlu0 %1546
    %v1549 = vsel %vm322, %v1544, 0
    %v1552 = vsel %vm355, %v1547, 0
    %1554 = vmatpush.bf16.msra.mxu0 0
    %1555 = vmatpush.bf16.msra.mxu0 0
    %1556 = vmatpush.bf16.msra.mxu0 0
    %1557 = vmatpush.bf16.msra.mxu0 0
    %1558 = vmatpush.bf16.msra.mxu0 0
    %1559 = vmatpush.bf16.msra.mxu0 0
    %1560 = vmatpush.bf16.msra.mxu0 0
    %1561 = vmatpush.bf16.msra.mxu0 %v1552
    %1562 = vmatmul.bf16.gmra.mxu0 %v1549
    %v1563 = vpop.f32.mrf.mxu0
    %v1564 = vadd.f32 0.0, %v1563
    %v1565 = vpop.f32.mrf.mxu0
    %1566 = vdwg.mxu0
    %1567 = vrot.lane.b32.xlu0 %v1316, 32
    %v1568 = vpop.permute.xlu0 %1567
    %v1570 = vsel %vm322, %v1545, 0
    %v1573 = vsel %vm355, %v1568, 0
    %1575 = vmatpush.bf16.msra.mxu0 0
    %1576 = vmatpush.bf16.msra.mxu0 0
    %1577 = vmatpush.bf16.msra.mxu0 0
    %1578 = vmatpush.bf16.msra.mxu0 0
    %1579 = vmatpush.bf16.msra.mxu0 0
    %1580 = vmatpush.bf16.msra.mxu0 0
    %1581 = vmatpush.bf16.msra.mxu0 0
    %1582 = vmatpush.bf16.msra.mxu0 %v1573
    %1583 = vmatmul.bf16.gmra.mxu0 %v1570
    %v1584 = vpop.f32.mrf.mxu0
    %v1585 = vadd.f32 0.0, %v1584
    %v1586 = vpop.f32.mrf.mxu0
    %1587 = vdwg.mxu0
    %v1590 = vrot.slane %v1585, 7
    %v1591 = vsel %vm1119, %v1590, %v1564
    %1592 = vrot.lane.b32.xlu0 %v1591, 32
    %v1593 = vpop.permute.xlu0 %1592
    %vm1595 = vcmask 386304
    %1596 = vst.msk [vmem:[#allocation2] sm:$0x3] %vm1595, %v1593
    %1597 = vrot.lane.b32.xlu0 %v1347, 80
    %v1598 = vpop.permute.xlu0 %1597
    %1599 = vrot.lane.b32.xlu0 %v1292, 80
    %v1600 = vpop.permute.xlu0 %1599
    %v1602 = vsel %vm155, %v1598, 0
    %v1605 = vsel %vm155, %v1600, 0
    %1607 = vmatpush.bf16.xpose.msra.mxu0 0
    %1608 = vmatpush.bf16.xpose.msra.mxu0 0
    %1609 = vmatpush.bf16.xpose.msra.mxu0 0
    %1610 = vmatpush.bf16.xpose.msra.mxu0 0
    %1611 = vmatpush.bf16.xpose.msra.mxu0 0
    %1612 = vmatpush.bf16.xpose.msra.mxu0 0
    %1613 = vmatpush.bf16.xpose.msra.mxu0 0
    %1614 = vmatpush.bf16.xpose.msra.mxu0 %v1605
    %1615 = vmatmul.bf16.gmra.mxu0 %v1602
    %v1616 = vpop.f32.mrf.mxu0
    %v1617 = vadd.f32 0.0, %v1616
    %v1618 = vpop.f32.mrf.mxu0
    %1619 = vdwg.mxu0
    %1620 = vrot.lane.b32.xlu0 %v1373, 80
    %v1621 = vpop.permute.xlu0 %1620
    %1622 = vrot.lane.b32.xlu0 %v1316, 80
    %v1623 = vpop.permute.xlu0 %1622
    %v1625 = vsel %vm155, %v1621, 0
    %v1628 = vsel %vm155, %v1623, 0
    %1630 = vmatpush.bf16.xpose.msra.mxu0 0
    %1631 = vmatpush.bf16.xpose.msra.mxu0 0
    %1632 = vmatpush.bf16.xpose.msra.mxu0 0
    %1633 = vmatpush.bf16.xpose.msra.mxu0 0
    %1634 = vmatpush.bf16.xpose.msra.mxu0 0
    %1635 = vmatpush.bf16.xpose.msra.mxu0 0
    %1636 = vmatpush.bf16.xpose.msra.mxu0 0
    %1637 = vmatpush.bf16.xpose.msra.mxu0 %v1628
    %1638 = vmatmul.bf16.gmra.mxu0 %v1625
    %v1639 = vpop.f32.mrf.mxu0
    %v1640 = vadd.f32 0.0, %v1639
    %v1641 = vpop.f32.mrf.mxu0
    %1642 = vdwg.mxu0
    %v1643 = vmul.f32 %v1617, 0.25
    %v1644 = vmul.f32 %v1640, 0.25
    %v1645 = vsel %vm1265, %v1643, -inf
    %1646 = vmax.xlane.f32.xlu0 %v1645
    %v1647 = vpop.xlane.xlu0 %1646
    %v1648 = vsel %vm1265, %v1644, -inf
    %1649 = vmax.xlane.f32.xlu0 %v1648
    %v1650 = vpop.xlane.xlu0 %1649
    %v1651 = vsub.f32 %v1643, %v1647
    %v1652 = vsub.f32 %v1644, %v1650
    %v1653 = vmul.f32 %v1651, 1.442695
    %v1654 = vpow.pop %v1653
    %v1655 = vmul.f32 %v1652, 1.442695
    %v1656 = vpow.pop %v1655
    %v1657 = vsel %vm1265, %v1654, 0.0
    %1658 = vadd.xlane.f32.xlu0 %v1657
    %v1659 = vpop.xlane.xlu0 %1658
    %v1660 = vsel %vm1265, %v1656, 0.0
    %1661 = vadd.xlane.f32.xlu0 %v1660
    %v1662 = vpop.xlane.xlu0 %1661
    %v1663 = vrcp.pop %v1659
    %v1664 = vrcp.pop %v1662
    %v1665 = vmul.f32 %v1654, %v1663
    %v1666 = vmul.f32 %v1656, %v1664
    %v1667 = vpack.c.bf16 %v1665, %v1665
    %v1668 = vpack.c.bf16 %v1666, %v1666
    %1669 = vrot.lane.b32.xlu0 %v1292, 16
    %v1670 = vpop.permute.xlu0 %1669
    %v1672 = vsel %vm322, %v1667, 0
    %v1675 = vsel %vm355, %v1670, 0
    %1677 = vmatpush.bf16.msra.mxu0 0
    %1678 = vmatpush.bf16.msra.mxu0 0
    %1679 = vmatpush.bf16.msra.mxu0 0
    %1680 = vmatpush.bf16.msra.mxu0 0
    %1681 = vmatpush.bf16.msra.mxu0 0
    %1682 = vmatpush.bf16.msra.mxu0 0
    %1683 = vmatpush.bf16.msra.mxu0 0
    %1684 = vmatpush.bf16.msra.mxu0 %v1675
    %1685 = vmatmul.bf16.gmra.mxu0 %v1672
    %v1686 = vpop.f32.mrf.mxu0
    %v1687 = vadd.f32 0.0, %v1686
    %v1688 = vpop.f32.mrf.mxu0
    %1689 = vdwg.mxu0
    %1690 = vrot.lane.b32.xlu0 %v1316, 16
    %v1691 = vpop.permute.xlu0 %1690
    %v1693 = vsel %vm322, %v1668, 0
    %v1696 = vsel %vm355, %v1691, 0
    %1698 = vmatpush.bf16.msra.mxu0 0
    %1699 = vmatpush.bf16.msra.mxu0 0
    %1700 = vmatpush.bf16.msra.mxu0 0
    %1701 = vmatpush.bf16.msra.mxu0 0
    %1702 = vmatpush.bf16.msra.mxu0 0
    %1703 = vmatpush.bf16.msra.mxu0 0
    %1704 = vmatpush.bf16.msra.mxu0 0
    %1705 = vmatpush.bf16.msra.mxu0 %v1696
    %1706 = vmatmul.bf16.gmra.mxu0 %v1693
    %v1707 = vpop.f32.mrf.mxu0
    %v1708 = vadd.f32 0.0, %v1707
    %v1709 = vpop.f32.mrf.mxu0
    %1710 = vdwg.mxu0
    %v1713 = vrot.slane %v1708, 7
    %v1714 = vsel %vm1119, %v1713, %v1687
    %1715 = vrot.lane.b32.xlu0 %v1714, 48
    %v1716 = vpop.permute.xlu0 %1715
    %vm1718 = vcmask 517504
    %1719 = vst.msk [vmem:[#allocation2] sm:$0x3] %vm1718, %v1716
    %v1720 = vld [vmem:[#allocation2] sm:$0x3]
    %s1721 = scalar_lea.vmem %s7, 32
    %v1722 = vld [vmem:[%s1721] sm:$0xf]
    %v1723 = vld [vmem:[%s1721 + $0x4] sm:$0xf]
    %v1724 = vld [vmem:[%s1721 + $0x8] sm:$0xf]
    %v1725 = vld [vmem:[%s1721 + $0xc] sm:$0xf]
    %v1726 = vld [vmem:[%s1721 + $0x10] sm:$0xf]
    %v1727 = vld [vmem:[%s1721 + $0x14] sm:$0xf]
    %v1728 = vld [vmem:[%s1721 + $0x18] sm:$0xf]
    %v1729 = vld [vmem:[%s1721 + $0x1c] sm:$0xf]
    %v1730 = vpack.c.bf16 %v1720, %v1720
    %s1731 = scalar_lea.vmem %s8, 1
    %v1732 = vld [vmem:[%s1731] sm:$0x1]
    %v1734 = vperm.slane %v1732, 0
    %v1744 = vunpack.c.l.b16 %v1722
    %v1745 = vunpack.c.l.b16 %v1723
    %v1746 = vunpack.c.l.b16 %v1724
    %v1747 = vunpack.c.l.b16 %v1725
    %v1748 = vunpack.c.l.b16 %v1726
    %v1749 = vunpack.c.l.b16 %v1727
    %v1750 = vunpack.c.l.b16 %v1728
    %v1751 = vunpack.c.l.b16 %v1729
    %v1752 = vpack.c.b16 %v1745, %v1744
    %v1753 = vpack.c.b16 %v1747, %v1746
    %v1754 = vpack.c.b16 %v1749, %v1748
    %v1755 = vpack.c.b16 %v1751, %v1750
    %v1761 = vsel %vm210, %v1730, 0
    %1763 = vmatpush.bf16.msra.mxu0 0
    %1764 = vmatpush.bf16.msra.mxu0 0
    %1765 = vmatpush.bf16.msra.mxu0 0
    %1766 = vmatpush.bf16.msra.mxu0 0
    %1767 = vmatpush.bf16.msra.mxu0 %v1755
    %1768 = vmatpush.bf16.msra.mxu0 %v1754
    %1769 = vmatpush.bf16.msra.mxu0 %v1753
    %1770 = vmatpush.bf16.msra.mxu0 %v1752
    %1771 = vmatmul.bf16.gmra.mxu0 %v1761
    %v1772 = vpop.f32.mrf.mxu0
    %v1773 = vadd.f32 %v1734, %v1772
    %v1774 = vpop.f32.mrf.mxu0
    %1775 = vdwg.mxu0
    %v1777 = vrot.slane %v1773, 1
    %v1778 = vrot.slane %v1773, 2
    %v1781 = vadd.f32 %v1095, %v1777
    %v1782 = vadd.f32 %v1096, %v1778
    %s1783 = scalar_lea.vmem %s9, 1
    %v1784 = vld [vmem:[%s1783] sm:$0x1]
    %s1785 = scalar_lea.vmem %s10, 1
    %v1786 = vld [vmem:[%s1785] sm:$0x1]
    %v1789 = vrot.slane %v1782, 7
    %vm1792 = vcmask 523271
    %v1793 = vsel %vm1792, %v1781, 0.0
    %1794 = vadd.xlane.f32.xlu0 %v1793
    %v1795 = vpop.xlane.xlu0 %1794
    %vm1796 = vcmask 516096
    %v1797 = vsel %vm1796, %v1789, 0.0
    %1798 = vadd.xlane.f32.xlu0 %v1797
    %v1799 = vpop.xlane.xlu0 %1798
    %v1800 = vmul.f32 %v1795, %v851
    %v1801 = vmul.f32 %v1799, %v851
    %v1804 = vrot.slane %v1801, 1
    %v1807 = vsub.f32 %v1781, %v1800
    %v1808 = vsub.f32 %v1782, %v1804
    %v1809 = vmul.f32 %v1807, %v1807
    %v1810 = vmul.f32 %v1808, %v1808
    %v1813 = vrot.slane %v1810, 7
    %v1816 = vsel %vm1792, %v1809, 0.0
    %1817 = vadd.xlane.f32.xlu0 %v1816
    %v1818 = vpop.xlane.xlu0 %1817
    %v1819 = vsel %vm1796, %v1813, 0.0
    %1820 = vadd.xlane.f32.xlu0 %v1819
    %v1821 = vpop.xlane.xlu0 %1820
    %v1822 = vmul.f32 %v1818, %v851
    %v1823 = vmul.f32 %v1821, %v851
    %v1824 = vadd.f32 %v1822, 1e-05
    %v1825 = vadd.f32 %v1823, 1e-05
    %v1826 = vrsqrt.pop %v1824
    %v1827 = vmul.f32 %v1826, %v1824
    %v1828 = vmul.f32 %v1827, %v1826
    %v1829 = vmul.f32 0.5, %v1828
    %v1830 = vsub.f32 1.5, %v1829
    %v1831 = vmul.f32 %v1826, %v1830
    %vm1832 = vweird.f32 %v1824
    %vm1833 = vweird.f32 %v1826
    %vm1834 = vmor %vm1832, %vm1833
    %v1835 = vsel %vm1834, %v1826, %v1831
    %v1836 = vrsqrt.pop %v1825
    %v1837 = vmul.f32 %v1836, %v1825
    %v1838 = vmul.f32 %v1837, %v1836
    %v1839 = vmul.f32 0.5, %v1838
    %v1840 = vsub.f32 1.5, %v1839
    %v1841 = vmul.f32 %v1836, %v1840
    %vm1842 = vweird.f32 %v1825
    %vm1843 = vweird.f32 %v1836
    %vm1844 = vmor %vm1842, %vm1843
    %v1845 = vsel %vm1844, %v1836, %v1841
    %v1848 = vrot.slane %v1845, 1
    %v1851 = vmul.f32 %v1807, %v1835
    %v1852 = vmul.f32 %v1808, %v1848
    %v1854 = vperm.slane %v1784, 0
    %v1856 = vmul.f32 %v1851, %v1854
    %v1857 = vmul.f32 %v1852, %v1854
    %v1859 = vperm.slane %v1786, 0
    %v1861 = vadd.f32 %v1856, %v1859
    %v1862 = vadd.f32 %v1857, %v1859
    %s1863 = scalar_lea.vmem [#allocation3], 32
    %v1864 = vld [vmem:[%s1863] sm:$0xf]
    %v1865 = vld [vmem:[%s1863 + $0x4] sm:$0xf]
    %v1866 = vld [vmem:[%s1863 + $0x8] sm:$0xf]
    %v1867 = vld [vmem:[%s1863 + $0xc] sm:$0xf]
    %v1868 = vld [vmem:[%s1863 + $0x10] sm:$0xf]
    %v1869 = vld [vmem:[%s1863 + $0x14] sm:$0xf]
    %v1870 = vld [vmem:[%s1863 + $0x18] sm:$0xf]
    %v1871 = vld [vmem:[%s1863 + $0x1c] sm:$0xf]
    %v1872 = vpack.c.bf16 %v1861, %v1861
    %v1873 = vpack.c.bf16 %v1862, %v1862
    %s1874 = scalar_lea.vmem [#allocation6], 1
    %v1875 = vld [vmem:[%s1874] sm:$0x1]
    %v1877 = vperm.slane %v1875, 0
    %v1881 = vunpack.c.l.b16 %v1872
    %v1882 = vunpack.c.l.b16 %v1873
    %v1883 = vrot.slane %v1881, 7
    %v1884 = vrot.slane %v1882, 6
    %v1885 = vsel %vm1119, %v1884, %v1883
    %v1886 = vpack.c.b16 %v1885, %v1885
    %v1895 = vunpack.c.l.b16 %v1864
    %v1896 = vunpack.c.l.b16 %v1865
    %v1897 = vunpack.c.l.b16 %v1866
    %v1898 = vunpack.c.l.b16 %v1867
    %v1899 = vunpack.c.l.b16 %v1868
    %v1900 = vunpack.c.l.b16 %v1869
    %v1901 = vunpack.c.l.b16 %v1870
    %v1902 = vunpack.c.l.b16 %v1871
    %v1903 = vpack.c.b16 %v1896, %v1895
    %v1904 = vpack.c.b16 %v1898, %v1897
    %v1905 = vpack.c.b16 %v1900, %v1899
    %v1906 = vpack.c.b16 %v1902, %v1901
    %v1912 = vsel %vm210, %v1886, 0
    %1914 = vmatpush.bf16.msra.mxu0 0
    %1915 = vmatpush.bf16.msra.mxu0 0
    %1916 = vmatpush.bf16.msra.mxu0 0
    %1917 = vmatpush.bf16.msra.mxu0 0
    %1918 = vmatpush.bf16.msra.mxu0 %v1906
    %1919 = vmatpush.bf16.msra.mxu0 %v1905
    %1920 = vmatpush.bf16.msra.mxu0 %v1904
    %1921 = vmatpush.bf16.msra.mxu0 %v1903
    %1922 = vmatmul.bf16.gmra.mxu0 %v1912
    %v1923 = vpop.f32.mrf.mxu0
    %v1924 = vadd.f32 %v1877, %v1923
    %v1925 = vpop.f32.mrf.mxu0
    %1926 = vdwg.mxu0
    %v1927 = vmax.f32 %v1924, 0.0
    %s1928 = scalar_lea.vmem %s13, 64
    %v1929 = vld [vmem:[%s1928] sm:$0xf]
    %v1930 = vld [vmem:[%s1928 + $0x4] sm:$0xf]
    %v1931 = vld [vmem:[%s1928 + $0x8] sm:$0xf]
    %v1932 = vld [vmem:[%s1928 + $0xc] sm:$0xf]
    %v1933 = vld [vmem:[%s1928 + $0x10] sm:$0xf]
    %v1934 = vld [vmem:[%s1928 + $0x14] sm:$0xf]
    %v1935 = vld [vmem:[%s1928 + $0x18] sm:$0xf]
    %v1936 = vld [vmem:[%s1928 + $0x1c] sm:$0xf]
    %v1937 = vld [vmem:[%s1928 + $0x20] sm:$0xf]
    %v1938 = vld [vmem:[%s1928 + $0x24] sm:$0xf]
    %v1939 = vld [vmem:[%s1928 + $0x28] sm:$0xf]
    %v1940 = vld [vmem:[%s1928 + $0x2c] sm:$0xf]
    %v1941 = vld [vmem:[%s1928 + $0x30] sm:$0xf]
    %v1942 = vld [vmem:[%s1928 + $0x34] sm:$0xf]
    %v1943 = vld [vmem:[%s1928 + $0x38] sm:$0xf]
    %v1944 = vld [vmem:[%s1928 + $0x3c] sm:$0xf]
    %v1945 = vpack.c.bf16 %v1927, %v1927
    %s1946 = scalar_lea.vmem [#allocation8], 1
    %v1947 = vld [vmem:[%s1946] sm:$0x1]
    %v1949 = vperm.slane %v1947, 0
    %v1967 = vunpack.c.l.b16 %v1929
    %v1968 = vunpack.c.l.b16 %v1930
    %v1969 = vunpack.c.l.b16 %v1931
    %v1970 = vunpack.c.l.b16 %v1932
    %v1971 = vunpack.c.l.b16 %v1933
    %v1972 = vunpack.c.l.b16 %v1934
    %v1973 = vunpack.c.l.b16 %v1935
    %v1974 = vunpack.c.l.b16 %v1936
    %v1975 = vunpack.c.l.b16 %v1937
    %v1976 = vunpack.c.l.b16 %v1938
    %v1977 = vunpack.c.l.b16 %v1939
    %v1978 = vunpack.c.l.b16 %v1940
    %v1979 = vunpack.c.l.b16 %v1941
    %v1980 = vunpack.c.l.b16 %v1942
    %v1981 = vunpack.c.l.b16 %v1943
    %v1982 = vunpack.c.l.b16 %v1944
    %v1983 = vpack.c.b16 %v1968, %v1967
    %v1984 = vpack.c.b16 %v1970, %v1969
    %v1985 = vpack.c.b16 %v1972, %v1971
    %v1986 = vpack.c.b16 %v1974, %v1973
    %v1987 = vpack.c.b16 %v1976, %v1975
    %v1988 = vpack.c.b16 %v1978, %v1977
    %v1989 = vpack.c.b16 %v1980, %v1979
    %v1990 = vpack.c.b16 %v1982, %v1981
    %1999 = vmatpush.bf16.msra.mxu0 %v1990
    %2000 = vmatpush.bf16.msra.mxu0 %v1989
    %2001 = vmatpush.bf16.msra.mxu0 %v1988
    %2002 = vmatpush.bf16.msra.mxu0 %v1987
    %2003 = vmatpush.bf16.msra.mxu0 %v1986
    %2004 = vmatpush.bf16.msra.mxu0 %v1985
    %2005 = vmatpush.bf16.msra.mxu0 %v1984
    %2006 = vmatpush.bf16.msra.mxu0 %v1983
    %2007 = vmatmul.bf16.gmra.mxu0 %v1945
    %v2008 = vpop.f32.mrf.mxu0
    %v2009 = vadd.f32 %v1949, %v2008
    %v2010 = vpop.f32.mrf.mxu0
    %2011 = vdwg.mxu0
    %v2013 = vrot.slane %v2009, 1
    %v2014 = vrot.slane %v2009, 2
    %v2017 = vadd.f32 %v1861, %v2013
    %v2018 = vadd.f32 %v1862, %v2014
    %s2019 = scalar_lea.vmem %s15, 1
    %v2020 = vld [vmem:[%s2019] sm:$0x1]
    %s2021 = scalar_lea.vmem [#allocation9], 1
    %v2022 = vld [vmem:[%s2021] sm:$0x1]
    %v2025 = vrot.slane %v2018, 7
    %v2028 = vsel %vm1792, %v2017, 0.0
    %2029 = vadd.xlane.f32.xlu0 %v2028
    %v2030 = vpop.xlane.xlu0 %2029
    %v2031 = vsel %vm1796, %v2025, 0.0
    %2032 = vadd.xlane.f32.xlu0 %v2031
    %v2033 = vpop.xlane.xlu0 %2032
    %v2034 = vmul.f32 %v2030, %v851
    %v2035 = vmul.f32 %v2033, %v851
    %v2038 = vrot.slane %v2035, 1
    %v2041 = vsub.f32 %v2017, %v2034
    %v2042 = vsub.f32 %v2018, %v2038
    %v2043 = vmul.f32 %v2041, %v2041
    %v2044 = vmul.f32 %v2042, %v2042
    %v2047 = vrot.slane %v2044, 7
    %v2050 = vsel %vm1792, %v2043, 0.0
    %2051 = vadd.xlane.f32.xlu0 %v2050
    %v2052 = vpop.xlane.xlu0 %2051
    %v2053 = vsel %vm1796, %v2047, 0.0
    %2054 = vadd.xlane.f32.xlu0 %v2053
    %v2055 = vpop.xlane.xlu0 %2054
    %v2056 = vmul.f32 %v2052, %v851
    %v2057 = vmul.f32 %v2055, %v851
    %v2058 = vadd.f32 %v2056, 1e-05
    %v2059 = vadd.f32 %v2057, 1e-05
    %v2060 = vrsqrt.pop %v2058
    %v2061 = vmul.f32 %v2060, %v2058
    %v2062 = vmul.f32 %v2061, %v2060
    %v2063 = vmul.f32 0.5, %v2062
    %v2064 = vsub.f32 1.5, %v2063
    %v2065 = vmul.f32 %v2060, %v2064
    %vm2066 = vweird.f32 %v2058
    %vm2067 = vweird.f32 %v2060
    %vm2068 = vmor %vm2066, %vm2067
    %v2069 = vsel %vm2068, %v2060, %v2065
    %v2070 = vrsqrt.pop %v2059
    %v2071 = vmul.f32 %v2070, %v2059
    %v2072 = vmul.f32 %v2071, %v2070
    %v2073 = vmul.f32 0.5, %v2072
    %v2074 = vsub.f32 1.5, %v2073
    %v2075 = vmul.f32 %v2070, %v2074
    %vm2076 = vweird.f32 %v2059
    %vm2077 = vweird.f32 %v2070
    %vm2078 = vmor %vm2076, %vm2077
    %v2079 = vsel %vm2078, %v2070, %v2075
    %v2082 = vrot.slane %v2079, 1
    %v2085 = vmul.f32 %v2041, %v2069
    %v2086 = vmul.f32 %v2042, %v2082
    %v2088 = vperm.slane %v2020, 0
    %v2090 = vmul.f32 %v2085, %v2088
    %v2091 = vmul.f32 %v2086, %v2088
    %v2093 = vperm.slane %v2022, 0
    %v2095 = vadd.f32 %v2090, %v2093
    %v2096 = vadd.f32 %v2091, %v2093
    %v2097 = vld [vmem:[%s17] sm:$0xf]
    %v2098 = vld [vmem:[%s17 + $0x4] sm:$0xf]
    %v2099 = vld [vmem:[%s17 + $0x8] sm:$0xf]
    %v2100 = vld [vmem:[%s17 + $0xc] sm:$0xf]
    %v2101 = vld [vmem:[%s17 + $0x10] sm:$0xf]
    %v2102 = vld [vmem:[%s17 + $0x14] sm:$0xf]
    %v2103 = vld [vmem:[%s17 + $0x18] sm:$0xf]
    %v2104 = vld [vmem:[%s17 + $0x1c] sm:$0xf]
    %v2105 = vpack.c.bf16 %v2095, %v2095
    %v2106 = vpack.c.bf16 %v2096, %v2096
    %v2107 = vld [vmem:[#allocation11] sm:$0x1]
    %v2109 = vperm.slane %v2107, 0
    %v2113 = vunpack.c.l.b16 %v2105
    %v2114 = vunpack.c.l.b16 %v2106
    %v2115 = vrot.slane %v2113, 7
    %v2116 = vrot.slane %v2114, 6
    %v2117 = vsel %vm1119, %v2116, %v2115
    %v2118 = vpack.c.b16 %v2117, %v2117
    %v2127 = vunpack.c.l.b16 %v2097
    %v2128 = vunpack.c.l.b16 %v2098
    %v2129 = vunpack.c.l.b16 %v2099
    %v2130 = vunpack.c.l.b16 %v2100
    %v2131 = vunpack.c.l.b16 %v2101
    %v2132 = vunpack.c.l.b16 %v2102
    %v2133 = vunpack.c.l.b16 %v2103
    %v2134 = vunpack.c.l.b16 %v2104
    %v2135 = vpack.c.b16 %v2128, %v2127
    %v2136 = vpack.c.b16 %v2130, %v2129
    %v2137 = vpack.c.b16 %v2132, %v2131
    %v2138 = vpack.c.b16 %v2134, %v2133
    %v2144 = vsel %vm210, %v2118, 0
    %2146 = vmatpush.bf16.msra.mxu0 0
    %2147 = vmatpush.bf16.msra.mxu0 0
    %2148 = vmatpush.bf16.msra.mxu0 0
    %2149 = vmatpush.bf16.msra.mxu0 0
    %2150 = vmatpush.bf16.msra.mxu0 %v2138
    %2151 = vmatpush.bf16.msra.mxu0 %v2137
    %2152 = vmatpush.bf16.msra.mxu0 %v2136
    %2153 = vmatpush.bf16.msra.mxu0 %v2135
    %2154 = vmatmul.bf16.gmra.mxu0 %v2144
    %v2155 = vpop.f32.mrf.mxu0
    %v2156 = vadd.f32 %v2109, %v2155
    %v2157 = vpop.f32.mrf.mxu0
    %2158 = vdwg.mxu0
    %vm2159 = vcmask 25600
    %2160 = vst.msk [vmem:[#allocation12] sm:$0x3] %vm2159, %v2156
    // Predicated region
    $region98: #{transformer_ts_forward.1} parent=1 // pred_check
      _
    $region99: #{transformer_ts_forward.1} parent=1 // pred_check_branch
      %2162 = sbr.rel (0) target = $region101
    $region100: #{transformer_ts_forward.1} parent=1 // pred_region
      %2164 = vsyncadd [#allocation5], 0
      %s2166 = sshll.u32 [#allocation12], 4
      %s2167 = int_to_ptr.vmem [resolvable:$true] %s2166
      %s2168 = sshll.u32 %s19, 4
      %s2169 = int_to_ptr.hbm [resolvable:$true] %s2168
      %2171 = dma.vmem_to_hbm [thread:$0]  %s2167, 32, %s2169, [#allocation5]
    $region101: #{transformer_ts_forward.1} parent=1 // pred_fallthru
      _
    // Predicated region
    $region102: #{transformer_ts_forward.1} parent=1 // pred_check
      _
    $region103: #{transformer_ts_forward.1} parent=1 // pred_check_branch
      %2173 = sbr.rel (0) target = $region105
    $region104: #{transformer_ts_forward.1} parent=1 // pred_region
      %2175 = dma.done [#allocation5], 32
    $region105: #{transformer_ts_forward.1} parent=1 // pred_fallthru
      _
    %2176 = vsyncpa [#allocation4], 1
    %2177 = vsyncpa [#allocation7], 1
    %2178 = vsyncpa [#allocation10], 1
    %2179 = vsyncpa [#allocation5], 1

</llo_original>
